<compile_context>
chip_gen: v7x
topology: tpu7x:2x2x1
jax: 0.10.0
libtpu: 0.0.40
codegen_flags: <defaults>
</compile_context>

<pallas_src>
import functools

import jax
import jax.numpy as jnp
import numpy as np
from jax.experimental import pallas as pl
from jax.experimental.pallas import tpu as pltpu


def _round_up(v, m):
    return (v + m - 1) // m * m


def _discriminator_kernel(x_ref, wih_ref, whh_ref, bi_ref, bh_ref,
                          wfc_ref, bfc_ref, out_ref,
                          gi_ref, hist_ref, hcarry_ref,
                          *, chunk_len, btile, n_layers, unroll):
    """One (batch-tile, time-chunk) grid step of the stacked GRU + FC + sigmoid.

    x_ref     : (Tc*Bt, Hp)      time-major chunk of the (padded) input
    wih_ref   : (L, Hp, 3*Hp)    input->gates weights (gate blocks 128-aligned)
    whh_ref   : (L, Hp, 3*Hp)    hidden->gates weights
    bi_ref    : (L, 1, 3*Hp)     b_ih with b_hh's r/z parts folded in
    bh_ref    : (L, 1, 3*Hp)     only the n-gate part of b_hh (r/z parts zero)
    wfc_ref   : (1, Hp), bfc_ref: (1, 1)
    out_ref   : (Tc*Bt, 1)
    gi_ref    : VMEM (Tc*Bt, 3*Hp)  hoisted input projection of the current layer
    hist_ref  : VMEM (Tc*Bt, Hp)    current layer's hidden history over the chunk
    hcarry_ref: VMEM (L, Bt, Hp)    per-layer hidden state carried across chunks
    """
    Hp = x_ref.shape[-1]
    c = pl.program_id(1)          # time-chunk index (sequential / "arbitrary" axis)

    @pl.when(c == 0)
    def _init():
        hcarry_ref[...] = jnp.zeros_like(hcarry_ref)

    layer_in = x_ref[...]                                      # (Tc*Bt, Hp)
    for l in range(n_layers):
        # ---- Phase A: hoisted input->gate projection for ALL timesteps of the chunk.
        gi_ref[...] = (
            jnp.dot(layer_in, wih_ref[l], preferred_element_type=jnp.float32)
            + bi_ref[l])

        # ---- Phase B: sequential recurrence; only the h-side matmul is serialized.
        whh_l = whh_ref[l]                                     # (Hp, 3Hp)
        bh_l = jnp.broadcast_to(bh_ref[l], (btile, 3 * Hp))    # hoisted broadcast

        def step(t, h_prev, whh_l=whh_l, bh_l=bh_l):
            row = pl.multiple_of(t * btile, btile)
            gi = gi_ref[pl.ds(row, btile), :]
            gh = jnp.dot(h_prev, whh_l, preferred_element_type=jnp.float32) + bh_l
            # PyTorch gate order (r, z, n); gate blocks are 128-lane aligned.
            r = jax.nn.sigmoid(gi[:, 0:Hp] + gh[:, 0:Hp])
            z = jax.nn.sigmoid(gi[:, Hp:2 * Hp] + gh[:, Hp:2 * Hp])
            n = jnp.tanh(gi[:, 2 * Hp:] + r * gh[:, 2 * Hp:])
            h_new = (1.0 - z) * n + z * h_prev
            hist_ref[pl.ds(row, btile), :] = h_new
            return h_new

        h_last = jax.lax.fori_loop(0, chunk_len, step, hcarry_ref[l],
                                   unroll=unroll)
        hcarry_ref[l] = h_last
        layer_in = hist_ref[...]                               # next layer's input

    # ---- FC head + sigmoid: VPU multiply + lane (XLU) reduction, no N=1 MXU matmul.
    logits = (jnp.sum(layer_in * wfc_ref[...], axis=-1, keepdims=True)
              + bfc_ref[...])
    out_ref[...] = jax.nn.sigmoid(logits)


def _pad_gate_w(w_t, H, Hp):
    """(H, 3H) input-major weights -> (Hp, 3*Hp) with each gate block 128-aligned."""
    blocks = []
    for g in range(3):
        blk = w_t[:, g * H:(g + 1) * H]                        # (H, H)
        blocks.append(jnp.pad(blk, ((0, Hp - H), (0, Hp - H))))
    return jnp.concatenate(blocks, axis=1)                     # (Hp, 3Hp)


def _pad_gate_b(b, H, Hp):
    """(3H,) -> (1, 3*Hp) with each gate block 128-aligned."""
    blocks = [jnp.pad(b[g * H:(g + 1) * H], (0, Hp - H)) for g in range(3)]
    return jnp.concatenate(blocks)[None, :]


@jax.jit
def discriminator_forward(x, params):
    """x: (B, S, H) float32 -> (B, S, 1) float32 (matches PyTorch Discriminator)."""
    w_ih, w_hh, b_ih, b_hh, w_fc, b_fc = params
    B, S, H = x.shape
    L = w_ih.shape[0]

    Hp = _round_up(H, 128)                     # 128-lane aligned gate width
    B8 = _round_up(B, 8)                       # f32 sublane multiple
    Btile = min(B8, 64)                        # rows per in-kernel recurrence tile
    Bp = _round_up(B8, Btile)
    nb = Bp // Btile                           # batch-tile ("parallel") grid axis

    Tc = min(64, _round_up(S, 4))              # timesteps per pipelined chunk
    Sp = _round_up(S, Tc)
    nchunks = Sp // Tc                         # time-chunk ("arbitrary") grid axis
    unroll = Tc if Tc <= 16 else 4             # full unroll for short chunks

    # ---- repack parameters: transpose to input-major, pad gate blocks, fold biases.
    wih_p, whh_p, bi_p, bh_p = [], [], [], []
    for l in range(L):
        wih_p.append(_pad_gate_w(w_ih[l].T, H, Hp))
        whh_p.append(_pad_gate_w(w_hh[l].T, H, Hp))
        bi, bh = b_ih[l], b_hh[l]
        # fold b_hh's r/z parts into the input-side bias; keep b_hh_n on the h side
        bi_fold = jnp.concatenate([bi[:2 * H] + bh[:2 * H], bi[2 * H:]])
        bh_fold = jnp.concatenate([jnp.zeros((2 * H,), jnp.float32), bh[2 * H:]])
        bi_p.append(_pad_gate_b(bi_fold, H, Hp))
        bh_p.append(_pad_gate_b(bh_fold, H, Hp))
    wih_p = jnp.stack(wih_p)                                   # (L, Hp, 3Hp)
    whh_p = jnp.stack(whh_p)                                   # (L, Hp, 3Hp)
    bi_p = jnp.stack(bi_p)                                     # (L, 1, 3Hp)
    bh_p = jnp.stack(bh_p)                                     # (L, 1, 3Hp)
    wfc_p = jnp.pad(w_fc, ((0, 0), (0, Hp - H)))               # (1, Hp)
    bfc_p = b_fc[None, :]                                      # (1, 1)

    # ---- x: time-major, padded, regrouped per batch tile: (nb, Sp*Btile, Hp).
    x_tm = jnp.transpose(x, (1, 0, 2))                         # (S, B, H)
    x_p = jnp.pad(x_tm, ((0, Sp - S), (0, Bp - B), (0, Hp - H)))
    x_p = (x_p.reshape(Sp, nb, Btile, Hp)
               .transpose(1, 0, 2, 3)
               .reshape(nb, Sp * Btile, Hp))

    kernel = functools.partial(_discriminator_kernel, chunk_len=Tc, btile=Btile,
                               n_layers=L, unroll=unroll)

    grid_spec = pltpu.PrefetchScalarGridSpec(
        num_scalar_prefetch=0,
        grid=(nb, nchunks),
        in_specs=[
            pl.BlockSpec((None, Tc * Btile, Hp), lambda b, c: (b, c, 0)),   # x chunk
            pl.BlockSpec((L, Hp, 3 * Hp), lambda b, c: (0, 0, 0)),
            pl.BlockSpec((L, Hp, 3 * Hp), lambda b, c: (0, 0, 0)),
            pl.BlockSpec((L, 1, 3 * Hp), lambda b, c: (0, 0, 0)),
            pl.BlockSpec((L, 1, 3 * Hp), lambda b, c: (0, 0, 0)),
            pl.BlockSpec((1, Hp), lambda b, c: (0, 0)),
            pl.BlockSpec((1, 1), lambda b, c: (0, 0)),
        ],
        out_specs=pl.BlockSpec((None, Tc * Btile, 1), lambda b, c: (b, c, 0)),
        scratch_shapes=[
            pltpu.VMEM((Tc * Btile, 3 * Hp), jnp.float32),     # hoisted gi per layer
            pltpu.VMEM((Tc * Btile, Hp), jnp.float32),         # chunk hidden history
            pltpu.VMEM((L, Btile, Hp), jnp.float32),           # h carry across chunks
        ],
    )

    # ---- explicit VMEM budget derived from the actual (chunk-sized) buffers.
    f32b = 4
    rows = Tc * Btile
    buf_bytes = (
        2 * rows * Hp * f32b                 # x chunk (double-buffered)
        + 2 * rows * 1 * f32b                # out chunk (double-buffered)
        + 2 * 2 * L * Hp * 3 * Hp * f32b     # wih + whh
        + 2 * 2 * L * 3 * Hp * f32b          # biases
        + 2 * (Hp + 1) * f32b                # fc
        + rows * 3 * Hp * f32b               # gi scratch
        + rows * Hp * f32b                   # hist scratch
        + L * Btile * Hp * f32b)             # h carry
    vmem_limit = int(min(max(2 * buf_bytes, 32 << 20), 100 << 20))

    out_flat = pl.pallas_call(
        kernel,
        out_shape=jax.ShapeDtypeStruct((nb, Sp * Btile, 1), jnp.float32),
        grid_spec=grid_spec,
        compiler_params=pltpu.CompilerParams(
            dimension_semantics=("parallel", "arbitrary"),
            vmem_limit_bytes=vmem_limit),
    )(x_p, wih_p, whh_p, bi_p, bh_p, wfc_p, bfc_p)

    # ---- unpack: (nb, Sp*Btile, 1) -> (S, B) -> (B, S, 1)
    out_sm = (out_flat.reshape(nb, Sp, Btile)
                      .transpose(1, 0, 2)
                      .reshape(Sp, Bp))[:S, :B]
    return jnp.transpose(out_sm)[:, :, None]


def init_params(key, hidden_dim, n_layers):
    """PyTorch-convention GRU + Linear parameters, U(-1/sqrt(H), 1/sqrt(H))."""
    H, L = hidden_dim, n_layers
    bound = 1.0 / np.sqrt(H)
    ks = jax.random.split(key, 6)
    w_ih = jax.random.uniform(ks[0], (L, 3 * H, H), jnp.float32, -bound, bound)
    w_hh = jax.random.uniform(ks[1], (L, 3 * H, H), jnp.float32, -bound, bound)
    b_ih = jax.random.uniform(ks[2], (L, 3 * H), jnp.float32, -bound, bound)
    b_hh = jax.random.uniform(ks[3], (L, 3 * H), jnp.float32, -bound, bound)
    w_fc = jax.random.uniform(ks[4], (1, H), jnp.float32, -bound, bound)
    b_fc = jax.random.uniform(ks[5], (1,), jnp.float32, -bound, bound)
    return w_ih, w_hh, b_ih, b_hh, w_fc, b_fc


def reference_forward(x, params):
    """Pure-JAX reference of the same GRU + Linear + sigmoid (validation)."""
    w_ih, w_hh, b_ih, b_hh, w_fc, b_fc = params
    B, S, H = x.shape
    L = w_ih.shape[0]
    h = [jnp.zeros((B, H), jnp.float32) for _ in range(L)]
    outs = []
    for t in range(S):
        inp = x[:, t, :]
        for l in range(L):
            gi = inp @ w_ih[l].T + b_ih[l]
            gh = h[l] @ w_hh[l].T + b_hh[l]
            r = jax.nn.sigmoid(gi[:, :H] + gh[:, :H])
            z = jax.nn.sigmoid(gi[:, H:2 * H] + gh[:, H:2 * H])
            n = jnp.tanh(gi[:, 2 * H:] + r * gh[:, 2 * H:])
            h[l] = (1.0 - z) * n + z * h[l]
            inp = h[l]
        outs.append(jax.nn.sigmoid(inp @ w_fc.T + b_fc))
    return jnp.stack(outs, axis=1)                             # (B, S, 1)


if __name__ == "__main__":
    B, S, H, L = 2, 8, 32, 2   # batch, seq, hidden_dim, n_layers

    key = jax.random.PRNGKey(0)
    k_x, k_p = jax.random.split(key)
    x = jax.random.normal(k_x, (B, S, H), dtype=jnp.float32)
    params = init_params(k_p, H, L)

    out = jax.block_until_ready(discriminator_forward(x, params))

    ref = reference_forward(x, params)
    assert out.shape == (B, S, 1)
    np.testing.assert_allclose(np.asarray(out), np.asarray(ref), atol=1e-4, rtol=1e-4)

    print("KERNEL_OK")
</pallas_src>

<mosaic_0001>
module attributes {stable_mosaic.version = 11 : i64} {
  func.func @_discriminator_kernel(%arg0: i32, %arg1: i32, %arg2: memref<1x64x128xf32, #tpu.memory_space<vmem>>, %arg3: memref<2x128x384xf32, #tpu.memory_space<vmem>>, %arg4: memref<2x128x384xf32, #tpu.memory_space<vmem>>, %arg5: memref<2x1x384xf32, #tpu.memory_space<vmem>>, %arg6: memref<2x1x384xf32, #tpu.memory_space<vmem>>, %arg7: memref<1x128xf32, #tpu.memory_space<vmem>>, %arg8: memref<1x1xf32, #tpu.memory_space<vmem>>, %arg9: memref<1x64x1xf32, #tpu.memory_space<vmem>>, %arg10: memref<64x384xf32, #tpu.memory_space<vmem>>, %arg11: memref<64x128xf32, #tpu.memory_space<vmem>>, %arg12: memref<2x8x128xf32, #tpu.memory_space<vmem>>) attributes {dimension_semantics = [#tpu.dimension_semantics<parallel>, #tpu.dimension_semantics<arbitrary>], iteration_bounds = array<i64: 1, 1>, scalar_prefetch = 0 : i64, scratch_operands = 3 : i64, tpu.core_type = #tpu.core_type<tc>, window_params = [{transform_indices = @transform_0, window_bounds = array<i64: 1, 64, 128>}, {pipeline_mode = #tpu.pipeline_mode<synchronous>, transform_indices = @transform_1, window_bounds = array<i64: 2, 128, 384>}, {pipeline_mode = #tpu.pipeline_mode<synchronous>, transform_indices = @transform_2, window_bounds = array<i64: 2, 128, 384>}, {pipeline_mode = #tpu.pipeline_mode<synchronous>, transform_indices = @transform_3, window_bounds = array<i64: 2, 1, 384>}, {pipeline_mode = #tpu.pipeline_mode<synchronous>, transform_indices = @transform_4, window_bounds = array<i64: 2, 1, 384>}, {pipeline_mode = #tpu.pipeline_mode<synchronous>, transform_indices = @transform_5, window_bounds = array<i64: 1, 128>}, {pipeline_mode = #tpu.pipeline_mode<synchronous>, transform_indices = @transform_6, window_bounds = array<i64: 1, 1>}, {transform_indices = @transform_7, window_bounds = array<i64: 1, 64, 1>}]} {
    %c0_i32 = arith.constant 0 : i32
    %0 = arith.cmpi eq, %arg1, %c0_i32 : i32
    %1 = arith.extui %0 : i1 to i32
    %c0_i32_0 = arith.constant 0 : i32
    %2 = arith.cmpi ne, %1, %c0_i32_0 : i32
    scf.if %2 {
      %cst_178 = arith.constant 0.000000e+00 : f32
      %605 = vector.broadcast %cst_178 : f32 to vector<2x8x128xf32>
      %c0_179 = arith.constant 0 : index
      %c0_180 = arith.constant 0 : index
      %c0_181 = arith.constant 0 : index
      %606 = vector.load %arg12[%c0_179, %c0_180, %c0_181] : memref<2x8x128xf32, #tpu.memory_space<vmem>>, vector<2x8x128xf32>
      tpu.vector_store %arg12[%c0_179, %c0_180, %c0_181], %605 {strides = array<i32>} : memref<2x8x128xf32, #tpu.memory_space<vmem>>, vector<2x8x128xf32>,
    } else {
    }
    %c0 = arith.constant 0 : index
    %c0_1 = arith.constant 0 : index
    %c0_2 = arith.constant 0 : index
    %3 = vector.load %arg2[%c0, %c0_1, %c0_2] : memref<1x64x128xf32, #tpu.memory_space<vmem>>, vector<1x64x128xf32>
    %4 = vector.shape_cast %3 : vector<1x64x128xf32> to vector<64x128xf32>
    %c0_3 = arith.constant 0 : index
    %c0_4 = arith.constant 0 : index
    %c0_5 = arith.constant 0 : index
    %5 = vector.load %arg3[%c0_3, %c0_4, %c0_5] : memref<2x128x384xf32, #tpu.memory_space<vmem>>, vector<1x128x384xf32>
    %6 = vector.shape_cast %5 : vector<1x128x384xf32> to vector<128x384xf32>
    %cst = arith.constant dense<0.000000e+00> : vector<64x384xf32>
    %7 = tpu.matmul %4, %6, %cst {dimension_numbers = #tpu.dot_dimension_numbers<[1], [0], [0], [1], [0, 0, 1, 1], [], []>} : vector<64x128xf32>, vector<128x384xf32>, vector<64x384xf32> -> vector<64x384xf32>
    %c0_6 = arith.constant 0 : index
    %c0_7 = arith.constant 0 : index
    %c0_8 = arith.constant 0 : index
    %8 = vector.load %arg5[%c0_6, %c0_7, %c0_8] : memref<2x1x384xf32, #tpu.memory_space<vmem>>, vector<1x1x384xf32>
    %9 = vector.shape_cast %8 : vector<1x1x384xf32> to vector<1x384xf32>
    %10 = vector.broadcast %9 : vector<1x384xf32> to vector<64x384xf32>
    %11 = arith.addf %7, %10 : vector<64x384xf32>
    %c0_9 = arith.constant 0 : index
    %c0_10 = arith.constant 0 : index
    %12 = vector.load %arg10[%c0_9, %c0_10] : memref<64x384xf32, #tpu.memory_space<vmem>>, vector<64x384xf32>
    tpu.vector_store %arg10[%c0_9, %c0_10], %11 {strides = array<i32>} : memref<64x384xf32, #tpu.memory_space<vmem>>, vector<64x384xf32>,
    %c0_11 = arith.constant 0 : index
    %c0_12 = arith.constant 0 : index
    %c0_13 = arith.constant 0 : index
    %13 = vector.load %arg4[%c0_11, %c0_12, %c0_13] : memref<2x128x384xf32, #tpu.memory_space<vmem>>, vector<1x128x384xf32>
    %14 = vector.shape_cast %13 : vector<1x128x384xf32> to vector<128x384xf32>
    %c0_14 = arith.constant 0 : index
    %c0_15 = arith.constant 0 : index
    %c0_16 = arith.constant 0 : index
    %15 = vector.load %arg6[%c0_14, %c0_15, %c0_16] : memref<2x1x384xf32, #tpu.memory_space<vmem>>, vector<1x1x384xf32>
    %16 = vector.shape_cast %15 : vector<1x1x384xf32> to vector<1x384xf32>
    %17 = vector.shape_cast %16 : vector<1x384xf32> to vector<1x384xf32>
    %18 = vector.broadcast %17 : vector<1x384xf32> to vector<8x384xf32>
    %c0_17 = arith.constant 0 : index
    %c0_18 = arith.constant 0 : index
    %c0_19 = arith.constant 0 : index
    %19 = vector.load %arg12[%c0_17, %c0_18, %c0_19] : memref<2x8x128xf32, #tpu.memory_space<vmem>>, vector<1x8x128xf32>
    %20 = vector.shape_cast %19 : vector<1x8x128xf32> to vector<8x128xf32>
    %c0_i32_20 = arith.constant 0 : i32
    %c8_i32 = arith.constant 8 : i32
    %21 = arith.muli %c0_i32_20, %c8_i32 : i32
    %22 = tpu.assume_multiple %21, 8 : i32
    %23 = arith.index_cast %22 : i32 to index
    %c0_21 = arith.constant 0 : index
    %24 = vector.load %arg10[%23, %c0_21] : memref<64x384xf32, #tpu.memory_space<vmem>>, vector<8x384xf32>
    %cst_22 = arith.constant dense<0.000000e+00> : vector<8x384xf32>
    %25 = tpu.matmul %20, %14, %cst_22 {dimension_numbers = #tpu.dot_dimension_numbers<[1], [0], [0], [1], [0, 0, 1, 1], [], []>} : vector<8x128xf32>, vector<128x384xf32>, vector<8x384xf32> -> vector<8x384xf32>
    %26 = arith.addf %25, %18 : vector<8x384xf32>
    %27 = vector.extract_strided_slice %24 {offsets = [0, 0], sizes = [8, 128], strides = [1, 1]} : vector<8x384xf32> to vector<8x128xf32>
    %28 = vector.extract_strided_slice %26 {offsets = [0, 0], sizes = [8, 128], strides = [1, 1]} : vector<8x384xf32> to vector<8x128xf32>
    %29 = arith.addf %27, %28 : vector<8x128xf32>
    %30 = arith.negf %29 : vector<8x128xf32>
    %31 = math.exp %30 : vector<8x128xf32>
    %cst_23 = arith.constant 1.000000e+00 : f32
    %32 = vector.broadcast %cst_23 : f32 to vector<8x128xf32>
    %33 = arith.addf %32, %31 : vector<8x128xf32>
    %34 = arith.divf %32, %33 : vector<8x128xf32>
    %35 = vector.extract_strided_slice %24 {offsets = [0, 128], sizes = [8, 128], strides = [1, 1]} : vector<8x384xf32> to vector<8x128xf32>
    %36 = vector.extract_strided_slice %26 {offsets = [0, 128], sizes = [8, 128], strides = [1, 1]} : vector<8x384xf32> to vector<8x128xf32>
    %37 = arith.addf %35, %36 : vector<8x128xf32>
    %38 = arith.negf %37 : vector<8x128xf32>
    %39 = math.exp %38 : vector<8x128xf32>
    %cst_24 = arith.constant 1.000000e+00 : f32
    %40 = vector.broadcast %cst_24 : f32 to vector<8x128xf32>
    %41 = arith.addf %40, %39 : vector<8x128xf32>
    %42 = arith.divf %40, %41 : vector<8x128xf32>
    %43 = vector.extract_strided_slice %24 {offsets = [0, 256], sizes = [8, 128], strides = [1, 1]} : vector<8x384xf32> to vector<8x128xf32>
    %44 = vector.extract_strided_slice %26 {offsets = [0, 256], sizes = [8, 128], strides = [1, 1]} : vector<8x384xf32> to vector<8x128xf32>
    %45 = arith.mulf %34, %44 : vector<8x128xf32>
    %46 = arith.addf %43, %45 : vector<8x128xf32>
    %47 = math.tanh %46 : vector<8x128xf32>
    %cst_25 = arith.constant 1.000000e+00 : f32
    %48 = vector.broadcast %cst_25 : f32 to vector<8x128xf32>
    %49 = arith.subf %48, %42 : vector<8x128xf32>
    %50 = arith.mulf %49, %47 : vector<8x128xf32>
    %51 = arith.mulf %42, %20 : vector<8x128xf32>
    %52 = arith.addf %50, %51 : vector<8x128xf32>
    %53 = arith.index_cast %22 : i32 to index
    %c0_26 = arith.constant 0 : index
    %54 = vector.load %arg11[%53, %c0_26] : memref<64x128xf32, #tpu.memory_space<vmem>>, vector<8x128xf32>
    tpu.vector_store %arg11[%53, %c0_26], %52 {strides = array<i32>} : memref<64x128xf32, #tpu.memory_space<vmem>>, vector<8x128xf32>,
    %c1_i32 = arith.constant 1 : i32
    %c8_i32_27 = arith.constant 8 : i32
    %55 = arith.muli %c1_i32, %c8_i32_27 : i32
    %56 = tpu.assume_multiple %55, 8 : i32
    %57 = arith.index_cast %56 : i32 to index
    %c0_28 = arith.constant 0 : index
    %58 = vector.load %arg10[%57, %c0_28] : memref<64x384xf32, #tpu.memory_space<vmem>>, vector<8x384xf32>
    %cst_29 = arith.constant dense<0.000000e+00> : vector<8x384xf32>
    %59 = tpu.matmul %52, %14, %cst_29 {dimension_numbers = #tpu.dot_dimension_numbers<[1], [0], [0], [1], [0, 0, 1, 1], [], []>} : vector<8x128xf32>, vector<128x384xf32>, vector<8x384xf32> -> vector<8x384xf32>
    %60 = arith.addf %59, %18 : vector<8x384xf32>
    %61 = vector.extract_strided_slice %58 {offsets = [0, 0], sizes = [8, 128], strides = [1, 1]} : vector<8x384xf32> to vector<8x128xf32>
    %62 = vector.extract_strided_slice %60 {offsets = [0, 0], sizes = [8, 128], strides = [1, 1]} : vector<8x384xf32> to vector<8x128xf32>
    %63 = arith.addf %61, %62 : vector<8x128xf32>
    %64 = arith.negf %63 : vector<8x128xf32>
    %65 = math.exp %64 : vector<8x128xf32>
    %cst_30 = arith.constant 1.000000e+00 : f32
    %66 = vector.broadcast %cst_30 : f32 to vector<8x128xf32>
    %67 = arith.addf %66, %65 : vector<8x128xf32>
    %68 = arith.divf %66, %67 : vector<8x128xf32>
    %69 = vector.extract_strided_slice %58 {offsets = [0, 128], sizes = [8, 128], strides = [1, 1]} : vector<8x384xf32> to vector<8x128xf32>
    %70 = vector.extract_strided_slice %60 {offsets = [0, 128], sizes = [8, 128], strides = [1, 1]} : vector<8x384xf32> to vector<8x128xf32>
    %71 = arith.addf %69, %70 : vector<8x128xf32>
    %72 = arith.negf %71 : vector<8x128xf32>
    %73 = math.exp %72 : vector<8x128xf32>
    %cst_31 = arith.constant 1.000000e+00 : f32
    %74 = vector.broadcast %cst_31 : f32 to vector<8x128xf32>
    %75 = arith.addf %74, %73 : vector<8x128xf32>
    %76 = arith.divf %74, %75 : vector<8x128xf32>
    %77 = vector.extract_strided_slice %58 {offsets = [0, 256], sizes = [8, 128], strides = [1, 1]} : vector<8x384xf32> to vector<8x128xf32>
    %78 = vector.extract_strided_slice %60 {offsets = [0, 256], sizes = [8, 128], strides = [1, 1]} : vector<8x384xf32> to vector<8x128xf32>
    %79 = arith.mulf %68, %78 : vector<8x128xf32>
    %80 = arith.addf %77, %79 : vector<8x128xf32>
    %81 = math.tanh %80 : vector<8x128xf32>
    %cst_32 = arith.constant 1.000000e+00 : f32
    %82 = vector.broadcast %cst_32 : f32 to vector<8x128xf32>
    %83 = arith.subf %82, %76 : vector<8x128xf32>
    %84 = arith.mulf %83, %81 : vector<8x128xf32>
    %85 = arith.mulf %76, %52 : vector<8x128xf32>
    %86 = arith.addf %84, %85 : vector<8x128xf32>
    %87 = arith.index_cast %56 : i32 to index
    %c0_33 = arith.constant 0 : index
    %88 = vector.load %arg11[%87, %c0_33] : memref<64x128xf32, #tpu.memory_space<vmem>>, vector<8x128xf32>
    tpu.vector_store %arg11[%87, %c0_33], %86 {strides = array<i32>} : memref<64x128xf32, #tpu.memory_space<vmem>>, vector<8x128xf32>,
    %c2_i32 = arith.constant 2 : i32
    %c8_i32_34 = arith.constant 8 : i32
    %89 = arith.muli %c2_i32, %c8_i32_34 : i32
    %90 = tpu.assume_multiple %89, 8 : i32
    %91 = arith.index_cast %90 : i32 to index
    %c0_35 = arith.constant 0 : index
    %92 = vector.load %arg10[%91, %c0_35] : memref<64x384xf32, #tpu.memory_space<vmem>>, vector<8x384xf32>
    %cst_36 = arith.constant dense<0.000000e+00> : vector<8x384xf32>
    %93 = tpu.matmul %86, %14, %cst_36 {dimension_numbers = #tpu.dot_dimension_numbers<[1], [0], [0], [1], [0, 0, 1, 1], [], []>} : vector<8x128xf32>, vector<128x384xf32>, vector<8x384xf32> -> vector<8x384xf32>
    %94 = arith.addf %93, %18 : vector<8x384xf32>
    %95 = vector.extract_strided_slice %92 {offsets = [0, 0], sizes = [8, 128], strides = [1, 1]} : vector<8x384xf32> to vector<8x128xf32>
    %96 = vector.extract_strided_slice %94 {offsets = [0, 0], sizes = [8, 128], strides = [1, 1]} : vector<8x384xf32> to vector<8x128xf32>
    %97 = arith.addf %95, %96 : vector<8x128xf32>
    %98 = arith.negf %97 : vector<8x128xf32>
    %99 = math.exp %98 : vector<8x128xf32>
    %cst_37 = arith.constant 1.000000e+00 : f32
    %100 = vector.broadcast %cst_37 : f32 to vector<8x128xf32>
    %101 = arith.addf %100, %99 : vector<8x128xf32>
    %102 = arith.divf %100, %101 : vector<8x128xf32>
    %103 = vector.extract_strided_slice %92 {offsets = [0, 128], sizes = [8, 128], strides = [1, 1]} : vector<8x384xf32> to vector<8x128xf32>
    %104 = vector.extract_strided_slice %94 {offsets = [0, 128], sizes = [8, 128], strides = [1, 1]} : vector<8x384xf32> to vector<8x128xf32>
    %105 = arith.addf %103, %104 : vector<8x128xf32>
    %106 = arith.negf %105 : vector<8x128xf32>
    %107 = math.exp %106 : vector<8x128xf32>
    %cst_38 = arith.constant 1.000000e+00 : f32
    %108 = vector.broadcast %cst_38 : f32 to vector<8x128xf32>
    %109 = arith.addf %108, %107 : vector<8x128xf32>
    %110 = arith.divf %108, %109 : vector<8x128xf32>
    %111 = vector.extract_strided_slice %92 {offsets = [0, 256], sizes = [8, 128], strides = [1, 1]} : vector<8x384xf32> to vector<8x128xf32>
    %112 = vector.extract_strided_slice %94 {offsets = [0, 256], sizes = [8, 128], strides = [1, 1]} : vector<8x384xf32> to vector<8x128xf32>
    %113 = arith.mulf %102, %112 : vector<8x128xf32>
    %114 = arith.addf %111, %113 : vector<8x128xf32>
    %115 = math.tanh %114 : vector<8x128xf32>
    %cst_39 = arith.constant 1.000000e+00 : f32
    %116 = vector.broadcast %cst_39 : f32 to vector<8x128xf32>
    %117 = arith.subf %116, %110 : vector<8x128xf32>
    %118 = arith.mulf %117, %115 : vector<8x128xf32>
    %119 = arith.mulf %110, %86 : vector<8x128xf32>
    %120 = arith.addf %118, %119 : vector<8x128xf32>
    %121 = arith.index_cast %90 : i32 to index
    %c0_40 = arith.constant 0 : index
    %122 = vector.load %arg11[%121, %c0_40] : memref<64x128xf32, #tpu.memory_space<vmem>>, vector<8x128xf32>
    tpu.vector_store %arg11[%121, %c0_40], %120 {strides = array<i32>} : memref<64x128xf32, #tpu.memory_space<vmem>>, vector<8x128xf32>,
    %c3_i32 = arith.constant 3 : i32
    %c8_i32_41 = arith.constant 8 : i32
    %123 = arith.muli %c3_i32, %c8_i32_41 : i32
    %124 = tpu.assume_multiple %123, 8 : i32
    %125 = arith.index_cast %124 : i32 to index
    %c0_42 = arith.constant 0 : index
    %126 = vector.load %arg10[%125, %c0_42] : memref<64x384xf32, #tpu.memory_space<vmem>>, vector<8x384xf32>
    %cst_43 = arith.constant dense<0.000000e+00> : vector<8x384xf32>
    %127 = tpu.matmul %120, %14, %cst_43 {dimension_numbers = #tpu.dot_dimension_numbers<[1], [0], [0], [1], [0, 0, 1, 1], [], []>} : vector<8x128xf32>, vector<128x384xf32>, vector<8x384xf32> -> vector<8x384xf32>
    %128 = arith.addf %127, %18 : vector<8x384xf32>
    %129 = vector.extract_strided_slice %126 {offsets = [0, 0], sizes = [8, 128], strides = [1, 1]} : vector<8x384xf32> to vector<8x128xf32>
    %130 = vector.extract_strided_slice %128 {offsets = [0, 0], sizes = [8, 128], strides = [1, 1]} : vector<8x384xf32> to vector<8x128xf32>
    %131 = arith.addf %129, %130 : vector<8x128xf32>
    %132 = arith.negf %131 : vector<8x128xf32>
    %133 = math.exp %132 : vector<8x128xf32>
    %cst_44 = arith.constant 1.000000e+00 : f32
    %134 = vector.broadcast %cst_44 : f32 to vector<8x128xf32>
    %135 = arith.addf %134, %133 : vector<8x128xf32>
    %136 = arith.divf %134, %135 : vector<8x128xf32>
    %137 = vector.extract_strided_slice %126 {offsets = [0, 128], sizes = [8, 128], strides = [1, 1]} : vector<8x384xf32> to vector<8x128xf32>
    %138 = vector.extract_strided_slice %128 {offsets = [0, 128], sizes = [8, 128], strides = [1, 1]} : vector<8x384xf32> to vector<8x128xf32>
    %139 = arith.addf %137, %138 : vector<8x128xf32>
    %140 = arith.negf %139 : vector<8x128xf32>
    %141 = math.exp %140 : vector<8x128xf32>
    %cst_45 = arith.constant 1.000000e+00 : f32
    %142 = vector.broadcast %cst_45 : f32 to vector<8x128xf32>
    %143 = arith.addf %142, %141 : vector<8x128xf32>
    %144 = arith.divf %142, %143 : vector<8x128xf32>
    %145 = vector.extract_strided_slice %126 {offsets = [0, 256], sizes = [8, 128], strides = [1, 1]} : vector<8x384xf32> to vector<8x128xf32>
    %146 = vector.extract_strided_slice %128 {offsets = [0, 256], sizes = [8, 128], strides = [1, 1]} : vector<8x384xf32> to vector<8x128xf32>
    %147 = arith.mulf %136, %146 : vector<8x128xf32>
    %148 = arith.addf %145, %147 : vector<8x128xf32>
    %149 = math.tanh %148 : vector<8x128xf32>
    %cst_46 = arith.constant 1.000000e+00 : f32
    %150 = vector.broadcast %cst_46 : f32 to vector<8x128xf32>
    %151 = arith.subf %150, %144 : vector<8x128xf32>
    %152 = arith.mulf %151, %149 : vector<8x128xf32>
    %153 = arith.mulf %144, %120 : vector<8x128xf32>
    %154 = arith.addf %152, %153 : vector<8x128xf32>
    %155 = arith.index_cast %124 : i32 to index
    %c0_47 = arith.constant 0 : index
    %156 = vector.load %arg11[%155, %c0_47] : memref<64x128xf32, #tpu.memory_space<vmem>>, vector<8x128xf32>
    tpu.vector_store %arg11[%155, %c0_47], %154 {strides = array<i32>} : memref<64x128xf32, #tpu.memory_space<vmem>>, vector<8x128xf32>,
    %c4_i32 = arith.constant 4 : i32
    %c8_i32_48 = arith.constant 8 : i32
    %157 = arith.muli %c4_i32, %c8_i32_48 : i32
    %158 = tpu.assume_multiple %157, 8 : i32
    %159 = arith.index_cast %158 : i32 to index
    %c0_49 = arith.constant 0 : index
    %160 = vector.load %arg10[%159, %c0_49] : memref<64x384xf32, #tpu.memory_space<vmem>>, vector<8x384xf32>
    %cst_50 = arith.constant dense<0.000000e+00> : vector<8x384xf32>
    %161 = tpu.matmul %154, %14, %cst_50 {dimension_numbers = #tpu.dot_dimension_numbers<[1], [0], [0], [1], [0, 0, 1, 1], [], []>} : vector<8x128xf32>, vector<128x384xf32>, vector<8x384xf32> -> vector<8x384xf32>
    %162 = arith.addf %161, %18 : vector<8x384xf32>
    %163 = vector.extract_strided_slice %160 {offsets = [0, 0], sizes = [8, 128], strides = [1, 1]} : vector<8x384xf32> to vector<8x128xf32>
    %164 = vector.extract_strided_slice %162 {offsets = [0, 0], sizes = [8, 128], strides = [1, 1]} : vector<8x384xf32> to vector<8x128xf32>
    %165 = arith.addf %163, %164 : vector<8x128xf32>
    %166 = arith.negf %165 : vector<8x128xf32>
    %167 = math.exp %166 : vector<8x128xf32>
    %cst_51 = arith.constant 1.000000e+00 : f32
    %168 = vector.broadcast %cst_51 : f32 to vector<8x128xf32>
    %169 = arith.addf %168, %167 : vector<8x128xf32>
    %170 = arith.divf %168, %169 : vector<8x128xf32>
    %171 = vector.extract_strided_slice %160 {offsets = [0, 128], sizes = [8, 128], strides = [1, 1]} : vector<8x384xf32> to vector<8x128xf32>
    %172 = vector.extract_strided_slice %162 {offsets = [0, 128], sizes = [8, 128], strides = [1, 1]} : vector<8x384xf32> to vector<8x128xf32>
    %173 = arith.addf %171, %172 : vector<8x128xf32>
    %174 = arith.negf %173 : vector<8x128xf32>
    %175 = math.exp %174 : vector<8x128xf32>
    %cst_52 = arith.constant 1.000000e+00 : f32
    %176 = vector.broadcast %cst_52 : f32 to vector<8x128xf32>
    %177 = arith.addf %176, %175 : vector<8x128xf32>
    %178 = arith.divf %176, %177 : vector<8x128xf32>
    %179 = vector.extract_strided_slice %160 {offsets = [0, 256], sizes = [8, 128], strides = [1, 1]} : vector<8x384xf32> to vector<8x128xf32>
    %180 = vector.extract_strided_slice %162 {offsets = [0, 256], sizes = [8, 128], strides = [1, 1]} : vector<8x384xf32> to vector<8x128xf32>
    %181 = arith.mulf %170, %180 : vector<8x128xf32>
    %182 = arith.addf %179, %181 : vector<8x128xf32>
    %183 = math.tanh %182 : vector<8x128xf32>
    %cst_53 = arith.constant 1.000000e+00 : f32
    %184 = vector.broadcast %cst_53 : f32 to vector<8x128xf32>
    %185 = arith.subf %184, %178 : vector<8x128xf32>
    %186 = arith.mulf %185, %183 : vector<8x128xf32>
    %187 = arith.mulf %178, %154 : vector<8x128xf32>
    %188 = arith.addf %186, %187 : vector<8x128xf32>
    %189 = arith.index_cast %158 : i32 to index
    %c0_54 = arith.constant 0 : index
    %190 = vector.load %arg11[%189, %c0_54] : memref<64x128xf32, #tpu.memory_space<vmem>>, vector<8x128xf32>
    tpu.vector_store %arg11[%189, %c0_54], %188 {strides = array<i32>} : memref<64x128xf32, #tpu.memory_space<vmem>>, vector<8x128xf32>,
    %c5_i32 = arith.constant 5 : i32
    %c8_i32_55 = arith.constant 8 : i32
    %191 = arith.muli %c5_i32, %c8_i32_55 : i32
    %192 = tpu.assume_multiple %191, 8 : i32
    %193 = arith.index_cast %192 : i32 to index
    %c0_56 = arith.constant 0 : index
    %194 = vector.load %arg10[%193, %c0_56] : memref<64x384xf32, #tpu.memory_space<vmem>>, vector<8x384xf32>
    %cst_57 = arith.constant dense<0.000000e+00> : vector<8x384xf32>
    %195 = tpu.matmul %188, %14, %cst_57 {dimension_numbers = #tpu.dot_dimension_numbers<[1], [0], [0], [1], [0, 0, 1, 1], [], []>} : vector<8x128xf32>, vector<128x384xf32>, vector<8x384xf32> -> vector<8x384xf32>
    %196 = arith.addf %195, %18 : vector<8x384xf32>
    %197 = vector.extract_strided_slice %194 {offsets = [0, 0], sizes = [8, 128], strides = [1, 1]} : vector<8x384xf32> to vector<8x128xf32>
    %198 = vector.extract_strided_slice %196 {offsets = [0, 0], sizes = [8, 128], strides = [1, 1]} : vector<8x384xf32> to vector<8x128xf32>
    %199 = arith.addf %197, %198 : vector<8x128xf32>
    %200 = arith.negf %199 : vector<8x128xf32>
    %201 = math.exp %200 : vector<8x128xf32>
    %cst_58 = arith.constant 1.000000e+00 : f32
    %202 = vector.broadcast %cst_58 : f32 to vector<8x128xf32>
    %203 = arith.addf %202, %201 : vector<8x128xf32>
    %204 = arith.divf %202, %203 : vector<8x128xf32>
    %205 = vector.extract_strided_slice %194 {offsets = [0, 128], sizes = [8, 128], strides = [1, 1]} : vector<8x384xf32> to vector<8x128xf32>
    %206 = vector.extract_strided_slice %196 {offsets = [0, 128], sizes = [8, 128], strides = [1, 1]} : vector<8x384xf32> to vector<8x128xf32>
    %207 = arith.addf %205, %206 : vector<8x128xf32>
    %208 = arith.negf %207 : vector<8x128xf32>
    %209 = math.exp %208 : vector<8x128xf32>
    %cst_59 = arith.constant 1.000000e+00 : f32
    %210 = vector.broadcast %cst_59 : f32 to vector<8x128xf32>
    %211 = arith.addf %210, %209 : vector<8x128xf32>
    %212 = arith.divf %210, %211 : vector<8x128xf32>
    %213 = vector.extract_strided_slice %194 {offsets = [0, 256], sizes = [8, 128], strides = [1, 1]} : vector<8x384xf32> to vector<8x128xf32>
    %214 = vector.extract_strided_slice %196 {offsets = [0, 256], sizes = [8, 128], strides = [1, 1]} : vector<8x384xf32> to vector<8x128xf32>
    %215 = arith.mulf %204, %214 : vector<8x128xf32>
    %216 = arith.addf %213, %215 : vector<8x128xf32>
    %217 = math.tanh %216 : vector<8x128xf32>
    %cst_60 = arith.constant 1.000000e+00 : f32
    %218 = vector.broadcast %cst_60 : f32 to vector<8x128xf32>
    %219 = arith.subf %218, %212 : vector<8x128xf32>
    %220 = arith.mulf %219, %217 : vector<8x128xf32>
    %221 = arith.mulf %212, %188 : vector<8x128xf32>
    %222 = arith.addf %220, %221 : vector<8x128xf32>
    %223 = arith.index_cast %192 : i32 to index
    %c0_61 = arith.constant 0 : index
    %224 = vector.load %arg11[%223, %c0_61] : memref<64x128xf32, #tpu.memory_space<vmem>>, vector<8x128xf32>
    tpu.vector_store %arg11[%223, %c0_61], %222 {strides = array<i32>} : memref<64x128xf32, #tpu.memory_space<vmem>>, vector<8x128xf32>,
    %c6_i32 = arith.constant 6 : i32
    %c8_i32_62 = arith.constant 8 : i32
    %225 = arith.muli %c6_i32, %c8_i32_62 : i32
    %226 = tpu.assume_multiple %225, 8 : i32
    %227 = arith.index_cast %226 : i32 to index
    %c0_63 = arith.constant 0 : index
    %228 = vector.load %arg10[%227, %c0_63] : memref<64x384xf32, #tpu.memory_space<vmem>>, vector<8x384xf32>
    %cst_64 = arith.constant dense<0.000000e+00> : vector<8x384xf32>
    %229 = tpu.matmul %222, %14, %cst_64 {dimension_numbers = #tpu.dot_dimension_numbers<[1], [0], [0], [1], [0, 0, 1, 1], [], []>} : vector<8x128xf32>, vector<128x384xf32>, vector<8x384xf32> -> vector<8x384xf32>
    %230 = arith.addf %229, %18 : vector<8x384xf32>
    %231 = vector.extract_strided_slice %228 {offsets = [0, 0], sizes = [8, 128], strides = [1, 1]} : vector<8x384xf32> to vector<8x128xf32>
    %232 = vector.extract_strided_slice %230 {offsets = [0, 0], sizes = [8, 128], strides = [1, 1]} : vector<8x384xf32> to vector<8x128xf32>
    %233 = arith.addf %231, %232 : vector<8x128xf32>
    %234 = arith.negf %233 : vector<8x128xf32>
    %235 = math.exp %234 : vector<8x128xf32>
    %cst_65 = arith.constant 1.000000e+00 : f32
    %236 = vector.broadcast %cst_65 : f32 to vector<8x128xf32>
    %237 = arith.addf %236, %235 : vector<8x128xf32>
    %238 = arith.divf %236, %237 : vector<8x128xf32>
    %239 = vector.extract_strided_slice %228 {offsets = [0, 128], sizes = [8, 128], strides = [1, 1]} : vector<8x384xf32> to vector<8x128xf32>
    %240 = vector.extract_strided_slice %230 {offsets = [0, 128], sizes = [8, 128], strides = [1, 1]} : vector<8x384xf32> to vector<8x128xf32>
    %241 = arith.addf %239, %240 : vector<8x128xf32>
    %242 = arith.negf %241 : vector<8x128xf32>
    %243 = math.exp %242 : vector<8x128xf32>
    %cst_66 = arith.constant 1.000000e+00 : f32
    %244 = vector.broadcast %cst_66 : f32 to vector<8x128xf32>
    %245 = arith.addf %244, %243 : vector<8x128xf32>
    %246 = arith.divf %244, %245 : vector<8x128xf32>
    %247 = vector.extract_strided_slice %228 {offsets = [0, 256], sizes = [8, 128], strides = [1, 1]} : vector<8x384xf32> to vector<8x128xf32>
    %248 = vector.extract_strided_slice %230 {offsets = [0, 256], sizes = [8, 128], strides = [1, 1]} : vector<8x384xf32> to vector<8x128xf32>
    %249 = arith.mulf %238, %248 : vector<8x128xf32>
    %250 = arith.addf %247, %249 : vector<8x128xf32>
    %251 = math.tanh %250 : vector<8x128xf32>
    %cst_67 = arith.constant 1.000000e+00 : f32
    %252 = vector.broadcast %cst_67 : f32 to vector<8x128xf32>
    %253 = arith.subf %252, %246 : vector<8x128xf32>
    %254 = arith.mulf %253, %251 : vector<8x128xf32>
    %255 = arith.mulf %246, %222 : vector<8x128xf32>
    %256 = arith.addf %254, %255 : vector<8x128xf32>
    %257 = arith.index_cast %226 : i32 to index
    %c0_68 = arith.constant 0 : index
    %258 = vector.load %arg11[%257, %c0_68] : memref<64x128xf32, #tpu.memory_space<vmem>>, vector<8x128xf32>
    tpu.vector_store %arg11[%257, %c0_68], %256 {strides = array<i32>} : memref<64x128xf32, #tpu.memory_space<vmem>>, vector<8x128xf32>,
    %c7_i32 = arith.constant 7 : i32
    %c8_i32_69 = arith.constant 8 : i32
    %259 = arith.muli %c7_i32, %c8_i32_69 : i32
    %260 = tpu.assume_multiple %259, 8 : i32
    %261 = arith.index_cast %260 : i32 to index
    %c0_70 = arith.constant 0 : index
    %262 = vector.load %arg10[%261, %c0_70] : memref<64x384xf32, #tpu.memory_space<vmem>>, vector<8x384xf32>
    %cst_71 = arith.constant dense<0.000000e+00> : vector<8x384xf32>
    %263 = tpu.matmul %256, %14, %cst_71 {dimension_numbers = #tpu.dot_dimension_numbers<[1], [0], [0], [1], [0, 0, 1, 1], [], []>} : vector<8x128xf32>, vector<128x384xf32>, vector<8x384xf32> -> vector<8x384xf32>
    %264 = arith.addf %263, %18 : vector<8x384xf32>
    %265 = vector.extract_strided_slice %262 {offsets = [0, 0], sizes = [8, 128], strides = [1, 1]} : vector<8x384xf32> to vector<8x128xf32>
    %266 = vector.extract_strided_slice %264 {offsets = [0, 0], sizes = [8, 128], strides = [1, 1]} : vector<8x384xf32> to vector<8x128xf32>
    %267 = arith.addf %265, %266 : vector<8x128xf32>
    %268 = arith.negf %267 : vector<8x128xf32>
    %269 = math.exp %268 : vector<8x128xf32>
    %cst_72 = arith.constant 1.000000e+00 : f32
    %270 = vector.broadcast %cst_72 : f32 to vector<8x128xf32>
    %271 = arith.addf %270, %269 : vector<8x128xf32>
    %272 = arith.divf %270, %271 : vector<8x128xf32>
    %273 = vector.extract_strided_slice %262 {offsets = [0, 128], sizes = [8, 128], strides = [1, 1]} : vector<8x384xf32> to vector<8x128xf32>
    %274 = vector.extract_strided_slice %264 {offsets = [0, 128], sizes = [8, 128], strides = [1, 1]} : vector<8x384xf32> to vector<8x128xf32>
    %275 = arith.addf %273, %274 : vector<8x128xf32>
    %276 = arith.negf %275 : vector<8x128xf32>
    %277 = math.exp %276 : vector<8x128xf32>
    %cst_73 = arith.constant 1.000000e+00 : f32
    %278 = vector.broadcast %cst_73 : f32 to vector<8x128xf32>
    %279 = arith.addf %278, %277 : vector<8x128xf32>
    %280 = arith.divf %278, %279 : vector<8x128xf32>
    %281 = vector.extract_strided_slice %262 {offsets = [0, 256], sizes = [8, 128], strides = [1, 1]} : vector<8x384xf32> to vector<8x128xf32>
    %282 = vector.extract_strided_slice %264 {offsets = [0, 256], sizes = [8, 128], strides = [1, 1]} : vector<8x384xf32> to vector<8x128xf32>
    %283 = arith.mulf %272, %282 : vector<8x128xf32>
    %284 = arith.addf %281, %283 : vector<8x128xf32>
    %285 = math.tanh %284 : vector<8x128xf32>
    %cst_74 = arith.constant 1.000000e+00 : f32
    %286 = vector.broadcast %cst_74 : f32 to vector<8x128xf32>
    %287 = arith.subf %286, %280 : vector<8x128xf32>
    %288 = arith.mulf %287, %285 : vector<8x128xf32>
    %289 = arith.mulf %280, %256 : vector<8x128xf32>
    %290 = arith.addf %288, %289 : vector<8x128xf32>
    %291 = arith.index_cast %260 : i32 to index
    %c0_75 = arith.constant 0 : index
    %292 = vector.load %arg11[%291, %c0_75] : memref<64x128xf32, #tpu.memory_space<vmem>>, vector<8x128xf32>
    tpu.vector_store %arg11[%291, %c0_75], %290 {strides = array<i32>} : memref<64x128xf32, #tpu.memory_space<vmem>>, vector<8x128xf32>,
    %c8_i32_76 = arith.constant 8 : i32
    %c0_77 = arith.constant 0 : index
    %c0_78 = arith.constant 0 : index
    %c0_79 = arith.constant 0 : index
    %293 = vector.load %arg12[%c0_77, %c0_78, %c0_79] : memref<2x8x128xf32, #tpu.memory_space<vmem>>, vector<1x8x128xf32>
    %294 = vector.shape_cast %293 : vector<1x8x128xf32> to vector<8x128xf32>
    %295 = vector.shape_cast %290 : vector<8x128xf32> to vector<1x8x128xf32>
    tpu.vector_store %arg12[%c0_77, %c0_78, %c0_79], %295 {strides = array<i32>} : memref<2x8x128xf32, #tpu.memory_space<vmem>>, vector<1x8x128xf32>,
    %c0_80 = arith.constant 0 : index
    %c0_81 = arith.constant 0 : index
    %296 = vector.load %arg11[%c0_80, %c0_81] : memref<64x128xf32, #tpu.memory_space<vmem>>, vector<64x128xf32>
    %c1 = arith.constant 1 : index
    %c0_82 = arith.constant 0 : index
    %c0_83 = arith.constant 0 : index
    %297 = vector.load %arg3[%c1, %c0_82, %c0_83] : memref<2x128x384xf32, #tpu.memory_space<vmem>>, vector<1x128x384xf32>
    %298 = vector.shape_cast %297 : vector<1x128x384xf32> to vector<128x384xf32>
    %cst_84 = arith.constant dense<0.000000e+00> : vector<64x384xf32>
    %299 = tpu.matmul %296, %298, %cst_84 {dimension_numbers = #tpu.dot_dimension_numbers<[1], [0], [0], [1], [0, 0, 1, 1], [], []>} : vector<64x128xf32>, vector<128x384xf32>, vector<64x384xf32> -> vector<64x384xf32>
    %c1_85 = arith.constant 1 : index
    %c0_86 = arith.constant 0 : index
    %c0_87 = arith.constant 0 : index
    %300 = vector.load %arg5[%c1_85, %c0_86, %c0_87] : memref<2x1x384xf32, #tpu.memory_space<vmem>>, vector<1x1x384xf32>
    %301 = vector.shape_cast %300 : vector<1x1x384xf32> to vector<1x384xf32>
    %302 = vector.broadcast %301 : vector<1x384xf32> to vector<64x384xf32>
    %303 = arith.addf %299, %302 : vector<64x384xf32>
    %c0_88 = arith.constant 0 : index
    %c0_89 = arith.constant 0 : index
    %304 = vector.load %arg10[%c0_88, %c0_89] : memref<64x384xf32, #tpu.memory_space<vmem>>, vector<64x384xf32>
    tpu.vector_store %arg10[%c0_88, %c0_89], %303 {strides = array<i32>} : memref<64x384xf32, #tpu.memory_space<vmem>>, vector<64x384xf32>,
    %c1_90 = arith.constant 1 : index
    %c0_91 = arith.constant 0 : index
    %c0_92 = arith.constant 0 : index
    %305 = vector.load %arg4[%c1_90, %c0_91, %c0_92] : memref<2x128x384xf32, #tpu.memory_space<vmem>>, vector<1x128x384xf32>
    %306 = vector.shape_cast %305 : vector<1x128x384xf32> to vector<128x384xf32>
    %c1_93 = arith.constant 1 : index
    %c0_94 = arith.constant 0 : index
    %c0_95 = arith.constant 0 : index
    %307 = vector.load %arg6[%c1_93, %c0_94, %c0_95] : memref<2x1x384xf32, #tpu.memory_space<vmem>>, vector<1x1x384xf32>
    %308 = vector.shape_cast %307 : vector<1x1x384xf32> to vector<1x384xf32>
    %309 = vector.shape_cast %308 : vector<1x384xf32> to vector<1x384xf32>
    %310 = vector.broadcast %309 : vector<1x384xf32> to vector<8x384xf32>
    %c1_96 = arith.constant 1 : index
    %c0_97 = arith.constant 0 : index
    %c0_98 = arith.constant 0 : index
    %311 = vector.load %arg12[%c1_96, %c0_97, %c0_98] : memref<2x8x128xf32, #tpu.memory_space<vmem>>, vector<1x8x128xf32>
    %312 = vector.shape_cast %311 : vector<1x8x128xf32> to vector<8x128xf32>
    %c0_i32_99 = arith.constant 0 : i32
    %c8_i32_100 = arith.constant 8 : i32
    %313 = arith.muli %c0_i32_99, %c8_i32_100 : i32
    %314 = tpu.assume_multiple %313, 8 : i32
    %315 = arith.index_cast %314 : i32 to index
    %c0_101 = arith.constant 0 : index
    %316 = vector.load %arg10[%315, %c0_101] : memref<64x384xf32, #tpu.memory_space<vmem>>, vector<8x384xf32>
    %cst_102 = arith.constant dense<0.000000e+00> : vector<8x384xf32>
    %317 = tpu.matmul %312, %306, %cst_102 {dimension_numbers = #tpu.dot_dimension_numbers<[1], [0], [0], [1], [0, 0, 1, 1], [], []>} : vector<8x128xf32>, vector<128x384xf32>, vector<8x384xf32> -> vector<8x384xf32>
    %318 = arith.addf %317, %310 : vector<8x384xf32>
    %319 = vector.extract_strided_slice %316 {offsets = [0, 0], sizes = [8, 128], strides = [1, 1]} : vector<8x384xf32> to vector<8x128xf32>
    %320 = vector.extract_strided_slice %318 {offsets = [0, 0], sizes = [8, 128], strides = [1, 1]} : vector<8x384xf32> to vector<8x128xf32>
    %321 = arith.addf %319, %320 : vector<8x128xf32>
    %322 = arith.negf %321 : vector<8x128xf32>
    %323 = math.exp %322 : vector<8x128xf32>
    %cst_103 = arith.constant 1.000000e+00 : f32
    %324 = vector.broadcast %cst_103 : f32 to vector<8x128xf32>
    %325 = arith.addf %324, %323 : vector<8x128xf32>
    %326 = arith.divf %324, %325 : vector<8x128xf32>
    %327 = vector.extract_strided_slice %316 {offsets = [0, 128], sizes = [8, 128], strides = [1, 1]} : vector<8x384xf32> to vector<8x128xf32>
    %328 = vector.extract_strided_slice %318 {offsets = [0, 128], sizes = [8, 128], strides = [1, 1]} : vector<8x384xf32> to vector<8x128xf32>
    %329 = arith.addf %327, %328 : vector<8x128xf32>
    %330 = arith.negf %329 : vector<8x128xf32>
    %331 = math.exp %330 : vector<8x128xf32>
    %cst_104 = arith.constant 1.000000e+00 : f32
    %332 = vector.broadcast %cst_104 : f32 to vector<8x128xf32>
    %333 = arith.addf %332, %331 : vector<8x128xf32>
    %334 = arith.divf %332, %333 : vector<8x128xf32>
    %335 = vector.extract_strided_slice %316 {offsets = [0, 256], sizes = [8, 128], strides = [1, 1]} : vector<8x384xf32> to vector<8x128xf32>
    %336 = vector.extract_strided_slice %318 {offsets = [0, 256], sizes = [8, 128], strides = [1, 1]} : vector<8x384xf32> to vector<8x128xf32>
    %337 = arith.mulf %326, %336 : vector<8x128xf32>
    %338 = arith.addf %335, %337 : vector<8x128xf32>
    %339 = math.tanh %338 : vector<8x128xf32>
    %cst_105 = arith.constant 1.000000e+00 : f32
    %340 = vector.broadcast %cst_105 : f32 to vector<8x128xf32>
    %341 = arith.subf %340, %334 : vector<8x128xf32>
    %342 = arith.mulf %341, %339 : vector<8x128xf32>
    %343 = arith.mulf %334, %312 : vector<8x128xf32>
    %344 = arith.addf %342, %343 : vector<8x128xf32>
    %345 = arith.index_cast %314 : i32 to index
    %c0_106 = arith.constant 0 : index
    %346 = vector.load %arg11[%345, %c0_106] : memref<64x128xf32, #tpu.memory_space<vmem>>, vector<8x128xf32>
    tpu.vector_store %arg11[%345, %c0_106], %344 {strides = array<i32>} : memref<64x128xf32, #tpu.memory_space<vmem>>, vector<8x128xf32>,
    %c1_i32_107 = arith.constant 1 : i32
    %c8_i32_108 = arith.constant 8 : i32
    %347 = arith.muli %c1_i32_107, %c8_i32_108 : i32
    %348 = tpu.assume_multiple %347, 8 : i32
    %349 = arith.index_cast %348 : i32 to index
    %c0_109 = arith.constant 0 : index
    %350 = vector.load %arg10[%349, %c0_109] : memref<64x384xf32, #tpu.memory_space<vmem>>, vector<8x384xf32>
    %cst_110 = arith.constant dense<0.000000e+00> : vector<8x384xf32>
    %351 = tpu.matmul %344, %306, %cst_110 {dimension_numbers = #tpu.dot_dimension_numbers<[1], [0], [0], [1], [0, 0, 1, 1], [], []>} : vector<8x128xf32>, vector<128x384xf32>, vector<8x384xf32> -> vector<8x384xf32>
    %352 = arith.addf %351, %310 : vector<8x384xf32>
    %353 = vector.extract_strided_slice %350 {offsets = [0, 0], sizes = [8, 128], strides = [1, 1]} : vector<8x384xf32> to vector<8x128xf32>
    %354 = vector.extract_strided_slice %352 {offsets = [0, 0], sizes = [8, 128], strides = [1, 1]} : vector<8x384xf32> to vector<8x128xf32>
    %355 = arith.addf %353, %354 : vector<8x128xf32>
    %356 = arith.negf %355 : vector<8x128xf32>
    %357 = math.exp %356 : vector<8x128xf32>
    %cst_111 = arith.constant 1.000000e+00 : f32
    %358 = vector.broadcast %cst_111 : f32 to vector<8x128xf32>
    %359 = arith.addf %358, %357 : vector<8x128xf32>
    %360 = arith.divf %358, %359 : vector<8x128xf32>
    %361 = vector.extract_strided_slice %350 {offsets = [0, 128], sizes = [8, 128], strides = [1, 1]} : vector<8x384xf32> to vector<8x128xf32>
    %362 = vector.extract_strided_slice %352 {offsets = [0, 128], sizes = [8, 128], strides = [1, 1]} : vector<8x384xf32> to vector<8x128xf32>
    %363 = arith.addf %361, %362 : vector<8x128xf32>
    %364 = arith.negf %363 : vector<8x128xf32>
    %365 = math.exp %364 : vector<8x128xf32>
    %cst_112 = arith.constant 1.000000e+00 : f32
    %366 = vector.broadcast %cst_112 : f32 to vector<8x128xf32>
    %367 = arith.addf %366, %365 : vector<8x128xf32>
    %368 = arith.divf %366, %367 : vector<8x128xf32>
    %369 = vector.extract_strided_slice %350 {offsets = [0, 256], sizes = [8, 128], strides = [1, 1]} : vector<8x384xf32> to vector<8x128xf32>
    %370 = vector.extract_strided_slice %352 {offsets = [0, 256], sizes = [8, 128], strides = [1, 1]} : vector<8x384xf32> to vector<8x128xf32>
    %371 = arith.mulf %360, %370 : vector<8x128xf32>
    %372 = arith.addf %369, %371 : vector<8x128xf32>
    %373 = math.tanh %372 : vector<8x128xf32>
    %cst_113 = arith.constant 1.000000e+00 : f32
    %374 = vector.broadcast %cst_113 : f32 to vector<8x128xf32>
    %375 = arith.subf %374, %368 : vector<8x128xf32>
    %376 = arith.mulf %375, %373 : vector<8x128xf32>
    %377 = arith.mulf %368, %344 : vector<8x128xf32>
    %378 = arith.addf %376, %377 : vector<8x128xf32>
    %379 = arith.index_cast %348 : i32 to index
    %c0_114 = arith.constant 0 : index
    %380 = vector.load %arg11[%379, %c0_114] : memref<64x128xf32, #tpu.memory_space<vmem>>, vector<8x128xf32>
    tpu.vector_store %arg11[%379, %c0_114], %378 {strides = array<i32>} : memref<64x128xf32, #tpu.memory_space<vmem>>, vector<8x128xf32>,
    %c2_i32_115 = arith.constant 2 : i32
    %c8_i32_116 = arith.constant 8 : i32
    %381 = arith.muli %c2_i32_115, %c8_i32_116 : i32
    %382 = tpu.assume_multiple %381, 8 : i32
    %383 = arith.index_cast %382 : i32 to index
    %c0_117 = arith.constant 0 : index
    %384 = vector.load %arg10[%383, %c0_117] : memref<64x384xf32, #tpu.memory_space<vmem>>, vector<8x384xf32>
    %cst_118 = arith.constant dense<0.000000e+00> : vector<8x384xf32>
    %385 = tpu.matmul %378, %306, %cst_118 {dimension_numbers = #tpu.dot_dimension_numbers<[1], [0], [0], [1], [0, 0, 1, 1], [], []>} : vector<8x128xf32>, vector<128x384xf32>, vector<8x384xf32> -> vector<8x384xf32>
    %386 = arith.addf %385, %310 : vector<8x384xf32>
    %387 = vector.extract_strided_slice %384 {offsets = [0, 0], sizes = [8, 128], strides = [1, 1]} : vector<8x384xf32> to vector<8x128xf32>
    %388 = vector.extract_strided_slice %386 {offsets = [0, 0], sizes = [8, 128], strides = [1, 1]} : vector<8x384xf32> to vector<8x128xf32>
    %389 = arith.addf %387, %388 : vector<8x128xf32>
    %390 = arith.negf %389 : vector<8x128xf32>
    %391 = math.exp %390 : vector<8x128xf32>
    %cst_119 = arith.constant 1.000000e+00 : f32
    %392 = vector.broadcast %cst_119 : f32 to vector<8x128xf32>
    %393 = arith.addf %392, %391 : vector<8x128xf32>
    %394 = arith.divf %392, %393 : vector<8x128xf32>
    %395 = vector.extract_strided_slice %384 {offsets = [0, 128], sizes = [8, 128], strides = [1, 1]} : vector<8x384xf32> to vector<8x128xf32>
    %396 = vector.extract_strided_slice %386 {offsets = [0, 128], sizes = [8, 128], strides = [1, 1]} : vector<8x384xf32> to vector<8x128xf32>
    %397 = arith.addf %395, %396 : vector<8x128xf32>
    %398 = arith.negf %397 : vector<8x128xf32>
    %399 = math.exp %398 : vector<8x128xf32>
    %cst_120 = arith.constant 1.000000e+00 : f32
    %400 = vector.broadcast %cst_120 : f32 to vector<8x128xf32>
    %401 = arith.addf %400, %399 : vector<8x128xf32>
    %402 = arith.divf %400, %401 : vector<8x128xf32>
    %403 = vector.extract_strided_slice %384 {offsets = [0, 256], sizes = [8, 128], strides = [1, 1]} : vector<8x384xf32> to vector<8x128xf32>
    %404 = vector.extract_strided_slice %386 {offsets = [0, 256], sizes = [8, 128], strides = [1, 1]} : vector<8x384xf32> to vector<8x128xf32>
    %405 = arith.mulf %394, %404 : vector<8x128xf32>
    %406 = arith.addf %403, %405 : vector<8x128xf32>
    %407 = math.tanh %406 : vector<8x128xf32>
    %cst_121 = arith.constant 1.000000e+00 : f32
    %408 = vector.broadcast %cst_121 : f32 to vector<8x128xf32>
    %409 = arith.subf %408, %402 : vector<8x128xf32>
    %410 = arith.mulf %409, %407 : vector<8x128xf32>
    %411 = arith.mulf %402, %378 : vector<8x128xf32>
    %412 = arith.addf %410, %411 : vector<8x128xf32>
    %413 = arith.index_cast %382 : i32 to index
    %c0_122 = arith.constant 0 : index
    %414 = vector.load %arg11[%413, %c0_122] : memref<64x128xf32, #tpu.memory_space<vmem>>, vector<8x128xf32>
    tpu.vector_store %arg11[%413, %c0_122], %412 {strides = array<i32>} : memref<64x128xf32, #tpu.memory_space<vmem>>, vector<8x128xf32>,
    %c3_i32_123 = arith.constant 3 : i32
    %c8_i32_124 = arith.constant 8 : i32
    %415 = arith.muli %c3_i32_123, %c8_i32_124 : i32
    %416 = tpu.assume_multiple %415, 8 : i32
    %417 = arith.index_cast %416 : i32 to index
    %c0_125 = arith.constant 0 : index
    %418 = vector.load %arg10[%417, %c0_125] : memref<64x384xf32, #tpu.memory_space<vmem>>, vector<8x384xf32>
    %cst_126 = arith.constant dense<0.000000e+00> : vector<8x384xf32>
    %419 = tpu.matmul %412, %306, %cst_126 {dimension_numbers = #tpu.dot_dimension_numbers<[1], [0], [0], [1], [0, 0, 1, 1], [], []>} : vector<8x128xf32>, vector<128x384xf32>, vector<8x384xf32> -> vector<8x384xf32>
    %420 = arith.addf %419, %310 : vector<8x384xf32>
    %421 = vector.extract_strided_slice %418 {offsets = [0, 0], sizes = [8, 128], strides = [1, 1]} : vector<8x384xf32> to vector<8x128xf32>
    %422 = vector.extract_strided_slice %420 {offsets = [0, 0], sizes = [8, 128], strides = [1, 1]} : vector<8x384xf32> to vector<8x128xf32>
    %423 = arith.addf %421, %422 : vector<8x128xf32>
    %424 = arith.negf %423 : vector<8x128xf32>
    %425 = math.exp %424 : vector<8x128xf32>
    %cst_127 = arith.constant 1.000000e+00 : f32
    %426 = vector.broadcast %cst_127 : f32 to vector<8x128xf32>
    %427 = arith.addf %426, %425 : vector<8x128xf32>
    %428 = arith.divf %426, %427 : vector<8x128xf32>
    %429 = vector.extract_strided_slice %418 {offsets = [0, 128], sizes = [8, 128], strides = [1, 1]} : vector<8x384xf32> to vector<8x128xf32>
    %430 = vector.extract_strided_slice %420 {offsets = [0, 128], sizes = [8, 128], strides = [1, 1]} : vector<8x384xf32> to vector<8x128xf32>
    %431 = arith.addf %429, %430 : vector<8x128xf32>
    %432 = arith.negf %431 : vector<8x128xf32>
    %433 = math.exp %432 : vector<8x128xf32>
    %cst_128 = arith.constant 1.000000e+00 : f32
    %434 = vector.broadcast %cst_128 : f32 to vector<8x128xf32>
    %435 = arith.addf %434, %433 : vector<8x128xf32>
    %436 = arith.divf %434, %435 : vector<8x128xf32>
    %437 = vector.extract_strided_slice %418 {offsets = [0, 256], sizes = [8, 128], strides = [1, 1]} : vector<8x384xf32> to vector<8x128xf32>
    %438 = vector.extract_strided_slice %420 {offsets = [0, 256], sizes = [8, 128], strides = [1, 1]} : vector<8x384xf32> to vector<8x128xf32>
    %439 = arith.mulf %428, %438 : vector<8x128xf32>
    %440 = arith.addf %437, %439 : vector<8x128xf32>
    %441 = math.tanh %440 : vector<8x128xf32>
    %cst_129 = arith.constant 1.000000e+00 : f32
    %442 = vector.broadcast %cst_129 : f32 to vector<8x128xf32>
    %443 = arith.subf %442, %436 : vector<8x128xf32>
    %444 = arith.mulf %443, %441 : vector<8x128xf32>
    %445 = arith.mulf %436, %412 : vector<8x128xf32>
    %446 = arith.addf %444, %445 : vector<8x128xf32>
    %447 = arith.index_cast %416 : i32 to index
    %c0_130 = arith.constant 0 : index
    %448 = vector.load %arg11[%447, %c0_130] : memref<64x128xf32, #tpu.memory_space<vmem>>, vector<8x128xf32>
    tpu.vector_store %arg11[%447, %c0_130], %446 {strides = array<i32>} : memref<64x128xf32, #tpu.memory_space<vmem>>, vector<8x128xf32>,
    %c4_i32_131 = arith.constant 4 : i32
    %c8_i32_132 = arith.constant 8 : i32
    %449 = arith.muli %c4_i32_131, %c8_i32_132 : i32
    %450 = tpu.assume_multiple %449, 8 : i32
    %451 = arith.index_cast %450 : i32 to index
    %c0_133 = arith.constant 0 : index
    %452 = vector.load %arg10[%451, %c0_133] : memref<64x384xf32, #tpu.memory_space<vmem>>, vector<8x384xf32>
    %cst_134 = arith.constant dense<0.000000e+00> : vector<8x384xf32>
    %453 = tpu.matmul %446, %306, %cst_134 {dimension_numbers = #tpu.dot_dimension_numbers<[1], [0], [0], [1], [0, 0, 1, 1], [], []>} : vector<8x128xf32>, vector<128x384xf32>, vector<8x384xf32> -> vector<8x384xf32>
    %454 = arith.addf %453, %310 : vector<8x384xf32>
    %455 = vector.extract_strided_slice %452 {offsets = [0, 0], sizes = [8, 128], strides = [1, 1]} : vector<8x384xf32> to vector<8x128xf32>
    %456 = vector.extract_strided_slice %454 {offsets = [0, 0], sizes = [8, 128], strides = [1, 1]} : vector<8x384xf32> to vector<8x128xf32>
    %457 = arith.addf %455, %456 : vector<8x128xf32>
    %458 = arith.negf %457 : vector<8x128xf32>
    %459 = math.exp %458 : vector<8x128xf32>
    %cst_135 = arith.constant 1.000000e+00 : f32
    %460 = vector.broadcast %cst_135 : f32 to vector<8x128xf32>
    %461 = arith.addf %460, %459 : vector<8x128xf32>
    %462 = arith.divf %460, %461 : vector<8x128xf32>
    %463 = vector.extract_strided_slice %452 {offsets = [0, 128], sizes = [8, 128], strides = [1, 1]} : vector<8x384xf32> to vector<8x128xf32>
    %464 = vector.extract_strided_slice %454 {offsets = [0, 128], sizes = [8, 128], strides = [1, 1]} : vector<8x384xf32> to vector<8x128xf32>
    %465 = arith.addf %463, %464 : vector<8x128xf32>
    %466 = arith.negf %465 : vector<8x128xf32>
    %467 = math.exp %466 : vector<8x128xf32>
    %cst_136 = arith.constant 1.000000e+00 : f32
    %468 = vector.broadcast %cst_136 : f32 to vector<8x128xf32>
    %469 = arith.addf %468, %467 : vector<8x128xf32>
    %470 = arith.divf %468, %469 : vector<8x128xf32>
    %471 = vector.extract_strided_slice %452 {offsets = [0, 256], sizes = [8, 128], strides = [1, 1]} : vector<8x384xf32> to vector<8x128xf32>
    %472 = vector.extract_strided_slice %454 {offsets = [0, 256], sizes = [8, 128], strides = [1, 1]} : vector<8x384xf32> to vector<8x128xf32>
    %473 = arith.mulf %462, %472 : vector<8x128xf32>
    %474 = arith.addf %471, %473 : vector<8x128xf32>
    %475 = math.tanh %474 : vector<8x128xf32>
    %cst_137 = arith.constant 1.000000e+00 : f32
    %476 = vector.broadcast %cst_137 : f32 to vector<8x128xf32>
    %477 = arith.subf %476, %470 : vector<8x128xf32>
    %478 = arith.mulf %477, %475 : vector<8x128xf32>
    %479 = arith.mulf %470, %446 : vector<8x128xf32>
    %480 = arith.addf %478, %479 : vector<8x128xf32>
    %481 = arith.index_cast %450 : i32 to index
    %c0_138 = arith.constant 0 : index
    %482 = vector.load %arg11[%481, %c0_138] : memref<64x128xf32, #tpu.memory_space<vmem>>, vector<8x128xf32>
    tpu.vector_store %arg11[%481, %c0_138], %480 {strides = array<i32>} : memref<64x128xf32, #tpu.memory_space<vmem>>, vector<8x128xf32>,
    %c5_i32_139 = arith.constant 5 : i32
    %c8_i32_140 = arith.constant 8 : i32
    %483 = arith.muli %c5_i32_139, %c8_i32_140 : i32
    %484 = tpu.assume_multiple %483, 8 : i32
    %485 = arith.index_cast %484 : i32 to index
    %c0_141 = arith.constant 0 : index
    %486 = vector.load %arg10[%485, %c0_141] : memref<64x384xf32, #tpu.memory_space<vmem>>, vector<8x384xf32>
    %cst_142 = arith.constant dense<0.000000e+00> : vector<8x384xf32>
    %487 = tpu.matmul %480, %306, %cst_142 {dimension_numbers = #tpu.dot_dimension_numbers<[1], [0], [0], [1], [0, 0, 1, 1], [], []>} : vector<8x128xf32>, vector<128x384xf32>, vector<8x384xf32> -> vector<8x384xf32>
    %488 = arith.addf %487, %310 : vector<8x384xf32>
    %489 = vector.extract_strided_slice %486 {offsets = [0, 0], sizes = [8, 128], strides = [1, 1]} : vector<8x384xf32> to vector<8x128xf32>
    %490 = vector.extract_strided_slice %488 {offsets = [0, 0], sizes = [8, 128], strides = [1, 1]} : vector<8x384xf32> to vector<8x128xf32>
    %491 = arith.addf %489, %490 : vector<8x128xf32>
    %492 = arith.negf %491 : vector<8x128xf32>
    %493 = math.exp %492 : vector<8x128xf32>
    %cst_143 = arith.constant 1.000000e+00 : f32
    %494 = vector.broadcast %cst_143 : f32 to vector<8x128xf32>
    %495 = arith.addf %494, %493 : vector<8x128xf32>
    %496 = arith.divf %494, %495 : vector<8x128xf32>
    %497 = vector.extract_strided_slice %486 {offsets = [0, 128], sizes = [8, 128], strides = [1, 1]} : vector<8x384xf32> to vector<8x128xf32>
    %498 = vector.extract_strided_slice %488 {offsets = [0, 128], sizes = [8, 128], strides = [1, 1]} : vector<8x384xf32> to vector<8x128xf32>
    %499 = arith.addf %497, %498 : vector<8x128xf32>
    %500 = arith.negf %499 : vector<8x128xf32>
    %501 = math.exp %500 : vector<8x128xf32>
    %cst_144 = arith.constant 1.000000e+00 : f32
    %502 = vector.broadcast %cst_144 : f32 to vector<8x128xf32>
    %503 = arith.addf %502, %501 : vector<8x128xf32>
    %504 = arith.divf %502, %503 : vector<8x128xf32>
    %505 = vector.extract_strided_slice %486 {offsets = [0, 256], sizes = [8, 128], strides = [1, 1]} : vector<8x384xf32> to vector<8x128xf32>
    %506 = vector.extract_strided_slice %488 {offsets = [0, 256], sizes = [8, 128], strides = [1, 1]} : vector<8x384xf32> to vector<8x128xf32>
    %507 = arith.mulf %496, %506 : vector<8x128xf32>
    %508 = arith.addf %505, %507 : vector<8x128xf32>
    %509 = math.tanh %508 : vector<8x128xf32>
    %cst_145 = arith.constant 1.000000e+00 : f32
    %510 = vector.broadcast %cst_145 : f32 to vector<8x128xf32>
    %511 = arith.subf %510, %504 : vector<8x128xf32>
    %512 = arith.mulf %511, %509 : vector<8x128xf32>
    %513 = arith.mulf %504, %480 : vector<8x128xf32>
    %514 = arith.addf %512, %513 : vector<8x128xf32>
    %515 = arith.index_cast %484 : i32 to index
    %c0_146 = arith.constant 0 : index
    %516 = vector.load %arg11[%515, %c0_146] : memref<64x128xf32, #tpu.memory_space<vmem>>, vector<8x128xf32>
    tpu.vector_store %arg11[%515, %c0_146], %514 {strides = array<i32>} : memref<64x128xf32, #tpu.memory_space<vmem>>, vector<8x128xf32>,
    %c6_i32_147 = arith.constant 6 : i32
    %c8_i32_148 = arith.constant 8 : i32
    %517 = arith.muli %c6_i32_147, %c8_i32_148 : i32
    %518 = tpu.assume_multiple %517, 8 : i32
    %519 = arith.index_cast %518 : i32 to index
    %c0_149 = arith.constant 0 : index
    %520 = vector.load %arg10[%519, %c0_149] : memref<64x384xf32, #tpu.memory_space<vmem>>, vector<8x384xf32>
    %cst_150 = arith.constant dense<0.000000e+00> : vector<8x384xf32>
    %521 = tpu.matmul %514, %306, %cst_150 {dimension_numbers = #tpu.dot_dimension_numbers<[1], [0], [0], [1], [0, 0, 1, 1], [], []>} : vector<8x128xf32>, vector<128x384xf32>, vector<8x384xf32> -> vector<8x384xf32>
    %522 = arith.addf %521, %310 : vector<8x384xf32>
    %523 = vector.extract_strided_slice %520 {offsets = [0, 0], sizes = [8, 128], strides = [1, 1]} : vector<8x384xf32> to vector<8x128xf32>
    %524 = vector.extract_strided_slice %522 {offsets = [0, 0], sizes = [8, 128], strides = [1, 1]} : vector<8x384xf32> to vector<8x128xf32>
    %525 = arith.addf %523, %524 : vector<8x128xf32>
    %526 = arith.negf %525 : vector<8x128xf32>
    %527 = math.exp %526 : vector<8x128xf32>
    %cst_151 = arith.constant 1.000000e+00 : f32
    %528 = vector.broadcast %cst_151 : f32 to vector<8x128xf32>
    %529 = arith.addf %528, %527 : vector<8x128xf32>
    %530 = arith.divf %528, %529 : vector<8x128xf32>
    %531 = vector.extract_strided_slice %520 {offsets = [0, 128], sizes = [8, 128], strides = [1, 1]} : vector<8x384xf32> to vector<8x128xf32>
    %532 = vector.extract_strided_slice %522 {offsets = [0, 128], sizes = [8, 128], strides = [1, 1]} : vector<8x384xf32> to vector<8x128xf32>
    %533 = arith.addf %531, %532 : vector<8x128xf32>
    %534 = arith.negf %533 : vector<8x128xf32>
    %535 = math.exp %534 : vector<8x128xf32>
    %cst_152 = arith.constant 1.000000e+00 : f32
    %536 = vector.broadcast %cst_152 : f32 to vector<8x128xf32>
    %537 = arith.addf %536, %535 : vector<8x128xf32>
    %538 = arith.divf %536, %537 : vector<8x128xf32>
    %539 = vector.extract_strided_slice %520 {offsets = [0, 256], sizes = [8, 128], strides = [1, 1]} : vector<8x384xf32> to vector<8x128xf32>
    %540 = vector.extract_strided_slice %522 {offsets = [0, 256], sizes = [8, 128], strides = [1, 1]} : vector<8x384xf32> to vector<8x128xf32>
    %541 = arith.mulf %530, %540 : vector<8x128xf32>
    %542 = arith.addf %539, %541 : vector<8x128xf32>
    %543 = math.tanh %542 : vector<8x128xf32>
    %cst_153 = arith.constant 1.000000e+00 : f32
    %544 = vector.broadcast %cst_153 : f32 to vector<8x128xf32>
    %545 = arith.subf %544, %538 : vector<8x128xf32>
    %546 = arith.mulf %545, %543 : vector<8x128xf32>
    %547 = arith.mulf %538, %514 : vector<8x128xf32>
    %548 = arith.addf %546, %547 : vector<8x128xf32>
    %549 = arith.index_cast %518 : i32 to index
    %c0_154 = arith.constant 0 : index
    %550 = vector.load %arg11[%549, %c0_154] : memref<64x128xf32, #tpu.memory_space<vmem>>, vector<8x128xf32>
    tpu.vector_store %arg11[%549, %c0_154], %548 {strides = array<i32>} : memref<64x128xf32, #tpu.memory_space<vmem>>, vector<8x128xf32>,
    %c7_i32_155 = arith.constant 7 : i32
    %c8_i32_156 = arith.constant 8 : i32
    %551 = arith.muli %c7_i32_155, %c8_i32_156 : i32
    %552 = tpu.assume_multiple %551, 8 : i32
    %553 = arith.index_cast %552 : i32 to index
    %c0_157 = arith.constant 0 : index
    %554 = vector.load %arg10[%553, %c0_157] : memref<64x384xf32, #tpu.memory_space<vmem>>, vector<8x384xf32>
    %cst_158 = arith.constant dense<0.000000e+00> : vector<8x384xf32>
    %555 = tpu.matmul %548, %306, %cst_158 {dimension_numbers = #tpu.dot_dimension_numbers<[1], [0], [0], [1], [0, 0, 1, 1], [], []>} : vector<8x128xf32>, vector<128x384xf32>, vector<8x384xf32> -> vector<8x384xf32>
    %556 = arith.addf %555, %310 : vector<8x384xf32>
    %557 = vector.extract_strided_slice %554 {offsets = [0, 0], sizes = [8, 128], strides = [1, 1]} : vector<8x384xf32> to vector<8x128xf32>
    %558 = vector.extract_strided_slice %556 {offsets = [0, 0], sizes = [8, 128], strides = [1, 1]} : vector<8x384xf32> to vector<8x128xf32>
    %559 = arith.addf %557, %558 : vector<8x128xf32>
    %560 = arith.negf %559 : vector<8x128xf32>
    %561 = math.exp %560 : vector<8x128xf32>
    %cst_159 = arith.constant 1.000000e+00 : f32
    %562 = vector.broadcast %cst_159 : f32 to vector<8x128xf32>
    %563 = arith.addf %562, %561 : vector<8x128xf32>
    %564 = arith.divf %562, %563 : vector<8x128xf32>
    %565 = vector.extract_strided_slice %554 {offsets = [0, 128], sizes = [8, 128], strides = [1, 1]} : vector<8x384xf32> to vector<8x128xf32>
    %566 = vector.extract_strided_slice %556 {offsets = [0, 128], sizes = [8, 128], strides = [1, 1]} : vector<8x384xf32> to vector<8x128xf32>
    %567 = arith.addf %565, %566 : vector<8x128xf32>
    %568 = arith.negf %567 : vector<8x128xf32>
    %569 = math.exp %568 : vector<8x128xf32>
    %cst_160 = arith.constant 1.000000e+00 : f32
    %570 = vector.broadcast %cst_160 : f32 to vector<8x128xf32>
    %571 = arith.addf %570, %569 : vector<8x128xf32>
    %572 = arith.divf %570, %571 : vector<8x128xf32>
    %573 = vector.extract_strided_slice %554 {offsets = [0, 256], sizes = [8, 128], strides = [1, 1]} : vector<8x384xf32> to vector<8x128xf32>
    %574 = vector.extract_strided_slice %556 {offsets = [0, 256], sizes = [8, 128], strides = [1, 1]} : vector<8x384xf32> to vector<8x128xf32>
    %575 = arith.mulf %564, %574 : vector<8x128xf32>
    %576 = arith.addf %573, %575 : vector<8x128xf32>
    %577 = math.tanh %576 : vector<8x128xf32>
    %cst_161 = arith.constant 1.000000e+00 : f32
    %578 = vector.broadcast %cst_161 : f32 to vector<8x128xf32>
    %579 = arith.subf %578, %572 : vector<8x128xf32>
    %580 = arith.mulf %579, %577 : vector<8x128xf32>
    %581 = arith.mulf %572, %548 : vector<8x128xf32>
    %582 = arith.addf %580, %581 : vector<8x128xf32>
    %583 = arith.index_cast %552 : i32 to index
    %c0_162 = arith.constant 0 : index
    %584 = vector.load %arg11[%583, %c0_162] : memref<64x128xf32, #tpu.memory_space<vmem>>, vector<8x128xf32>
    tpu.vector_store %arg11[%583, %c0_162], %582 {strides = array<i32>} : memref<64x128xf32, #tpu.memory_space<vmem>>, vector<8x128xf32>,
    %c8_i32_163 = arith.constant 8 : i32
    %c1_164 = arith.constant 1 : index
    %c0_165 = arith.constant 0 : index
    %c0_166 = arith.constant 0 : index
    %585 = vector.load %arg12[%c1_164, %c0_165, %c0_166] : memref<2x8x128xf32, #tpu.memory_space<vmem>>, vector<1x8x128xf32>
    %586 = vector.shape_cast %585 : vector<1x8x128xf32> to vector<8x128xf32>
    %587 = vector.shape_cast %582 : vector<8x128xf32> to vector<1x8x128xf32>
    tpu.vector_store %arg12[%c1_164, %c0_165, %c0_166], %587 {strides = array<i32>} : memref<2x8x128xf32, #tpu.memory_space<vmem>>, vector<1x8x128xf32>,
    %c0_167 = arith.constant 0 : index
    %c0_168 = arith.constant 0 : index
    %588 = vector.load %arg11[%c0_167, %c0_168] : memref<64x128xf32, #tpu.memory_space<vmem>>, vector<64x128xf32>
    %c0_169 = arith.constant 0 : index
    %c0_170 = arith.constant 0 : index
    %589 = vector.load %arg7[%c0_169, %c0_170] : memref<1x128xf32, #tpu.memory_space<vmem>>, vector<1x128xf32>
    %590 = vector.broadcast %589 : vector<1x128xf32> to vector<64x128xf32>
    %591 = arith.mulf %588, %590 : vector<64x128xf32>
    %cst_171 = arith.constant dense<0.000000e+00> : vector<64xf32>
    %592 = vector.multi_reduction <add>, %591, %cst_171 [1] : vector<64x128xf32> to vector<64xf32>
    %593 = vector.shape_cast %592 : vector<64xf32> to vector<64x1xf32>
    %c0_172 = arith.constant 0 : index
    %c0_173 = arith.constant 0 : index
    %594 = vector.load %arg8[%c0_172, %c0_173] : memref<1x1xf32, #tpu.memory_space<vmem>>, vector<1x1xf32>
    %595 = vector.broadcast %594 : vector<1x1xf32> to vector<64x1xf32>
    %596 = arith.addf %593, %595 : vector<64x1xf32>
    %597 = arith.negf %596 : vector<64x1xf32>
    %598 = math.exp %597 : vector<64x1xf32>
    %cst_174 = arith.constant 1.000000e+00 : f32
    %599 = vector.broadcast %cst_174 : f32 to vector<64x1xf32>
    %600 = arith.addf %599, %598 : vector<64x1xf32>
    %601 = arith.divf %599, %600 : vector<64x1xf32>
    %c0_175 = arith.constant 0 : index
    %c0_176 = arith.constant 0 : index
    %c0_177 = arith.constant 0 : index
    %602 = vector.load %arg9[%c0_175, %c0_176, %c0_177] : memref<1x64x1xf32, #tpu.memory_space<vmem>>, vector<1x64x1xf32>
    %603 = vector.shape_cast %602 : vector<1x64x1xf32> to vector<64x1xf32>
    %604 = vector.shape_cast %601 : vector<64x1xf32> to vector<1x64x1xf32>
    tpu.vector_store %arg9[%c0_175, %c0_176, %c0_177], %604 {strides = array<i32>} : memref<1x64x1xf32, #tpu.memory_space<vmem>>, vector<1x64x1xf32>,
    return
  }
  func.func @transform_0(%arg0: i32, %arg1: i32) -> (i32, i32, i32) {
    %c0_i32 = arith.constant 0 : i32
    %c0_i32_0 = arith.constant 0 : i32
    return %arg0, %arg1, %c0_i32 : i32, i32, i32
  }
  func.func @transform_1(%arg0: i32, %arg1: i32) -> (i32, i32, i32) {
    %c0_i32 = arith.constant 0 : i32
    %c0_i32_0 = arith.constant 0 : i32
    %c0_i32_1 = arith.constant 0 : i32
    %c0_i32_2 = arith.constant 0 : i32
    return %c0_i32, %c0_i32_0, %c0_i32_1 : i32, i32, i32
  }
  func.func @transform_2(%arg0: i32, %arg1: i32) -> (i32, i32, i32) {
    %c0_i32 = arith.constant 0 : i32
    %c0_i32_0 = arith.constant 0 : i32
    %c0_i32_1 = arith.constant 0 : i32
    %c0_i32_2 = arith.constant 0 : i32
    return %c0_i32, %c0_i32_0, %c0_i32_1 : i32, i32, i32
  }
  func.func @transform_3(%arg0: i32, %arg1: i32) -> (i32, i32, i32) {
    %c0_i32 = arith.constant 0 : i32
    %c0_i32_0 = arith.constant 0 : i32
    %c0_i32_1 = arith.constant 0 : i32
    %c0_i32_2 = arith.constant 0 : i32
    return %c0_i32, %c0_i32_0, %c0_i32_1 : i32, i32, i32
  }
  func.func @transform_4(%arg0: i32, %arg1: i32) -> (i32, i32, i32) {
    %c0_i32 = arith.constant 0 : i32
    %c0_i32_0 = arith.constant 0 : i32
    %c0_i32_1 = arith.constant 0 : i32
    %c0_i32_2 = arith.constant 0 : i32
    return %c0_i32, %c0_i32_0, %c0_i32_1 : i32, i32, i32
  }
  func.func @transform_5(%arg0: i32, %arg1: i32) -> (i32, i32) {
    %c0_i32 = arith.constant 0 : i32
    %c0_i32_0 = arith.constant 0 : i32
    %c0_i32_1 = arith.constant 0 : i32
    return %c0_i32, %c0_i32_0 : i32, i32
  }
  func.func @transform_6(%arg0: i32, %arg1: i32) -> (i32, i32) {
    %c0_i32 = arith.constant 0 : i32
    %c0_i32_0 = arith.constant 0 : i32
    %c0_i32_1 = arith.constant 0 : i32
    return %c0_i32, %c0_i32_0 : i32, i32
  }
  func.func @transform_7(%arg0: i32, %arg1: i32) -> (i32, i32, i32) {
    %c0_i32 = arith.constant 0 : i32
    %c0_i32_0 = arith.constant 0 : i32
    return %arg0, %arg1, %c0_i32 : i32, i32, i32
  }
}

</mosaic_0001>

<llo_original>
// kernel: discriminator_forward.1
$region0: #{discriminator_forward.1}
  #allocation0 [shape = 'u32[]', space=smem, size = 0x4, offset = 0x4, fixed_abs, tag = 'smem constant byte address 0x4 - core index']
  #allocation1 [shape = 'u32[144,128]{1,0:T(1,128)}', space=vmem, size = 0x12000, scoped, tag = 'internal scratch']
  #allocation2 [shape = 'f32[64,384]{1,0:T(8,128)}', space=vmem, size = 0x18000, scoped, tag = 'scratch operand']
  #allocation3 [shape = 'f32[64,128]{1,0:T(8,128)}', space=vmem, size = 0x8000, scoped, tag = 'scratch operand']
  #allocation4 [shape = 'f32[2,8,128]{2,1,0:T(8,128)}', space=vmem, size = 0x2000, scoped, tag = 'scratch operand']
  #allocation5 [shape = 'f32[1,1]{1,0:T(1,128)S(1)}', space=vmem, size = 0x200, scoped, tag = 'scoped memory for discriminator_forward.1']
  %s0 = inlined_call_operand.vmem [shape: f32[1,64,128], index: 0, kind: input, shape index: {}]
  %s1 = inlined_call_operand.vmem [shape: f32[2,128,384], index: 1, kind: input, shape index: {}]
  %s2 = inlined_call_operand.vmem [shape: f32[2,128,384], index: 2, kind: input, shape index: {}]
  %s3 = inlined_call_operand.vmem [shape: f32[2,1,384], index: 3, kind: input, shape index: {}]
  %s4 = inlined_call_operand.vmem [shape: f32[2,1,384], index: 4, kind: input, shape index: {}]
  %s5 = inlined_call_operand.vmem [shape: f32[1,128], index: 5, kind: input, shape index: {}]
  %s6 = inlined_call_operand.<no memory space> [shape: f32[1,1], index: 6, kind: input, shape index: {}]
  %s7 = inlined_call_operand.vmem [shape: f32[1,64,1], index: 7, kind: output, shape index: {}]
  %s8 = sld [smem:[#allocation0]]
  $region42: #{discriminator_forward.1} parent=0
    _
  %s10 = ssub.s32 1, %s8
  %s11 = scalar_select 0, %s10, %s8
  %v12 = vstv %s6
  %13 = vst [vmem:[#allocation5] sm:$0x1] %v12
  // Predicated region
  $region2: #{discriminator_forward.1} parent=0 // pred_check
    _
  $region3: #{discriminator_forward.1} parent=0 // pred_check_branch
    %15 = sbr.rel (0) target = $region5
  $region4: #{discriminator_forward.1} parent=0 // pred_region
    _
  $region5: #{discriminator_forward.1} parent=0 // pred_fallthru
    _
  // Predicated region
  $region6: #{discriminator_forward.1} parent=0 // pred_check
    _
  $region7: #{discriminator_forward.1} parent=0 // pred_check_branch
    %17 = sbr.rel (0) target = $region9
  $region8: #{discriminator_forward.1} parent=0 // pred_region
    _
  $region9: #{discriminator_forward.1} parent=0 // pred_fallthru
    _
  // Predicated region
  $region10: #{discriminator_forward.1} parent=0 // pred_check
    _
  $region11: #{discriminator_forward.1} parent=0 // pred_check_branch
    %19 = sbr.rel (0) target = $region13
  $region12: #{discriminator_forward.1} parent=0 // pred_region
    _
  $region13: #{discriminator_forward.1} parent=0 // pred_fallthru
    _
  // Predicated region
  $region14: #{discriminator_forward.1} parent=0 // pred_check
    _
  $region15: #{discriminator_forward.1} parent=0 // pred_check_branch
    %21 = sbr.rel (0) target = $region17
  $region16: #{discriminator_forward.1} parent=0 // pred_region
    _
  $region17: #{discriminator_forward.1} parent=0 // pred_fallthru
    _
  // Predicated region
  $region18: #{discriminator_forward.1} parent=0 // pred_check
    _
  $region19: #{discriminator_forward.1} parent=0 // pred_check_branch
    %23 = sbr.rel (0) target = $region21
  $region20: #{discriminator_forward.1} parent=0 // pred_region
    _
  $region21: #{discriminator_forward.1} parent=0 // pred_fallthru
    _
  // Predicated region
  $region22: #{discriminator_forward.1} parent=0 // pred_check
    _
  $region23: #{discriminator_forward.1} parent=0 // pred_check_branch
    %25 = sbr.rel (0) target = $region25
  $region24: #{discriminator_forward.1} parent=0 // pred_region
    _
  $region25: #{discriminator_forward.1} parent=0 // pred_fallthru
    _
  // Predicated region
  $region26: #{discriminator_forward.1} parent=0 // pred_check
    _
  $region27: #{discriminator_forward.1} parent=0 // pred_check_branch
    %27 = sbr.rel (0) target = $region29
  $region28: #{discriminator_forward.1} parent=0 // pred_region
    _
  $region29: #{discriminator_forward.1} parent=0 // pred_fallthru
    _
  %p28 = scmp.eq.s32.totalorder 0, 0
  // Predicated region
  $region30: #{discriminator_forward.1} parent=0 // pred_check
    %p29 = pneg %p28
  $region31: #{discriminator_forward.1} parent=0 // pred_check_branch
    %31 = sbr.rel (%p29) target = $region33
  $region32: #{discriminator_forward.1} parent=0 // pred_region
    %32 = vst [vmem:[#allocation4] sm:$0xff] 0.0
    %33 = vst [vmem:[#allocation4 + $0x8] sm:$0xff] 0.0
  $region33: #{discriminator_forward.1} parent=0 // pred_fallthru
    _
  %v34 = vld [vmem:[%s0] sm:$0xff]
  %v35 = vld [vmem:[%s0 + $0x8] sm:$0xff]
  %v36 = vld [vmem:[%s0 + $0x10] sm:$0xff]
  %v37 = vld [vmem:[%s0 + $0x18] sm:$0xff]
  %v38 = vld [vmem:[%s0 + $0x20] sm:$0xff]
  %v39 = vld [vmem:[%s0 + $0x28] sm:$0xff]
  %v40 = vld [vmem:[%s0 + $0x30] sm:$0xff]
  %v41 = vld [vmem:[%s0 + $0x38] sm:$0xff]
  %v42 = vld [vmem:[%s1] sm:$0xff]
  %v43 = vld [vmem:[%s1 + $0x8] sm:$0xff]
  %v44 = vld [vmem:[%s1 + $0x10] sm:$0xff]
  %v45 = vld [vmem:[%s1 + $0x18] sm:$0xff]
  %v46 = vld [vmem:[%s1 + $0x20] sm:$0xff]
  %v47 = vld [vmem:[%s1 + $0x28] sm:$0xff]
  %v48 = vld [vmem:[%s1 + $0x30] sm:$0xff]
  %v49 = vld [vmem:[%s1 + $0x38] sm:$0xff]
  %v50 = vld [vmem:[%s1 + $0x40] sm:$0xff]
  %v51 = vld [vmem:[%s1 + $0x48] sm:$0xff]
  %v52 = vld [vmem:[%s1 + $0x50] sm:$0xff]
  %v53 = vld [vmem:[%s1 + $0x58] sm:$0xff]
  %v54 = vld [vmem:[%s1 + $0x60] sm:$0xff]
  %v55 = vld [vmem:[%s1 + $0x68] sm:$0xff]
  %v56 = vld [vmem:[%s1 + $0x70] sm:$0xff]
  %v57 = vld [vmem:[%s1 + $0x78] sm:$0xff]
  %v58 = vld [vmem:[%s1 + $0x80] sm:$0xff]
  %v59 = vld [vmem:[%s1 + $0x88] sm:$0xff]
  %v60 = vld [vmem:[%s1 + $0x90] sm:$0xff]
  %v61 = vld [vmem:[%s1 + $0x98] sm:$0xff]
  %v62 = vld [vmem:[%s1 + $0xa0] sm:$0xff]
  %v63 = vld [vmem:[%s1 + $0xa8] sm:$0xff]
  %v64 = vld [vmem:[%s1 + $0xb0] sm:$0xff]
  %v65 = vld [vmem:[%s1 + $0xb8] sm:$0xff]
  %v66 = vld [vmem:[%s1 + $0xc0] sm:$0xff]
  %v67 = vld [vmem:[%s1 + $0xc8] sm:$0xff]
  %v68 = vld [vmem:[%s1 + $0xd0] sm:$0xff]
  %v69 = vld [vmem:[%s1 + $0xd8] sm:$0xff]
  %v70 = vld [vmem:[%s1 + $0xe0] sm:$0xff]
  %v71 = vld [vmem:[%s1 + $0xe8] sm:$0xff]
  %v72 = vld [vmem:[%s1 + $0xf0] sm:$0xff]
  %v73 = vld [vmem:[%s1 + $0xf8] sm:$0xff]
  %v74 = vld [vmem:[%s1 + $0x100] sm:$0xff]
  %v75 = vld [vmem:[%s1 + $0x108] sm:$0xff]
  %v76 = vld [vmem:[%s1 + $0x110] sm:$0xff]
  %v77 = vld [vmem:[%s1 + $0x118] sm:$0xff]
  %v78 = vld [vmem:[%s1 + $0x120] sm:$0xff]
  %v79 = vld [vmem:[%s1 + $0x128] sm:$0xff]
  %v80 = vld [vmem:[%s1 + $0x130] sm:$0xff]
  %v81 = vld [vmem:[%s1 + $0x138] sm:$0xff]
  %v82 = vld [vmem:[%s1 + $0x140] sm:$0xff]
  %v83 = vld [vmem:[%s1 + $0x148] sm:$0xff]
  %v84 = vld [vmem:[%s1 + $0x150] sm:$0xff]
  %v85 = vld [vmem:[%s1 + $0x158] sm:$0xff]
  %v86 = vld [vmem:[%s1 + $0x160] sm:$0xff]
  %v87 = vld [vmem:[%s1 + $0x168] sm:$0xff]
  %v88 = vld [vmem:[%s1 + $0x170] sm:$0xff]
  %v89 = vld [vmem:[%s1 + $0x178] sm:$0xff]
  %v90 = vld [vmem:[%s3] sm:$0x7]
  %v92 = vlaneseq
  %v93 = vshrl.u32 %v92, 7
  %v94 = vsub.s32 0, %v93
  %v95 = vrot.slane %v90, %v94
  %v96 = vlaneseq
  %v97 = vshrl.u32 %v96, 7
  %v98 = vsub.s32 1, %v97
  %v99 = vrot.slane %v90, %v98
  %v100 = vlaneseq
  %v101 = vshrl.u32 %v100, 7
  %v102 = vsub.s32 2, %v101
  %v103 = vrot.slane %v90, %v102
  %107 = vmatprep.subr.mxu0 %v43
  %108 = vmatpush1.msra.mxu0 %v42
  %109 = vmatprep.subr.mxu0 %v46
  %110 = vmatpush1.msra.mxu0 %v45
  %111 = vmatprep.subr.mxu0 %v49
  %112 = vmatpush1.msra.mxu0 %v48
  %113 = vmatprep.subr.mxu0 %v52
  %114 = vmatpush1.msra.mxu0 %v51
  %115 = vmatprep.subr.mxu0 %v55
  %116 = vmatpush1.msra.mxu0 %v54
  %117 = vmatprep.subr.mxu0 %v58
  %118 = vmatpush1.msra.mxu0 %v57
  %119 = vmatprep.subr.mxu0 %v61
  %120 = vmatpush1.msra.mxu0 %v60
  %121 = vmatprep.subr.mxu0 %v64
  %122 = vmatpush1.msra.mxu0 %v63
  %123 = vmatprep.subr.mxu0 %v67
  %124 = vmatpush1.msra.mxu0 %v66
  %125 = vmatprep.subr.mxu0 %v70
  %126 = vmatpush1.msra.mxu0 %v69
  %127 = vmatprep.subr.mxu0 %v73
  %128 = vmatpush1.msra.mxu0 %v72
  %129 = vmatprep.subr.mxu0 %v76
  %130 = vmatpush1.msra.mxu0 %v75
  %131 = vmatprep.subr.mxu0 %v79
  %132 = vmatpush1.msra.mxu0 %v78
  %133 = vmatprep.subr.mxu0 %v82
  %134 = vmatpush1.msra.mxu0 %v81
  %135 = vmatprep.subr.mxu0 %v85
  %136 = vmatpush1.msra.mxu0 %v84
  %137 = vmatprep.subr.mxu0 %v88
  %138 = vmatpush1.msra.mxu0 %v87
  %139 = vmatprep.subr.mxu0 0.0
  %140 = vmatpush1.msra.mxu0 0.0
  %141 = vmatprep.subr.mxu0 0.0
  %142 = vmatpush1.msra.mxu0 0.0
  %143 = vmatprep.subr.mxu0 0.0
  %144 = vmatpush1.msra.mxu0 0.0
  %145 = vmatprep.subr.mxu0 0.0
  %146 = vmatpush1.msra.mxu0 0.0
  %147 = vmatprep.subr.mxu0 0.0
  %148 = vmatpush1.msra.mxu0 0.0
  %149 = vmatprep.subr.mxu0 0.0
  %150 = vmatpush1.msra.mxu0 0.0
  %151 = vmatprep.subr.mxu0 0.0
  %152 = vmatpush1.msra.mxu0 0.0
  %153 = vmatprep.subr.mxu0 0.0
  %154 = vmatpush1.msra.mxu0 0.0
  %155 = vmatprep.subr.mxu0 0.0
  %156 = vmatpush1.msra.mxu0 0.0
  %157 = vmatprep.subr.mxu0 0.0
  %158 = vmatpush1.msra.mxu0 0.0
  %159 = vmatprep.subr.mxu0 0.0
  %160 = vmatpush1.msra.mxu0 0.0
  %161 = vmatprep.subr.mxu0 0.0
  %162 = vmatpush1.msra.mxu0 0.0
  %163 = vmatprep.subr.mxu0 0.0
  %164 = vmatpush1.msra.mxu0 0.0
  %165 = vmatprep.subr.mxu0 0.0
  %166 = vmatpush1.msra.mxu0 0.0
  %167 = vmatprep.subr.mxu0 0.0
  %168 = vmatpush1.msra.mxu0 0.0
  %169 = vmatprep.subr.mxu0 0.0
  %170 = vmatpush1.msra.mxu0 0.0
  %171 = vmatprep.mubr.f32.mxu0 0.0
  %172 = vmatmul.mubr.f32.gmra.mrb[0].mxu0 %v34
  %v173 = vpop.f32.mrb[0].mxu0
  %v174 = vadd.f32 %v95, %v173
  %v175 = vpop.f32.mrb[0].mxu0
  %v176 = vadd.f32 %v99, %v175
  %177 = vmatprep.mubr.f32.mxu0 0.0
  %178 = vmatmul.mubr.f32.gmra.mrb[0].mxu0 %v35
  %v179 = vpop.f32.mrb[0].mxu0
  %v180 = vadd.f32 %v95, %v179
  %v181 = vpop.f32.mrb[0].mxu0
  %v182 = vadd.f32 %v99, %v181
  %183 = vmatprep.mubr.f32.mxu0 0.0
  %184 = vmatmul.mubr.f32.gmra.mrb[0].mxu0 %v36
  %v185 = vpop.f32.mrb[0].mxu0
  %v186 = vadd.f32 %v95, %v185
  %v187 = vpop.f32.mrb[0].mxu0
  %v188 = vadd.f32 %v99, %v187
  %189 = vmatprep.mubr.f32.mxu0 0.0
  %190 = vmatmul.mubr.f32.gmra.mrb[0].mxu0 %v37
  %v191 = vpop.f32.mrb[0].mxu0
  %v192 = vadd.f32 %v95, %v191
  %v193 = vpop.f32.mrb[0].mxu0
  %v194 = vadd.f32 %v99, %v193
  %195 = vmatprep.mubr.f32.mxu0 0.0
  %196 = vmatmul.mubr.f32.gmra.mrb[0].mxu0 %v38
  %v197 = vpop.f32.mrb[0].mxu0
  %v198 = vadd.f32 %v95, %v197
  %v199 = vpop.f32.mrb[0].mxu0
  %v200 = vadd.f32 %v99, %v199
  %201 = vmatprep.mubr.f32.mxu0 0.0
  %202 = vmatmul.mubr.f32.gmra.mrb[0].mxu0 %v39
  %v203 = vpop.f32.mrb[0].mxu0
  %v204 = vadd.f32 %v95, %v203
  %v205 = vpop.f32.mrb[0].mxu0
  %v206 = vadd.f32 %v99, %v205
  %207 = vmatprep.mubr.f32.mxu0 0.0
  %208 = vmatmul.mubr.f32.gmra.mrb[0].mxu0 %v40
  %v209 = vpop.f32.mrb[0].mxu0
  %v210 = vadd.f32 %v95, %v209
  %v211 = vpop.f32.mrb[0].mxu0
  %v212 = vadd.f32 %v99, %v211
  %213 = vmatprep.mubr.f32.mxu0 0.0
  %214 = vmatmul.mubr.f32.gmra.mrb[0].mxu0 %v41
  %v215 = vpop.f32.mrb[0].mxu0
  %v216 = vadd.f32 %v95, %v215
  %v217 = vpop.f32.mrb[0].mxu0
  %v218 = vadd.f32 %v99, %v217
  %219 = vdwg.mxu0
  %220 = vmatprep.subr.mxu0 0.0
  %221 = vmatpush1.msra.mxu0 %v44
  %222 = vmatprep.subr.mxu0 0.0
  %223 = vmatpush1.msra.mxu0 %v47
  %224 = vmatprep.subr.mxu0 0.0
  %225 = vmatpush1.msra.mxu0 %v50
  %226 = vmatprep.subr.mxu0 0.0
  %227 = vmatpush1.msra.mxu0 %v53
  %228 = vmatprep.subr.mxu0 0.0
  %229 = vmatpush1.msra.mxu0 %v56
  %230 = vmatprep.subr.mxu0 0.0
  %231 = vmatpush1.msra.mxu0 %v59
  %232 = vmatprep.subr.mxu0 0.0
  %233 = vmatpush1.msra.mxu0 %v62
  %234 = vmatprep.subr.mxu0 0.0
  %235 = vmatpush1.msra.mxu0 %v65
  %236 = vmatprep.subr.mxu0 0.0
  %237 = vmatpush1.msra.mxu0 %v68
  %238 = vmatprep.subr.mxu0 0.0
  %239 = vmatpush1.msra.mxu0 %v71
  %240 = vmatprep.subr.mxu0 0.0
  %241 = vmatpush1.msra.mxu0 %v74
  %242 = vmatprep.subr.mxu0 0.0
  %243 = vmatpush1.msra.mxu0 %v77
  %244 = vmatprep.subr.mxu0 0.0
  %245 = vmatpush1.msra.mxu0 %v80
  %246 = vmatprep.subr.mxu0 0.0
  %247 = vmatpush1.msra.mxu0 %v83
  %248 = vmatprep.subr.mxu0 0.0
  %249 = vmatpush1.msra.mxu0 %v86
  %250 = vmatprep.subr.mxu0 0.0
  %251 = vmatpush1.msra.mxu0 %v89
  %252 = vmatprep.subr.mxu0 0.0
  %253 = vmatpush1.msra.mxu0 0.0
  %254 = vmatprep.subr.mxu0 0.0
  %255 = vmatpush1.msra.mxu0 0.0
  %256 = vmatprep.subr.mxu0 0.0
  %257 = vmatpush1.msra.mxu0 0.0
  %258 = vmatprep.subr.mxu0 0.0
  %259 = vmatpush1.msra.mxu0 0.0
  %260 = vmatprep.subr.mxu0 0.0
  %261 = vmatpush1.msra.mxu0 0.0
  %262 = vmatprep.subr.mxu0 0.0
  %263 = vmatpush1.msra.mxu0 0.0
  %264 = vmatprep.subr.mxu0 0.0
  %265 = vmatpush1.msra.mxu0 0.0
  %266 = vmatprep.subr.mxu0 0.0
  %267 = vmatpush1.msra.mxu0 0.0
  %268 = vmatprep.subr.mxu0 0.0
  %269 = vmatpush1.msra.mxu0 0.0
  %270 = vmatprep.subr.mxu0 0.0
  %271 = vmatpush1.msra.mxu0 0.0
  %272 = vmatprep.subr.mxu0 0.0
  %273 = vmatpush1.msra.mxu0 0.0
  %274 = vmatprep.subr.mxu0 0.0
  %275 = vmatpush1.msra.mxu0 0.0
  %276 = vmatprep.subr.mxu0 0.0
  %277 = vmatpush1.msra.mxu0 0.0
  %278 = vmatprep.subr.mxu0 0.0
  %279 = vmatpush1.msra.mxu0 0.0
  %280 = vmatprep.subr.mxu0 0.0
  %281 = vmatpush1.msra.mxu0 0.0
  %282 = vmatprep.subr.mxu0 0.0
  %283 = vmatpush1.msra.mxu0 0.0
  %284 = vmatprep.mubr.f32.mxu0 0.0
  %285 = vmatmul.mubr.f32.gmra.mrb[0].mxu0 %v34
  %v286 = vpop.f32.mrb[0].mxu0
  %v287 = vadd.f32 %v103, %v286
  %v288 = vpop.f32.mrb[0].mxu0
  %289 = vmatprep.mubr.f32.mxu0 0.0
  %290 = vmatmul.mubr.f32.gmra.mrb[0].mxu0 %v35
  %v291 = vpop.f32.mrb[0].mxu0
  %v292 = vadd.f32 %v103, %v291
  %v293 = vpop.f32.mrb[0].mxu0
  %294 = vmatprep.mubr.f32.mxu0 0.0
  %295 = vmatmul.mubr.f32.gmra.mrb[0].mxu0 %v36
  %v296 = vpop.f32.mrb[0].mxu0
  %v297 = vadd.f32 %v103, %v296
  %v298 = vpop.f32.mrb[0].mxu0
  %299 = vmatprep.mubr.f32.mxu0 0.0
  %300 = vmatmul.mubr.f32.gmra.mrb[0].mxu0 %v37
  %v301 = vpop.f32.mrb[0].mxu0
  %v302 = vadd.f32 %v103, %v301
  %v303 = vpop.f32.mrb[0].mxu0
  %304 = vmatprep.mubr.f32.mxu0 0.0
  %305 = vmatmul.mubr.f32.gmra.mrb[0].mxu0 %v38
  %v306 = vpop.f32.mrb[0].mxu0
  %v307 = vadd.f32 %v103, %v306
  %v308 = vpop.f32.mrb[0].mxu0
  %309 = vmatprep.mubr.f32.mxu0 0.0
  %310 = vmatmul.mubr.f32.gmra.mrb[0].mxu0 %v39
  %v311 = vpop.f32.mrb[0].mxu0
  %v312 = vadd.f32 %v103, %v311
  %v313 = vpop.f32.mrb[0].mxu0
  %314 = vmatprep.mubr.f32.mxu0 0.0
  %315 = vmatmul.mubr.f32.gmra.mrb[0].mxu0 %v40
  %v316 = vpop.f32.mrb[0].mxu0
  %v317 = vadd.f32 %v103, %v316
  %v318 = vpop.f32.mrb[0].mxu0
  %319 = vmatprep.mubr.f32.mxu0 0.0
  %320 = vmatmul.mubr.f32.gmra.mrb[0].mxu0 %v41
  %v321 = vpop.f32.mrb[0].mxu0
  %v322 = vadd.f32 %v103, %v321
  %v323 = vpop.f32.mrb[0].mxu0
  %324 = vdwg.mxu0
  %325 = vst [vmem:[#allocation2] sm:$0xff] %v174
  %326 = vst [vmem:[#allocation2 + $0x8] sm:$0xff] %v176
  %327 = vst [vmem:[#allocation2 + $0x10] sm:$0xff] %v287
  %328 = vst [vmem:[#allocation2 + $0x18] sm:$0xff] %v180
  %329 = vst [vmem:[#allocation2 + $0x20] sm:$0xff] %v182
  %330 = vst [vmem:[#allocation2 + $0x28] sm:$0xff] %v292
  %331 = vst [vmem:[#allocation2 + $0x30] sm:$0xff] %v186
  %332 = vst [vmem:[#allocation2 + $0x38] sm:$0xff] %v188
  %333 = vst [vmem:[#allocation2 + $0x40] sm:$0xff] %v297
  %334 = vst [vmem:[#allocation2 + $0x48] sm:$0xff] %v192
  %335 = vst [vmem:[#allocation2 + $0x50] sm:$0xff] %v194
  %336 = vst [vmem:[#allocation2 + $0x58] sm:$0xff] %v302
  %337 = vst [vmem:[#allocation2 + $0x60] sm:$0xff] %v198
  %338 = vst [vmem:[#allocation2 + $0x68] sm:$0xff] %v200
  %339 = vst [vmem:[#allocation2 + $0x70] sm:$0xff] %v307
  %340 = vst [vmem:[#allocation2 + $0x78] sm:$0xff] %v204
  %341 = vst [vmem:[#allocation2 + $0x80] sm:$0xff] %v206
  %342 = vst [vmem:[#allocation2 + $0x88] sm:$0xff] %v312
  %343 = vst [vmem:[#allocation2 + $0x90] sm:$0xff] %v210
  %344 = vst [vmem:[#allocation2 + $0x98] sm:$0xff] %v212
  %345 = vst [vmem:[#allocation2 + $0xa0] sm:$0xff] %v317
  %346 = vst [vmem:[#allocation2 + $0xa8] sm:$0xff] %v216
  %347 = vst [vmem:[#allocation2 + $0xb0] sm:$0xff] %v218
  %348 = vst [vmem:[#allocation2 + $0xb8] sm:$0xff] %v322
  %v349 = vld [vmem:[%s2] sm:$0xff]
  %v350 = vld [vmem:[%s2 + $0x8] sm:$0xff]
  %v351 = vld [vmem:[%s2 + $0x10] sm:$0xff]
  %v352 = vld [vmem:[%s2 + $0x18] sm:$0xff]
  %v353 = vld [vmem:[%s2 + $0x20] sm:$0xff]
  %v354 = vld [vmem:[%s2 + $0x28] sm:$0xff]
  %v355 = vld [vmem:[%s2 + $0x30] sm:$0xff]
  %v356 = vld [vmem:[%s2 + $0x38] sm:$0xff]
  %v357 = vld [vmem:[%s2 + $0x40] sm:$0xff]
  %v358 = vld [vmem:[%s2 + $0x48] sm:$0xff]
  %v359 = vld [vmem:[%s2 + $0x50] sm:$0xff]
  %v360 = vld [vmem:[%s2 + $0x58] sm:$0xff]
  %v361 = vld [vmem:[%s2 + $0x60] sm:$0xff]
  %v362 = vld [vmem:[%s2 + $0x68] sm:$0xff]
  %v363 = vld [vmem:[%s2 + $0x70] sm:$0xff]
  %v364 = vld [vmem:[%s2 + $0x78] sm:$0xff]
  %v365 = vld [vmem:[%s2 + $0x80] sm:$0xff]
  %v366 = vld [vmem:[%s2 + $0x88] sm:$0xff]
  %v367 = vld [vmem:[%s2 + $0x90] sm:$0xff]
  %v368 = vld [vmem:[%s2 + $0x98] sm:$0xff]
  %v369 = vld [vmem:[%s2 + $0xa0] sm:$0xff]
  %v370 = vld [vmem:[%s2 + $0xa8] sm:$0xff]
  %v371 = vld [vmem:[%s2 + $0xb0] sm:$0xff]
  %v372 = vld [vmem:[%s2 + $0xb8] sm:$0xff]
  %v373 = vld [vmem:[%s2 + $0xc0] sm:$0xff]
  %v374 = vld [vmem:[%s2 + $0xc8] sm:$0xff]
  %v375 = vld [vmem:[%s2 + $0xd0] sm:$0xff]
  %v376 = vld [vmem:[%s2 + $0xd8] sm:$0xff]
  %v377 = vld [vmem:[%s2 + $0xe0] sm:$0xff]
  %v378 = vld [vmem:[%s2 + $0xe8] sm:$0xff]
  %v379 = vld [vmem:[%s2 + $0xf0] sm:$0xff]
  %v380 = vld [vmem:[%s2 + $0xf8] sm:$0xff]
  %v381 = vld [vmem:[%s2 + $0x100] sm:$0xff]
  %v382 = vld [vmem:[%s2 + $0x108] sm:$0xff]
  %v383 = vld [vmem:[%s2 + $0x110] sm:$0xff]
  %v384 = vld [vmem:[%s2 + $0x118] sm:$0xff]
  %v385 = vld [vmem:[%s2 + $0x120] sm:$0xff]
  %v386 = vld [vmem:[%s2 + $0x128] sm:$0xff]
  %v387 = vld [vmem:[%s2 + $0x130] sm:$0xff]
  %v388 = vld [vmem:[%s2 + $0x138] sm:$0xff]
  %v389 = vld [vmem:[%s2 + $0x140] sm:$0xff]
  %v390 = vld [vmem:[%s2 + $0x148] sm:$0xff]
  %v391 = vld [vmem:[%s2 + $0x150] sm:$0xff]
  %v392 = vld [vmem:[%s2 + $0x158] sm:$0xff]
  %v393 = vld [vmem:[%s2 + $0x160] sm:$0xff]
  %v394 = vld [vmem:[%s2 + $0x168] sm:$0xff]
  %v395 = vld [vmem:[%s2 + $0x170] sm:$0xff]
  %v396 = vld [vmem:[%s2 + $0x178] sm:$0xff]
  %v397 = vld [vmem:[%s4] sm:$0x7]
  %v399 = vlaneseq
  %v400 = vshrl.u32 %v399, 7
  %v401 = vsub.s32 0, %v400
  %v402 = vrot.slane %v397, %v401
  %v403 = vlaneseq
  %v404 = vshrl.u32 %v403, 7
  %v405 = vsub.s32 1, %v404
  %v406 = vrot.slane %v397, %v405
  %v407 = vlaneseq
  %v408 = vshrl.u32 %v407, 7
  %v409 = vsub.s32 2, %v408
  %v410 = vrot.slane %v397, %v409
  %v414 = vld [vmem:[#allocation4] sm:$0xff]
  %s415 = smul.u32 0, 3
  %s416 = smul.addr %s415, 8
  %s417 = scalar_lea.vmem [#allocation2], %s416
  %v418 = vld [vmem:[%s417] sm:$0xff]
  %v419 = vld [vmem:[%s417 + $0x8] sm:$0xff]
  %v420 = vld [vmem:[%s417 + $0x10] sm:$0xff]
  %421 = vmatprep.subr.mxu0 %v350
  %422 = vmatpush1.msra.mxu0 %v349
  %423 = vmatprep.subr.mxu0 %v353
  %424 = vmatpush1.msra.mxu0 %v352
  %425 = vmatprep.subr.mxu0 %v356
  %426 = vmatpush1.msra.mxu0 %v355
  %427 = vmatprep.subr.mxu0 %v359
  %428 = vmatpush1.msra.mxu0 %v358
  %429 = vmatprep.subr.mxu0 %v362
  %430 = vmatpush1.msra.mxu0 %v361
  %431 = vmatprep.subr.mxu0 %v365
  %432 = vmatpush1.msra.mxu0 %v364
  %433 = vmatprep.subr.mxu0 %v368
  %434 = vmatpush1.msra.mxu0 %v367
  %435 = vmatprep.subr.mxu0 %v371
  %436 = vmatpush1.msra.mxu0 %v370
  %437 = vmatprep.subr.mxu0 %v374
  %438 = vmatpush1.msra.mxu0 %v373
  %439 = vmatprep.subr.mxu0 %v377
  %440 = vmatpush1.msra.mxu0 %v376
  %441 = vmatprep.subr.mxu0 %v380
  %442 = vmatpush1.msra.mxu0 %v379
  %443 = vmatprep.subr.mxu0 %v383
  %444 = vmatpush1.msra.mxu0 %v382
  %445 = vmatprep.subr.mxu0 %v386
  %446 = vmatpush1.msra.mxu0 %v385
  %447 = vmatprep.subr.mxu0 %v389
  %448 = vmatpush1.msra.mxu0 %v388
  %449 = vmatprep.subr.mxu0 %v392
  %450 = vmatpush1.msra.mxu0 %v391
  %451 = vmatprep.subr.mxu0 %v395
  %452 = vmatpush1.msra.mxu0 %v394
  %453 = vmatprep.subr.mxu0 0.0
  %454 = vmatpush1.msra.mxu0 0.0
  %455 = vmatprep.subr.mxu0 0.0
  %456 = vmatpush1.msra.mxu0 0.0
  %457 = vmatprep.subr.mxu0 0.0
  %458 = vmatpush1.msra.mxu0 0.0
  %459 = vmatprep.subr.mxu0 0.0
  %460 = vmatpush1.msra.mxu0 0.0
  %461 = vmatprep.subr.mxu0 0.0
  %462 = vmatpush1.msra.mxu0 0.0
  %463 = vmatprep.subr.mxu0 0.0
  %464 = vmatpush1.msra.mxu0 0.0
  %465 = vmatprep.subr.mxu0 0.0
  %466 = vmatpush1.msra.mxu0 0.0
  %467 = vmatprep.subr.mxu0 0.0
  %468 = vmatpush1.msra.mxu0 0.0
  %469 = vmatprep.subr.mxu0 0.0
  %470 = vmatpush1.msra.mxu0 0.0
  %471 = vmatprep.subr.mxu0 0.0
  %472 = vmatpush1.msra.mxu0 0.0
  %473 = vmatprep.subr.mxu0 0.0
  %474 = vmatpush1.msra.mxu0 0.0
  %475 = vmatprep.subr.mxu0 0.0
  %476 = vmatpush1.msra.mxu0 0.0
  %477 = vmatprep.subr.mxu0 0.0
  %478 = vmatpush1.msra.mxu0 0.0
  %479 = vmatprep.subr.mxu0 0.0
  %480 = vmatpush1.msra.mxu0 0.0
  %481 = vmatprep.subr.mxu0 0.0
  %482 = vmatpush1.msra.mxu0 0.0
  %483 = vmatprep.subr.mxu0 0.0
  %484 = vmatpush1.msra.mxu0 0.0
  %485 = vmatprep.mubr.f32.mxu0 0.0
  %486 = vmatmul.mubr.f32.gmra.mrb[0].mxu0 %v414
  %v487 = vpop.f32.mrb[0].mxu0
  %v488 = vadd.f32 %v402, %v487
  %v489 = vpop.f32.mrb[0].mxu0
  %v490 = vadd.f32 %v406, %v489
  %491 = vdwg.mxu0
  %492 = vmatprep.subr.mxu0 0.0
  %493 = vmatpush1.msra.mxu0 %v351
  %494 = vmatprep.subr.mxu0 0.0
  %495 = vmatpush1.msra.mxu0 %v354
  %496 = vmatprep.subr.mxu0 0.0
  %497 = vmatpush1.msra.mxu0 %v357
  %498 = vmatprep.subr.mxu0 0.0
  %499 = vmatpush1.msra.mxu0 %v360
  %500 = vmatprep.subr.mxu0 0.0
  %501 = vmatpush1.msra.mxu0 %v363
  %502 = vmatprep.subr.mxu0 0.0
  %503 = vmatpush1.msra.mxu0 %v366
  %504 = vmatprep.subr.mxu0 0.0
  %505 = vmatpush1.msra.mxu0 %v369
  %506 = vmatprep.subr.mxu0 0.0
  %507 = vmatpush1.msra.mxu0 %v372
  %508 = vmatprep.subr.mxu0 0.0
  %509 = vmatpush1.msra.mxu0 %v375
  %510 = vmatprep.subr.mxu0 0.0
  %511 = vmatpush1.msra.mxu0 %v378
  %512 = vmatprep.subr.mxu0 0.0
  %513 = vmatpush1.msra.mxu0 %v381
  %514 = vmatprep.subr.mxu0 0.0
  %515 = vmatpush1.msra.mxu0 %v384
  %516 = vmatprep.subr.mxu0 0.0
  %517 = vmatpush1.msra.mxu0 %v387
  %518 = vmatprep.subr.mxu0 0.0
  %519 = vmatpush1.msra.mxu0 %v390
  %520 = vmatprep.subr.mxu0 0.0
  %521 = vmatpush1.msra.mxu0 %v393
  %522 = vmatprep.subr.mxu0 0.0
  %523 = vmatpush1.msra.mxu0 %v396
  %524 = vmatprep.subr.mxu0 0.0
  %525 = vmatpush1.msra.mxu0 0.0
  %526 = vmatprep.subr.mxu0 0.0
  %527 = vmatpush1.msra.mxu0 0.0
  %528 = vmatprep.subr.mxu0 0.0
  %529 = vmatpush1.msra.mxu0 0.0
  %530 = vmatprep.subr.mxu0 0.0
  %531 = vmatpush1.msra.mxu0 0.0
  %532 = vmatprep.subr.mxu0 0.0
  %533 = vmatpush1.msra.mxu0 0.0
  %534 = vmatprep.subr.mxu0 0.0
  %535 = vmatpush1.msra.mxu0 0.0
  %536 = vmatprep.subr.mxu0 0.0
  %537 = vmatpush1.msra.mxu0 0.0
  %538 = vmatprep.subr.mxu0 0.0
  %539 = vmatpush1.msra.mxu0 0.0
  %540 = vmatprep.subr.mxu0 0.0
  %541 = vmatpush1.msra.mxu0 0.0
  %542 = vmatprep.subr.mxu0 0.0
  %543 = vmatpush1.msra.mxu0 0.0
  %544 = vmatprep.subr.mxu0 0.0
  %545 = vmatpush1.msra.mxu0 0.0
  %546 = vmatprep.subr.mxu0 0.0
  %547 = vmatpush1.msra.mxu0 0.0
  %548 = vmatprep.subr.mxu0 0.0
  %549 = vmatpush1.msra.mxu0 0.0
  %550 = vmatprep.subr.mxu0 0.0
  %551 = vmatpush1.msra.mxu0 0.0
  %552 = vmatprep.subr.mxu0 0.0
  %553 = vmatpush1.msra.mxu0 0.0
  %554 = vmatprep.subr.mxu0 0.0
  %555 = vmatpush1.msra.mxu0 0.0
  %556 = vmatprep.mubr.f32.mxu0 0.0
  %557 = vmatmul.mubr.f32.gmra.mrb[0].mxu0 %v414
  %v558 = vpop.f32.mrb[0].mxu0
  %v559 = vadd.f32 %v410, %v558
  %v560 = vpop.f32.mrb[0].mxu0
  %561 = vdwg.mxu0
  %v562 = vadd.f32 %v418, %v488
  %v563 = vxor.u32 %v562, 2147483648
  %v564 = vmul.f32 %v563, 1.442695
  %v565 = vpow.pop %v564
  %v566 = vadd.f32 %v565, 1.0
  %v567 = vrcp.pop %v566
  %v568 = vmul.f32 1.0, %v567
  %v569 = vadd.f32 %v419, %v490
  %v570 = vxor.u32 %v569, 2147483648
  %v571 = vmul.f32 %v570, 1.442695
  %v572 = vpow.pop %v571
  %v573 = vadd.f32 %v572, 1.0
  %v574 = vrcp.pop %v573
  %v575 = vmul.f32 1.0, %v574
  %v576 = vmul.f32 %v568, %v559
  %v577 = vadd.f32 %v420, %v576
  %v578 = vtanh.pop %v577
  %v579 = vsub.f32 1.0, %v575
  %v580 = vmul.f32 %v579, %v578
  %v581 = vmul.f32 %v575, %v414
  %v582 = vadd.f32 %v580, %v581
  %583 = vst [vmem:[#allocation3] sm:$0xff] %v582
  %s584 = smul.u32 1, 3
  %s585 = smul.addr %s584, 8
  %s586 = scalar_lea.vmem [#allocation2], %s585
  %v587 = vld [vmem:[%s586] sm:$0xff]
  %v588 = vld [vmem:[%s586 + $0x8] sm:$0xff]
  %v589 = vld [vmem:[%s586 + $0x10] sm:$0xff]
  %590 = vmatprep.subr.mxu0 %v350
  %591 = vmatpush1.msra.mxu0 %v349
  %592 = vmatprep.subr.mxu0 %v353
  %593 = vmatpush1.msra.mxu0 %v352
  %594 = vmatprep.subr.mxu0 %v356
  %595 = vmatpush1.msra.mxu0 %v355
  %596 = vmatprep.subr.mxu0 %v359
  %597 = vmatpush1.msra.mxu0 %v358
  %598 = vmatprep.subr.mxu0 %v362
  %599 = vmatpush1.msra.mxu0 %v361
  %600 = vmatprep.subr.mxu0 %v365
  %601 = vmatpush1.msra.mxu0 %v364
  %602 = vmatprep.subr.mxu0 %v368
  %603 = vmatpush1.msra.mxu0 %v367
  %604 = vmatprep.subr.mxu0 %v371
  %605 = vmatpush1.msra.mxu0 %v370
  %606 = vmatprep.subr.mxu0 %v374
  %607 = vmatpush1.msra.mxu0 %v373
  %608 = vmatprep.subr.mxu0 %v377
  %609 = vmatpush1.msra.mxu0 %v376
  %610 = vmatprep.subr.mxu0 %v380
  %611 = vmatpush1.msra.mxu0 %v379
  %612 = vmatprep.subr.mxu0 %v383
  %613 = vmatpush1.msra.mxu0 %v382
  %614 = vmatprep.subr.mxu0 %v386
  %615 = vmatpush1.msra.mxu0 %v385
  %616 = vmatprep.subr.mxu0 %v389
  %617 = vmatpush1.msra.mxu0 %v388
  %618 = vmatprep.subr.mxu0 %v392
  %619 = vmatpush1.msra.mxu0 %v391
  %620 = vmatprep.subr.mxu0 %v395
  %621 = vmatpush1.msra.mxu0 %v394
  %622 = vmatprep.subr.mxu0 0.0
  %623 = vmatpush1.msra.mxu0 0.0
  %624 = vmatprep.subr.mxu0 0.0
  %625 = vmatpush1.msra.mxu0 0.0
  %626 = vmatprep.subr.mxu0 0.0
  %627 = vmatpush1.msra.mxu0 0.0
  %628 = vmatprep.subr.mxu0 0.0
  %629 = vmatpush1.msra.mxu0 0.0
  %630 = vmatprep.subr.mxu0 0.0
  %631 = vmatpush1.msra.mxu0 0.0
  %632 = vmatprep.subr.mxu0 0.0
  %633 = vmatpush1.msra.mxu0 0.0
  %634 = vmatprep.subr.mxu0 0.0
  %635 = vmatpush1.msra.mxu0 0.0
  %636 = vmatprep.subr.mxu0 0.0
  %637 = vmatpush1.msra.mxu0 0.0
  %638 = vmatprep.subr.mxu0 0.0
  %639 = vmatpush1.msra.mxu0 0.0
  %640 = vmatprep.subr.mxu0 0.0
  %641 = vmatpush1.msra.mxu0 0.0
  %642 = vmatprep.subr.mxu0 0.0
  %643 = vmatpush1.msra.mxu0 0.0
  %644 = vmatprep.subr.mxu0 0.0
  %645 = vmatpush1.msra.mxu0 0.0
  %646 = vmatprep.subr.mxu0 0.0
  %647 = vmatpush1.msra.mxu0 0.0
  %648 = vmatprep.subr.mxu0 0.0
  %649 = vmatpush1.msra.mxu0 0.0
  %650 = vmatprep.subr.mxu0 0.0
  %651 = vmatpush1.msra.mxu0 0.0
  %652 = vmatprep.subr.mxu0 0.0
  %653 = vmatpush1.msra.mxu0 0.0
  %654 = vmatprep.mubr.f32.mxu0 0.0
  %655 = vmatmul.mubr.f32.gmra.mrb[0].mxu0 %v582
  %v656 = vpop.f32.mrb[0].mxu0
  %v657 = vadd.f32 %v402, %v656
  %v658 = vpop.f32.mrb[0].mxu0
  %v659 = vadd.f32 %v406, %v658
  %660 = vdwg.mxu0
  %661 = vmatprep.subr.mxu0 0.0
  %662 = vmatpush1.msra.mxu0 %v351
  %663 = vmatprep.subr.mxu0 0.0
  %664 = vmatpush1.msra.mxu0 %v354
  %665 = vmatprep.subr.mxu0 0.0
  %666 = vmatpush1.msra.mxu0 %v357
  %667 = vmatprep.subr.mxu0 0.0
  %668 = vmatpush1.msra.mxu0 %v360
  %669 = vmatprep.subr.mxu0 0.0
  %670 = vmatpush1.msra.mxu0 %v363
  %671 = vmatprep.subr.mxu0 0.0
  %672 = vmatpush1.msra.mxu0 %v366
  %673 = vmatprep.subr.mxu0 0.0
  %674 = vmatpush1.msra.mxu0 %v369
  %675 = vmatprep.subr.mxu0 0.0
  %676 = vmatpush1.msra.mxu0 %v372
  %677 = vmatprep.subr.mxu0 0.0
  %678 = vmatpush1.msra.mxu0 %v375
  %679 = vmatprep.subr.mxu0 0.0
  %680 = vmatpush1.msra.mxu0 %v378
  %681 = vmatprep.subr.mxu0 0.0
  %682 = vmatpush1.msra.mxu0 %v381
  %683 = vmatprep.subr.mxu0 0.0
  %684 = vmatpush1.msra.mxu0 %v384
  %685 = vmatprep.subr.mxu0 0.0
  %686 = vmatpush1.msra.mxu0 %v387
  %687 = vmatprep.subr.mxu0 0.0
  %688 = vmatpush1.msra.mxu0 %v390
  %689 = vmatprep.subr.mxu0 0.0
  %690 = vmatpush1.msra.mxu0 %v393
  %691 = vmatprep.subr.mxu0 0.0
  %692 = vmatpush1.msra.mxu0 %v396
  %693 = vmatprep.subr.mxu0 0.0
  %694 = vmatpush1.msra.mxu0 0.0
  %695 = vmatprep.subr.mxu0 0.0
  %696 = vmatpush1.msra.mxu0 0.0
  %697 = vmatprep.subr.mxu0 0.0
  %698 = vmatpush1.msra.mxu0 0.0
  %699 = vmatprep.subr.mxu0 0.0
  %700 = vmatpush1.msra.mxu0 0.0
  %701 = vmatprep.subr.mxu0 0.0
  %702 = vmatpush1.msra.mxu0 0.0
  %703 = vmatprep.subr.mxu0 0.0
  %704 = vmatpush1.msra.mxu0 0.0
  %705 = vmatprep.subr.mxu0 0.0
  %706 = vmatpush1.msra.mxu0 0.0
  %707 = vmatprep.subr.mxu0 0.0
  %708 = vmatpush1.msra.mxu0 0.0
  %709 = vmatprep.subr.mxu0 0.0
  %710 = vmatpush1.msra.mxu0 0.0
  %711 = vmatprep.subr.mxu0 0.0
  %712 = vmatpush1.msra.mxu0 0.0
  %713 = vmatprep.subr.mxu0 0.0
  %714 = vmatpush1.msra.mxu0 0.0
  %715 = vmatprep.subr.mxu0 0.0
  %716 = vmatpush1.msra.mxu0 0.0
  %717 = vmatprep.subr.mxu0 0.0
  %718 = vmatpush1.msra.mxu0 0.0
  %719 = vmatprep.subr.mxu0 0.0
  %720 = vmatpush1.msra.mxu0 0.0
  %721 = vmatprep.subr.mxu0 0.0
  %722 = vmatpush1.msra.mxu0 0.0
  %723 = vmatprep.subr.mxu0 0.0
  %724 = vmatpush1.msra.mxu0 0.0
  %725 = vmatprep.mubr.f32.mxu0 0.0
  %726 = vmatmul.mubr.f32.gmra.mrb[0].mxu0 %v582
  %v727 = vpop.f32.mrb[0].mxu0
  %v728 = vadd.f32 %v410, %v727
  %v729 = vpop.f32.mrb[0].mxu0
  %730 = vdwg.mxu0
  %v731 = vadd.f32 %v587, %v657
  %v732 = vxor.u32 %v731, 2147483648
  %v733 = vmul.f32 %v732, 1.442695
  %v734 = vpow.pop %v733
  %v735 = vadd.f32 %v734, 1.0
  %v736 = vrcp.pop %v735
  %v737 = vmul.f32 1.0, %v736
  %v738 = vadd.f32 %v588, %v659
  %v739 = vxor.u32 %v738, 2147483648
  %v740 = vmul.f32 %v739, 1.442695
  %v741 = vpow.pop %v740
  %v742 = vadd.f32 %v741, 1.0
  %v743 = vrcp.pop %v742
  %v744 = vmul.f32 1.0, %v743
  %v745 = vmul.f32 %v737, %v728
  %v746 = vadd.f32 %v589, %v745
  %v747 = vtanh.pop %v746
  %v748 = vsub.f32 1.0, %v744
  %v749 = vmul.f32 %v748, %v747
  %v750 = vmul.f32 %v744, %v582
  %v751 = vadd.f32 %v749, %v750
  %s752 = scalar_lea.vmem [#allocation3], 8
  %753 = vst [vmem:[%s752] sm:$0xff] %v751
  %s754 = smul.u32 2, 3
  %s755 = smul.addr %s754, 8
  %s756 = scalar_lea.vmem [#allocation2], %s755
  %v757 = vld [vmem:[%s756] sm:$0xff]
  %v758 = vld [vmem:[%s756 + $0x8] sm:$0xff]
  %v759 = vld [vmem:[%s756 + $0x10] sm:$0xff]
  %760 = vmatprep.subr.mxu0 %v350
  %761 = vmatpush1.msra.mxu0 %v349
  %762 = vmatprep.subr.mxu0 %v353
  %763 = vmatpush1.msra.mxu0 %v352
  %764 = vmatprep.subr.mxu0 %v356
  %765 = vmatpush1.msra.mxu0 %v355
  %766 = vmatprep.subr.mxu0 %v359
  %767 = vmatpush1.msra.mxu0 %v358
  %768 = vmatprep.subr.mxu0 %v362
  %769 = vmatpush1.msra.mxu0 %v361
  %770 = vmatprep.subr.mxu0 %v365
  %771 = vmatpush1.msra.mxu0 %v364
  %772 = vmatprep.subr.mxu0 %v368
  %773 = vmatpush1.msra.mxu0 %v367
  %774 = vmatprep.subr.mxu0 %v371
  %775 = vmatpush1.msra.mxu0 %v370
  %776 = vmatprep.subr.mxu0 %v374
  %777 = vmatpush1.msra.mxu0 %v373
  %778 = vmatprep.subr.mxu0 %v377
  %779 = vmatpush1.msra.mxu0 %v376
  %780 = vmatprep.subr.mxu0 %v380
  %781 = vmatpush1.msra.mxu0 %v379
  %782 = vmatprep.subr.mxu0 %v383
  %783 = vmatpush1.msra.mxu0 %v382
  %784 = vmatprep.subr.mxu0 %v386
  %785 = vmatpush1.msra.mxu0 %v385
  %786 = vmatprep.subr.mxu0 %v389
  %787 = vmatpush1.msra.mxu0 %v388
  %788 = vmatprep.subr.mxu0 %v392
  %789 = vmatpush1.msra.mxu0 %v391
  %790 = vmatprep.subr.mxu0 %v395
  %791 = vmatpush1.msra.mxu0 %v394
  %792 = vmatprep.subr.mxu0 0.0
  %793 = vmatpush1.msra.mxu0 0.0
  %794 = vmatprep.subr.mxu0 0.0
  %795 = vmatpush1.msra.mxu0 0.0
  %796 = vmatprep.subr.mxu0 0.0
  %797 = vmatpush1.msra.mxu0 0.0
  %798 = vmatprep.subr.mxu0 0.0
  %799 = vmatpush1.msra.mxu0 0.0
  %800 = vmatprep.subr.mxu0 0.0
  %801 = vmatpush1.msra.mxu0 0.0
  %802 = vmatprep.subr.mxu0 0.0
  %803 = vmatpush1.msra.mxu0 0.0
  %804 = vmatprep.subr.mxu0 0.0
  %805 = vmatpush1.msra.mxu0 0.0
  %806 = vmatprep.subr.mxu0 0.0
  %807 = vmatpush1.msra.mxu0 0.0
  %808 = vmatprep.subr.mxu0 0.0
  %809 = vmatpush1.msra.mxu0 0.0
  %810 = vmatprep.subr.mxu0 0.0
  %811 = vmatpush1.msra.mxu0 0.0
  %812 = vmatprep.subr.mxu0 0.0
  %813 = vmatpush1.msra.mxu0 0.0
  %814 = vmatprep.subr.mxu0 0.0
  %815 = vmatpush1.msra.mxu0 0.0
  %816 = vmatprep.subr.mxu0 0.0
  %817 = vmatpush1.msra.mxu0 0.0
  %818 = vmatprep.subr.mxu0 0.0
  %819 = vmatpush1.msra.mxu0 0.0
  %820 = vmatprep.subr.mxu0 0.0
  %821 = vmatpush1.msra.mxu0 0.0
  %822 = vmatprep.subr.mxu0 0.0
  %823 = vmatpush1.msra.mxu0 0.0
  %824 = vmatprep.mubr.f32.mxu0 0.0
  %825 = vmatmul.mubr.f32.gmra.mrb[0].mxu0 %v751
  %v826 = vpop.f32.mrb[0].mxu0
  %v827 = vadd.f32 %v402, %v826
  %v828 = vpop.f32.mrb[0].mxu0
  %v829 = vadd.f32 %v406, %v828
  %830 = vdwg.mxu0
  %831 = vmatprep.subr.mxu0 0.0
  %832 = vmatpush1.msra.mxu0 %v351
  %833 = vmatprep.subr.mxu0 0.0
  %834 = vmatpush1.msra.mxu0 %v354
  %835 = vmatprep.subr.mxu0 0.0
  %836 = vmatpush1.msra.mxu0 %v357
  %837 = vmatprep.subr.mxu0 0.0
  %838 = vmatpush1.msra.mxu0 %v360
  %839 = vmatprep.subr.mxu0 0.0
  %840 = vmatpush1.msra.mxu0 %v363
  %841 = vmatprep.subr.mxu0 0.0
  %842 = vmatpush1.msra.mxu0 %v366
  %843 = vmatprep.subr.mxu0 0.0
  %844 = vmatpush1.msra.mxu0 %v369
  %845 = vmatprep.subr.mxu0 0.0
  %846 = vmatpush1.msra.mxu0 %v372
  %847 = vmatprep.subr.mxu0 0.0
  %848 = vmatpush1.msra.mxu0 %v375
  %849 = vmatprep.subr.mxu0 0.0
  %850 = vmatpush1.msra.mxu0 %v378
  %851 = vmatprep.subr.mxu0 0.0
  %852 = vmatpush1.msra.mxu0 %v381
  %853 = vmatprep.subr.mxu0 0.0
  %854 = vmatpush1.msra.mxu0 %v384
  %855 = vmatprep.subr.mxu0 0.0
  %856 = vmatpush1.msra.mxu0 %v387
  %857 = vmatprep.subr.mxu0 0.0
  %858 = vmatpush1.msra.mxu0 %v390
  %859 = vmatprep.subr.mxu0 0.0
  %860 = vmatpush1.msra.mxu0 %v393
  %861 = vmatprep.subr.mxu0 0.0
  %862 = vmatpush1.msra.mxu0 %v396
  %863 = vmatprep.subr.mxu0 0.0
  %864 = vmatpush1.msra.mxu0 0.0
  %865 = vmatprep.subr.mxu0 0.0
  %866 = vmatpush1.msra.mxu0 0.0
  %867 = vmatprep.subr.mxu0 0.0
  %868 = vmatpush1.msra.mxu0 0.0
  %869 = vmatprep.subr.mxu0 0.0
  %870 = vmatpush1.msra.mxu0 0.0
  %871 = vmatprep.subr.mxu0 0.0
  %872 = vmatpush1.msra.mxu0 0.0
  %873 = vmatprep.subr.mxu0 0.0
  %874 = vmatpush1.msra.mxu0 0.0
  %875 = vmatprep.subr.mxu0 0.0
  %876 = vmatpush1.msra.mxu0 0.0
  %877 = vmatprep.subr.mxu0 0.0
  %878 = vmatpush1.msra.mxu0 0.0
  %879 = vmatprep.subr.mxu0 0.0
  %880 = vmatpush1.msra.mxu0 0.0
  %881 = vmatprep.subr.mxu0 0.0
  %882 = vmatpush1.msra.mxu0 0.0
  %883 = vmatprep.subr.mxu0 0.0
  %884 = vmatpush1.msra.mxu0 0.0
  %885 = vmatprep.subr.mxu0 0.0
  %886 = vmatpush1.msra.mxu0 0.0
  %887 = vmatprep.subr.mxu0 0.0
  %888 = vmatpush1.msra.mxu0 0.0
  %889 = vmatprep.subr.mxu0 0.0
  %890 = vmatpush1.msra.mxu0 0.0
  %891 = vmatprep.subr.mxu0 0.0
  %892 = vmatpush1.msra.mxu0 0.0
  %893 = vmatprep.subr.mxu0 0.0
  %894 = vmatpush1.msra.mxu0 0.0
  %895 = vmatprep.mubr.f32.mxu0 0.0
  %896 = vmatmul.mubr.f32.gmra.mrb[0].mxu0 %v751
  %v897 = vpop.f32.mrb[0].mxu0
  %v898 = vadd.f32 %v410, %v897
  %v899 = vpop.f32.mrb[0].mxu0
  %900 = vdwg.mxu0
  %v901 = vadd.f32 %v757, %v827
  %v902 = vxor.u32 %v901, 2147483648
  %v903 = vmul.f32 %v902, 1.442695
  %v904 = vpow.pop %v903
  %v905 = vadd.f32 %v904, 1.0
  %v906 = vrcp.pop %v905
  %v907 = vmul.f32 1.0, %v906
  %v908 = vadd.f32 %v758, %v829
  %v909 = vxor.u32 %v908, 2147483648
  %v910 = vmul.f32 %v909, 1.442695
  %v911 = vpow.pop %v910
  %v912 = vadd.f32 %v911, 1.0
  %v913 = vrcp.pop %v912
  %v914 = vmul.f32 1.0, %v913
  %v915 = vmul.f32 %v907, %v898
  %v916 = vadd.f32 %v759, %v915
  %v917 = vtanh.pop %v916
  %v918 = vsub.f32 1.0, %v914
  %v919 = vmul.f32 %v918, %v917
  %v920 = vmul.f32 %v914, %v751
  %v921 = vadd.f32 %v919, %v920
  %s922 = scalar_lea.vmem [#allocation3], 16
  %923 = vst [vmem:[%s922] sm:$0xff] %v921
  %s924 = smul.u32 3, 3
  %s925 = smul.addr %s924, 8
  %s926 = scalar_lea.vmem [#allocation2], %s925
  %v927 = vld [vmem:[%s926] sm:$0xff]
  %v928 = vld [vmem:[%s926 + $0x8] sm:$0xff]
  %v929 = vld [vmem:[%s926 + $0x10] sm:$0xff]
  %930 = vmatprep.subr.mxu0 %v350
  %931 = vmatpush1.msra.mxu0 %v349
  %932 = vmatprep.subr.mxu0 %v353
  %933 = vmatpush1.msra.mxu0 %v352
  %934 = vmatprep.subr.mxu0 %v356
  %935 = vmatpush1.msra.mxu0 %v355
  %936 = vmatprep.subr.mxu0 %v359
  %937 = vmatpush1.msra.mxu0 %v358
  %938 = vmatprep.subr.mxu0 %v362
  %939 = vmatpush1.msra.mxu0 %v361
  %940 = vmatprep.subr.mxu0 %v365
  %941 = vmatpush1.msra.mxu0 %v364
  %942 = vmatprep.subr.mxu0 %v368
  %943 = vmatpush1.msra.mxu0 %v367
  %944 = vmatprep.subr.mxu0 %v371
  %945 = vmatpush1.msra.mxu0 %v370
  %946 = vmatprep.subr.mxu0 %v374
  %947 = vmatpush1.msra.mxu0 %v373
  %948 = vmatprep.subr.mxu0 %v377
  %949 = vmatpush1.msra.mxu0 %v376
  %950 = vmatprep.subr.mxu0 %v380
  %951 = vmatpush1.msra.mxu0 %v379
  %952 = vmatprep.subr.mxu0 %v383
  %953 = vmatpush1.msra.mxu0 %v382
  %954 = vmatprep.subr.mxu0 %v386
  %955 = vmatpush1.msra.mxu0 %v385
  %956 = vmatprep.subr.mxu0 %v389
  %957 = vmatpush1.msra.mxu0 %v388
  %958 = vmatprep.subr.mxu0 %v392
  %959 = vmatpush1.msra.mxu0 %v391
  %960 = vmatprep.subr.mxu0 %v395
  %961 = vmatpush1.msra.mxu0 %v394
  %962 = vmatprep.subr.mxu0 0.0
  %963 = vmatpush1.msra.mxu0 0.0
  %964 = vmatprep.subr.mxu0 0.0
  %965 = vmatpush1.msra.mxu0 0.0
  %966 = vmatprep.subr.mxu0 0.0
  %967 = vmatpush1.msra.mxu0 0.0
  %968 = vmatprep.subr.mxu0 0.0
  %969 = vmatpush1.msra.mxu0 0.0
  %970 = vmatprep.subr.mxu0 0.0
  %971 = vmatpush1.msra.mxu0 0.0
  %972 = vmatprep.subr.mxu0 0.0
  %973 = vmatpush1.msra.mxu0 0.0
  %974 = vmatprep.subr.mxu0 0.0
  %975 = vmatpush1.msra.mxu0 0.0
  %976 = vmatprep.subr.mxu0 0.0
  %977 = vmatpush1.msra.mxu0 0.0
  %978 = vmatprep.subr.mxu0 0.0
  %979 = vmatpush1.msra.mxu0 0.0
  %980 = vmatprep.subr.mxu0 0.0
  %981 = vmatpush1.msra.mxu0 0.0
  %982 = vmatprep.subr.mxu0 0.0
  %983 = vmatpush1.msra.mxu0 0.0
  %984 = vmatprep.subr.mxu0 0.0
  %985 = vmatpush1.msra.mxu0 0.0
  %986 = vmatprep.subr.mxu0 0.0
  %987 = vmatpush1.msra.mxu0 0.0
  %988 = vmatprep.subr.mxu0 0.0
  %989 = vmatpush1.msra.mxu0 0.0
  %990 = vmatprep.subr.mxu0 0.0
  %991 = vmatpush1.msra.mxu0 0.0
  %992 = vmatprep.subr.mxu0 0.0
  %993 = vmatpush1.msra.mxu0 0.0
  %994 = vmatprep.mubr.f32.mxu0 0.0
  %995 = vmatmul.mubr.f32.gmra.mrb[0].mxu0 %v921
  %v996 = vpop.f32.mrb[0].mxu0
  %v997 = vadd.f32 %v402, %v996
  %v998 = vpop.f32.mrb[0].mxu0
  %v999 = vadd.f32 %v406, %v998
  %1000 = vdwg.mxu0
  %1001 = vmatprep.subr.mxu0 0.0
  %1002 = vmatpush1.msra.mxu0 %v351
  %1003 = vmatprep.subr.mxu0 0.0
  %1004 = vmatpush1.msra.mxu0 %v354
  %1005 = vmatprep.subr.mxu0 0.0
  %1006 = vmatpush1.msra.mxu0 %v357
  %1007 = vmatprep.subr.mxu0 0.0
  %1008 = vmatpush1.msra.mxu0 %v360
  %1009 = vmatprep.subr.mxu0 0.0
  %1010 = vmatpush1.msra.mxu0 %v363
  %1011 = vmatprep.subr.mxu0 0.0
  %1012 = vmatpush1.msra.mxu0 %v366
  %1013 = vmatprep.subr.mxu0 0.0
  %1014 = vmatpush1.msra.mxu0 %v369
  %1015 = vmatprep.subr.mxu0 0.0
  %1016 = vmatpush1.msra.mxu0 %v372
  %1017 = vmatprep.subr.mxu0 0.0
  %1018 = vmatpush1.msra.mxu0 %v375
  %1019 = vmatprep.subr.mxu0 0.0
  %1020 = vmatpush1.msra.mxu0 %v378
  %1021 = vmatprep.subr.mxu0 0.0
  %1022 = vmatpush1.msra.mxu0 %v381
  %1023 = vmatprep.subr.mxu0 0.0
  %1024 = vmatpush1.msra.mxu0 %v384
  %1025 = vmatprep.subr.mxu0 0.0
  %1026 = vmatpush1.msra.mxu0 %v387
  %1027 = vmatprep.subr.mxu0 0.0
  %1028 = vmatpush1.msra.mxu0 %v390
  %1029 = vmatprep.subr.mxu0 0.0
  %1030 = vmatpush1.msra.mxu0 %v393
  %1031 = vmatprep.subr.mxu0 0.0
  %1032 = vmatpush1.msra.mxu0 %v396
  %1033 = vmatprep.subr.mxu0 0.0
  %1034 = vmatpush1.msra.mxu0 0.0
  %1035 = vmatprep.subr.mxu0 0.0
  %1036 = vmatpush1.msra.mxu0 0.0
  %1037 = vmatprep.subr.mxu0 0.0
  %1038 = vmatpush1.msra.mxu0 0.0
  %1039 = vmatprep.subr.mxu0 0.0
  %1040 = vmatpush1.msra.mxu0 0.0
  %1041 = vmatprep.subr.mxu0 0.0
  %1042 = vmatpush1.msra.mxu0 0.0
  %1043 = vmatprep.subr.mxu0 0.0
  %1044 = vmatpush1.msra.mxu0 0.0
  %1045 = vmatprep.subr.mxu0 0.0
  %1046 = vmatpush1.msra.mxu0 0.0
  %1047 = vmatprep.subr.mxu0 0.0
  %1048 = vmatpush1.msra.mxu0 0.0
  %1049 = vmatprep.subr.mxu0 0.0
  %1050 = vmatpush1.msra.mxu0 0.0
  %1051 = vmatprep.subr.mxu0 0.0
  %1052 = vmatpush1.msra.mxu0 0.0
  %1053 = vmatprep.subr.mxu0 0.0
  %1054 = vmatpush1.msra.mxu0 0.0
  %1055 = vmatprep.subr.mxu0 0.0
  %1056 = vmatpush1.msra.mxu0 0.0
  %1057 = vmatprep.subr.mxu0 0.0
  %1058 = vmatpush1.msra.mxu0 0.0
  %1059 = vmatprep.subr.mxu0 0.0
  %1060 = vmatpush1.msra.mxu0 0.0
  %1061 = vmatprep.subr.mxu0 0.0
  %1062 = vmatpush1.msra.mxu0 0.0
  %1063 = vmatprep.subr.mxu0 0.0
  %1064 = vmatpush1.msra.mxu0 0.0
  %1065 = vmatprep.mubr.f32.mxu0 0.0
  %1066 = vmatmul.mubr.f32.gmra.mrb[0].mxu0 %v921
  %v1067 = vpop.f32.mrb[0].mxu0
  %v1068 = vadd.f32 %v410, %v1067
  %v1069 = vpop.f32.mrb[0].mxu0
  %1070 = vdwg.mxu0
  %v1071 = vadd.f32 %v927, %v997
  %v1072 = vxor.u32 %v1071, 2147483648
  %v1073 = vmul.f32 %v1072, 1.442695
  %v1074 = vpow.pop %v1073
  %v1075 = vadd.f32 %v1074, 1.0
  %v1076 = vrcp.pop %v1075
  %v1077 = vmul.f32 1.0, %v1076
  %v1078 = vadd.f32 %v928, %v999
  %v1079 = vxor.u32 %v1078, 2147483648
  %v1080 = vmul.f32 %v1079, 1.442695
  %v1081 = vpow.pop %v1080
  %v1082 = vadd.f32 %v1081, 1.0
  %v1083 = vrcp.pop %v1082
  %v1084 = vmul.f32 1.0, %v1083
  %v1085 = vmul.f32 %v1077, %v1068
  %v1086 = vadd.f32 %v929, %v1085
  %v1087 = vtanh.pop %v1086
  %v1088 = vsub.f32 1.0, %v1084
  %v1089 = vmul.f32 %v1088, %v1087
  %v1090 = vmul.f32 %v1084, %v921
  %v1091 = vadd.f32 %v1089, %v1090
  %s1092 = scalar_lea.vmem [#allocation3], 24
  %1093 = vst [vmem:[%s1092] sm:$0xff] %v1091
  %s1094 = smul.u32 4, 3
  %s1095 = smul.addr %s1094, 8
  %s1096 = scalar_lea.vmem [#allocation2], %s1095
  %v1097 = vld [vmem:[%s1096] sm:$0xff]
  %v1098 = vld [vmem:[%s1096 + $0x8] sm:$0xff]
  %v1099 = vld [vmem:[%s1096 + $0x10] sm:$0xff]
  %1100 = vmatprep.subr.mxu0 %v350
  %1101 = vmatpush1.msra.mxu0 %v349
  %1102 = vmatprep.subr.mxu0 %v353
  %1103 = vmatpush1.msra.mxu0 %v352
  %1104 = vmatprep.subr.mxu0 %v356
  %1105 = vmatpush1.msra.mxu0 %v355
  %1106 = vmatprep.subr.mxu0 %v359
  %1107 = vmatpush1.msra.mxu0 %v358
  %1108 = vmatprep.subr.mxu0 %v362
  %1109 = vmatpush1.msra.mxu0 %v361
  %1110 = vmatprep.subr.mxu0 %v365
  %1111 = vmatpush1.msra.mxu0 %v364
  %1112 = vmatprep.subr.mxu0 %v368
  %1113 = vmatpush1.msra.mxu0 %v367
  %1114 = vmatprep.subr.mxu0 %v371
  %1115 = vmatpush1.msra.mxu0 %v370
  %1116 = vmatprep.subr.mxu0 %v374
  %1117 = vmatpush1.msra.mxu0 %v373
  %1118 = vmatprep.subr.mxu0 %v377
  %1119 = vmatpush1.msra.mxu0 %v376
  %1120 = vmatprep.subr.mxu0 %v380
  %1121 = vmatpush1.msra.mxu0 %v379
  %1122 = vmatprep.subr.mxu0 %v383
  %1123 = vmatpush1.msra.mxu0 %v382
  %1124 = vmatprep.subr.mxu0 %v386
  %1125 = vmatpush1.msra.mxu0 %v385
  %1126 = vmatprep.subr.mxu0 %v389
  %1127 = vmatpush1.msra.mxu0 %v388
  %1128 = vmatprep.subr.mxu0 %v392
  %1129 = vmatpush1.msra.mxu0 %v391
  %1130 = vmatprep.subr.mxu0 %v395
  %1131 = vmatpush1.msra.mxu0 %v394
  %1132 = vmatprep.subr.mxu0 0.0
  %1133 = vmatpush1.msra.mxu0 0.0
  %1134 = vmatprep.subr.mxu0 0.0
  %1135 = vmatpush1.msra.mxu0 0.0
  %1136 = vmatprep.subr.mxu0 0.0
  %1137 = vmatpush1.msra.mxu0 0.0
  %1138 = vmatprep.subr.mxu0 0.0
  %1139 = vmatpush1.msra.mxu0 0.0
  %1140 = vmatprep.subr.mxu0 0.0
  %1141 = vmatpush1.msra.mxu0 0.0
  %1142 = vmatprep.subr.mxu0 0.0
  %1143 = vmatpush1.msra.mxu0 0.0
  %1144 = vmatprep.subr.mxu0 0.0
  %1145 = vmatpush1.msra.mxu0 0.0
  %1146 = vmatprep.subr.mxu0 0.0
  %1147 = vmatpush1.msra.mxu0 0.0
  %1148 = vmatprep.subr.mxu0 0.0
  %1149 = vmatpush1.msra.mxu0 0.0
  %1150 = vmatprep.subr.mxu0 0.0
  %1151 = vmatpush1.msra.mxu0 0.0
  %1152 = vmatprep.subr.mxu0 0.0
  %1153 = vmatpush1.msra.mxu0 0.0
  %1154 = vmatprep.subr.mxu0 0.0
  %1155 = vmatpush1.msra.mxu0 0.0
  %1156 = vmatprep.subr.mxu0 0.0
  %1157 = vmatpush1.msra.mxu0 0.0
  %1158 = vmatprep.subr.mxu0 0.0
  %1159 = vmatpush1.msra.mxu0 0.0
  %1160 = vmatprep.subr.mxu0 0.0
  %1161 = vmatpush1.msra.mxu0 0.0
  %1162 = vmatprep.subr.mxu0 0.0
  %1163 = vmatpush1.msra.mxu0 0.0
  %1164 = vmatprep.mubr.f32.mxu0 0.0
  %1165 = vmatmul.mubr.f32.gmra.mrb[0].mxu0 %v1091
  %v1166 = vpop.f32.mrb[0].mxu0
  %v1167 = vadd.f32 %v402, %v1166
  %v1168 = vpop.f32.mrb[0].mxu0
  %v1169 = vadd.f32 %v406, %v1168
  %1170 = vdwg.mxu0
  %1171 = vmatprep.subr.mxu0 0.0
  %1172 = vmatpush1.msra.mxu0 %v351
  %1173 = vmatprep.subr.mxu0 0.0
  %1174 = vmatpush1.msra.mxu0 %v354
  %1175 = vmatprep.subr.mxu0 0.0
  %1176 = vmatpush1.msra.mxu0 %v357
  %1177 = vmatprep.subr.mxu0 0.0
  %1178 = vmatpush1.msra.mxu0 %v360
  %1179 = vmatprep.subr.mxu0 0.0
  %1180 = vmatpush1.msra.mxu0 %v363
  %1181 = vmatprep.subr.mxu0 0.0
  %1182 = vmatpush1.msra.mxu0 %v366
  %1183 = vmatprep.subr.mxu0 0.0
  %1184 = vmatpush1.msra.mxu0 %v369
  %1185 = vmatprep.subr.mxu0 0.0
  %1186 = vmatpush1.msra.mxu0 %v372
  %1187 = vmatprep.subr.mxu0 0.0
  %1188 = vmatpush1.msra.mxu0 %v375
  %1189 = vmatprep.subr.mxu0 0.0
  %1190 = vmatpush1.msra.mxu0 %v378
  %1191 = vmatprep.subr.mxu0 0.0
  %1192 = vmatpush1.msra.mxu0 %v381
  %1193 = vmatprep.subr.mxu0 0.0
  %1194 = vmatpush1.msra.mxu0 %v384
  %1195 = vmatprep.subr.mxu0 0.0
  %1196 = vmatpush1.msra.mxu0 %v387
  %1197 = vmatprep.subr.mxu0 0.0
  %1198 = vmatpush1.msra.mxu0 %v390
  %1199 = vmatprep.subr.mxu0 0.0
  %1200 = vmatpush1.msra.mxu0 %v393
  %1201 = vmatprep.subr.mxu0 0.0
  %1202 = vmatpush1.msra.mxu0 %v396
  %1203 = vmatprep.subr.mxu0 0.0
  %1204 = vmatpush1.msra.mxu0 0.0
  %1205 = vmatprep.subr.mxu0 0.0
  %1206 = vmatpush1.msra.mxu0 0.0
  %1207 = vmatprep.subr.mxu0 0.0
  %1208 = vmatpush1.msra.mxu0 0.0
  %1209 = vmatprep.subr.mxu0 0.0
  %1210 = vmatpush1.msra.mxu0 0.0
  %1211 = vmatprep.subr.mxu0 0.0
  %1212 = vmatpush1.msra.mxu0 0.0
  %1213 = vmatprep.subr.mxu0 0.0
  %1214 = vmatpush1.msra.mxu0 0.0
  %1215 = vmatprep.subr.mxu0 0.0
  %1216 = vmatpush1.msra.mxu0 0.0
  %1217 = vmatprep.subr.mxu0 0.0
  %1218 = vmatpush1.msra.mxu0 0.0
  %1219 = vmatprep.subr.mxu0 0.0
  %1220 = vmatpush1.msra.mxu0 0.0
  %1221 = vmatprep.subr.mxu0 0.0
  %1222 = vmatpush1.msra.mxu0 0.0
  %1223 = vmatprep.subr.mxu0 0.0
  %1224 = vmatpush1.msra.mxu0 0.0
  %1225 = vmatprep.subr.mxu0 0.0
  %1226 = vmatpush1.msra.mxu0 0.0
  %1227 = vmatprep.subr.mxu0 0.0
  %1228 = vmatpush1.msra.mxu0 0.0
  %1229 = vmatprep.subr.mxu0 0.0
  %1230 = vmatpush1.msra.mxu0 0.0
  %1231 = vmatprep.subr.mxu0 0.0
  %1232 = vmatpush1.msra.mxu0 0.0
  %1233 = vmatprep.subr.mxu0 0.0
  %1234 = vmatpush1.msra.mxu0 0.0
  %1235 = vmatprep.mubr.f32.mxu0 0.0
  %1236 = vmatmul.mubr.f32.gmra.mrb[0].mxu0 %v1091
  %v1237 = vpop.f32.mrb[0].mxu0
  %v1238 = vadd.f32 %v410, %v1237
  %v1239 = vpop.f32.mrb[0].mxu0
  %1240 = vdwg.mxu0
  %v1241 = vadd.f32 %v1097, %v1167
  %v1242 = vxor.u32 %v1241, 2147483648
  %v1243 = vmul.f32 %v1242, 1.442695
  %v1244 = vpow.pop %v1243
  %v1245 = vadd.f32 %v1244, 1.0
  %v1246 = vrcp.pop %v1245
  %v1247 = vmul.f32 1.0, %v1246
  %v1248 = vadd.f32 %v1098, %v1169
  %v1249 = vxor.u32 %v1248, 2147483648
  %v1250 = vmul.f32 %v1249, 1.442695
  %v1251 = vpow.pop %v1250
  %v1252 = vadd.f32 %v1251, 1.0
  %v1253 = vrcp.pop %v1252
  %v1254 = vmul.f32 1.0, %v1253
  %v1255 = vmul.f32 %v1247, %v1238
  %v1256 = vadd.f32 %v1099, %v1255
  %v1257 = vtanh.pop %v1256
  %v1258 = vsub.f32 1.0, %v1254
  %v1259 = vmul.f32 %v1258, %v1257
  %v1260 = vmul.f32 %v1254, %v1091
  %v1261 = vadd.f32 %v1259, %v1260
  %s1262 = scalar_lea.vmem [#allocation3], 32
  %1263 = vst [vmem:[%s1262] sm:$0xff] %v1261
  %s1264 = smul.u32 5, 3
  %s1265 = smul.addr %s1264, 8
  %s1266 = scalar_lea.vmem [#allocation2], %s1265
  %v1267 = vld [vmem:[%s1266] sm:$0xff]
  %v1268 = vld [vmem:[%s1266 + $0x8] sm:$0xff]
  %v1269 = vld [vmem:[%s1266 + $0x10] sm:$0xff]
  %1270 = vmatprep.subr.mxu0 %v350
  %1271 = vmatpush1.msra.mxu0 %v349
  %1272 = vmatprep.subr.mxu0 %v353
  %1273 = vmatpush1.msra.mxu0 %v352
  %1274 = vmatprep.subr.mxu0 %v356
  %1275 = vmatpush1.msra.mxu0 %v355
  %1276 = vmatprep.subr.mxu0 %v359
  %1277 = vmatpush1.msra.mxu0 %v358
  %1278 = vmatprep.subr.mxu0 %v362
  %1279 = vmatpush1.msra.mxu0 %v361
  %1280 = vmatprep.subr.mxu0 %v365
  %1281 = vmatpush1.msra.mxu0 %v364
  %1282 = vmatprep.subr.mxu0 %v368
  %1283 = vmatpush1.msra.mxu0 %v367
  %1284 = vmatprep.subr.mxu0 %v371
  %1285 = vmatpush1.msra.mxu0 %v370
  %1286 = vmatprep.subr.mxu0 %v374
  %1287 = vmatpush1.msra.mxu0 %v373
  %1288 = vmatprep.subr.mxu0 %v377
  %1289 = vmatpush1.msra.mxu0 %v376
  %1290 = vmatprep.subr.mxu0 %v380
  %1291 = vmatpush1.msra.mxu0 %v379
  %1292 = vmatprep.subr.mxu0 %v383
  %1293 = vmatpush1.msra.mxu0 %v382
  %1294 = vmatprep.subr.mxu0 %v386
  %1295 = vmatpush1.msra.mxu0 %v385
  %1296 = vmatprep.subr.mxu0 %v389
  %1297 = vmatpush1.msra.mxu0 %v388
  %1298 = vmatprep.subr.mxu0 %v392
  %1299 = vmatpush1.msra.mxu0 %v391
  %1300 = vmatprep.subr.mxu0 %v395
  %1301 = vmatpush1.msra.mxu0 %v394
  %1302 = vmatprep.subr.mxu0 0.0
  %1303 = vmatpush1.msra.mxu0 0.0
  %1304 = vmatprep.subr.mxu0 0.0
  %1305 = vmatpush1.msra.mxu0 0.0
  %1306 = vmatprep.subr.mxu0 0.0
  %1307 = vmatpush1.msra.mxu0 0.0
  %1308 = vmatprep.subr.mxu0 0.0
  %1309 = vmatpush1.msra.mxu0 0.0
  %1310 = vmatprep.subr.mxu0 0.0
  %1311 = vmatpush1.msra.mxu0 0.0
  %1312 = vmatprep.subr.mxu0 0.0
  %1313 = vmatpush1.msra.mxu0 0.0
  %1314 = vmatprep.subr.mxu0 0.0
  %1315 = vmatpush1.msra.mxu0 0.0
  %1316 = vmatprep.subr.mxu0 0.0
  %1317 = vmatpush1.msra.mxu0 0.0
  %1318 = vmatprep.subr.mxu0 0.0
  %1319 = vmatpush1.msra.mxu0 0.0
  %1320 = vmatprep.subr.mxu0 0.0
  %1321 = vmatpush1.msra.mxu0 0.0
  %1322 = vmatprep.subr.mxu0 0.0
  %1323 = vmatpush1.msra.mxu0 0.0
  %1324 = vmatprep.subr.mxu0 0.0
  %1325 = vmatpush1.msra.mxu0 0.0
  %1326 = vmatprep.subr.mxu0 0.0
  %1327 = vmatpush1.msra.mxu0 0.0
  %1328 = vmatprep.subr.mxu0 0.0
  %1329 = vmatpush1.msra.mxu0 0.0
  %1330 = vmatprep.subr.mxu0 0.0
  %1331 = vmatpush1.msra.mxu0 0.0
  %1332 = vmatprep.subr.mxu0 0.0
  %1333 = vmatpush1.msra.mxu0 0.0
  %1334 = vmatprep.mubr.f32.mxu0 0.0
  %1335 = vmatmul.mubr.f32.gmra.mrb[0].mxu0 %v1261
  %v1336 = vpop.f32.mrb[0].mxu0
  %v1337 = vadd.f32 %v402, %v1336
  %v1338 = vpop.f32.mrb[0].mxu0
  %v1339 = vadd.f32 %v406, %v1338
  %1340 = vdwg.mxu0
  %1341 = vmatprep.subr.mxu0 0.0
  %1342 = vmatpush1.msra.mxu0 %v351
  %1343 = vmatprep.subr.mxu0 0.0
  %1344 = vmatpush1.msra.mxu0 %v354
  %1345 = vmatprep.subr.mxu0 0.0
  %1346 = vmatpush1.msra.mxu0 %v357
  %1347 = vmatprep.subr.mxu0 0.0
  %1348 = vmatpush1.msra.mxu0 %v360
  %1349 = vmatprep.subr.mxu0 0.0
  %1350 = vmatpush1.msra.mxu0 %v363
  %1351 = vmatprep.subr.mxu0 0.0
  %1352 = vmatpush1.msra.mxu0 %v366
  %1353 = vmatprep.subr.mxu0 0.0
  %1354 = vmatpush1.msra.mxu0 %v369
  %1355 = vmatprep.subr.mxu0 0.0
  %1356 = vmatpush1.msra.mxu0 %v372
  %1357 = vmatprep.subr.mxu0 0.0
  %1358 = vmatpush1.msra.mxu0 %v375
  %1359 = vmatprep.subr.mxu0 0.0
  %1360 = vmatpush1.msra.mxu0 %v378
  %1361 = vmatprep.subr.mxu0 0.0
  %1362 = vmatpush1.msra.mxu0 %v381
  %1363 = vmatprep.subr.mxu0 0.0
  %1364 = vmatpush1.msra.mxu0 %v384
  %1365 = vmatprep.subr.mxu0 0.0
  %1366 = vmatpush1.msra.mxu0 %v387
  %1367 = vmatprep.subr.mxu0 0.0
  %1368 = vmatpush1.msra.mxu0 %v390
  %1369 = vmatprep.subr.mxu0 0.0
  %1370 = vmatpush1.msra.mxu0 %v393
  %1371 = vmatprep.subr.mxu0 0.0
  %1372 = vmatpush1.msra.mxu0 %v396
  %1373 = vmatprep.subr.mxu0 0.0
  %1374 = vmatpush1.msra.mxu0 0.0
  %1375 = vmatprep.subr.mxu0 0.0
  %1376 = vmatpush1.msra.mxu0 0.0
  %1377 = vmatprep.subr.mxu0 0.0
  %1378 = vmatpush1.msra.mxu0 0.0
  %1379 = vmatprep.subr.mxu0 0.0
  %1380 = vmatpush1.msra.mxu0 0.0
  %1381 = vmatprep.subr.mxu0 0.0
  %1382 = vmatpush1.msra.mxu0 0.0
  %1383 = vmatprep.subr.mxu0 0.0
  %1384 = vmatpush1.msra.mxu0 0.0
  %1385 = vmatprep.subr.mxu0 0.0
  %1386 = vmatpush1.msra.mxu0 0.0
  %1387 = vmatprep.subr.mxu0 0.0
  %1388 = vmatpush1.msra.mxu0 0.0
  %1389 = vmatprep.subr.mxu0 0.0
  %1390 = vmatpush1.msra.mxu0 0.0
  %1391 = vmatprep.subr.mxu0 0.0
  %1392 = vmatpush1.msra.mxu0 0.0
  %1393 = vmatprep.subr.mxu0 0.0
  %1394 = vmatpush1.msra.mxu0 0.0
  %1395 = vmatprep.subr.mxu0 0.0
  %1396 = vmatpush1.msra.mxu0 0.0
  %1397 = vmatprep.subr.mxu0 0.0
  %1398 = vmatpush1.msra.mxu0 0.0
  %1399 = vmatprep.subr.mxu0 0.0
  %1400 = vmatpush1.msra.mxu0 0.0
  %1401 = vmatprep.subr.mxu0 0.0
  %1402 = vmatpush1.msra.mxu0 0.0
  %1403 = vmatprep.subr.mxu0 0.0
  %1404 = vmatpush1.msra.mxu0 0.0
  %1405 = vmatprep.mubr.f32.mxu0 0.0
  %1406 = vmatmul.mubr.f32.gmra.mrb[0].mxu0 %v1261
  %v1407 = vpop.f32.mrb[0].mxu0
  %v1408 = vadd.f32 %v410, %v1407
  %v1409 = vpop.f32.mrb[0].mxu0
  %1410 = vdwg.mxu0
  %v1411 = vadd.f32 %v1267, %v1337
  %v1412 = vxor.u32 %v1411, 2147483648
  %v1413 = vmul.f32 %v1412, 1.442695
  %v1414 = vpow.pop %v1413
  %v1415 = vadd.f32 %v1414, 1.0
  %v1416 = vrcp.pop %v1415
  %v1417 = vmul.f32 1.0, %v1416
  %v1418 = vadd.f32 %v1268, %v1339
  %v1419 = vxor.u32 %v1418, 2147483648
  %v1420 = vmul.f32 %v1419, 1.442695
  %v1421 = vpow.pop %v1420
  %v1422 = vadd.f32 %v1421, 1.0
  %v1423 = vrcp.pop %v1422
  %v1424 = vmul.f32 1.0, %v1423
  %v1425 = vmul.f32 %v1417, %v1408
  %v1426 = vadd.f32 %v1269, %v1425
  %v1427 = vtanh.pop %v1426
  %v1428 = vsub.f32 1.0, %v1424
  %v1429 = vmul.f32 %v1428, %v1427
  %v1430 = vmul.f32 %v1424, %v1261
  %v1431 = vadd.f32 %v1429, %v1430
  %s1432 = scalar_lea.vmem [#allocation3], 40
  %1433 = vst [vmem:[%s1432] sm:$0xff] %v1431
  %s1434 = smul.u32 6, 3
  %s1435 = smul.addr %s1434, 8
  %s1436 = scalar_lea.vmem [#allocation2], %s1435
  %v1437 = vld [vmem:[%s1436] sm:$0xff]
  %v1438 = vld [vmem:[%s1436 + $0x8] sm:$0xff]
  %v1439 = vld [vmem:[%s1436 + $0x10] sm:$0xff]
  %1440 = vmatprep.subr.mxu0 %v350
  %1441 = vmatpush1.msra.mxu0 %v349
  %1442 = vmatprep.subr.mxu0 %v353
  %1443 = vmatpush1.msra.mxu0 %v352
  %1444 = vmatprep.subr.mxu0 %v356
  %1445 = vmatpush1.msra.mxu0 %v355
  %1446 = vmatprep.subr.mxu0 %v359
  %1447 = vmatpush1.msra.mxu0 %v358
  %1448 = vmatprep.subr.mxu0 %v362
  %1449 = vmatpush1.msra.mxu0 %v361
  %1450 = vmatprep.subr.mxu0 %v365
  %1451 = vmatpush1.msra.mxu0 %v364
  %1452 = vmatprep.subr.mxu0 %v368
  %1453 = vmatpush1.msra.mxu0 %v367
  %1454 = vmatprep.subr.mxu0 %v371
  %1455 = vmatpush1.msra.mxu0 %v370
  %1456 = vmatprep.subr.mxu0 %v374
  %1457 = vmatpush1.msra.mxu0 %v373
  %1458 = vmatprep.subr.mxu0 %v377
  %1459 = vmatpush1.msra.mxu0 %v376
  %1460 = vmatprep.subr.mxu0 %v380
  %1461 = vmatpush1.msra.mxu0 %v379
  %1462 = vmatprep.subr.mxu0 %v383
  %1463 = vmatpush1.msra.mxu0 %v382
  %1464 = vmatprep.subr.mxu0 %v386
  %1465 = vmatpush1.msra.mxu0 %v385
  %1466 = vmatprep.subr.mxu0 %v389
  %1467 = vmatpush1.msra.mxu0 %v388
  %1468 = vmatprep.subr.mxu0 %v392
  %1469 = vmatpush1.msra.mxu0 %v391
  %1470 = vmatprep.subr.mxu0 %v395
  %1471 = vmatpush1.msra.mxu0 %v394
  %1472 = vmatprep.subr.mxu0 0.0
  %1473 = vmatpush1.msra.mxu0 0.0
  %1474 = vmatprep.subr.mxu0 0.0
  %1475 = vmatpush1.msra.mxu0 0.0
  %1476 = vmatprep.subr.mxu0 0.0
  %1477 = vmatpush1.msra.mxu0 0.0
  %1478 = vmatprep.subr.mxu0 0.0
  %1479 = vmatpush1.msra.mxu0 0.0
  %1480 = vmatprep.subr.mxu0 0.0
  %1481 = vmatpush1.msra.mxu0 0.0
  %1482 = vmatprep.subr.mxu0 0.0
  %1483 = vmatpush1.msra.mxu0 0.0
  %1484 = vmatprep.subr.mxu0 0.0
  %1485 = vmatpush1.msra.mxu0 0.0
  %1486 = vmatprep.subr.mxu0 0.0
  %1487 = vmatpush1.msra.mxu0 0.0
  %1488 = vmatprep.subr.mxu0 0.0
  %1489 = vmatpush1.msra.mxu0 0.0
  %1490 = vmatprep.subr.mxu0 0.0
  %1491 = vmatpush1.msra.mxu0 0.0
  %1492 = vmatprep.subr.mxu0 0.0
  %1493 = vmatpush1.msra.mxu0 0.0
  %1494 = vmatprep.subr.mxu0 0.0
  %1495 = vmatpush1.msra.mxu0 0.0
  %1496 = vmatprep.subr.mxu0 0.0
  %1497 = vmatpush1.msra.mxu0 0.0
  %1498 = vmatprep.subr.mxu0 0.0
  %1499 = vmatpush1.msra.mxu0 0.0
  %1500 = vmatprep.subr.mxu0 0.0
  %1501 = vmatpush1.msra.mxu0 0.0
  %1502 = vmatprep.subr.mxu0 0.0
  %1503 = vmatpush1.msra.mxu0 0.0
  %1504 = vmatprep.mubr.f32.mxu0 0.0
  %1505 = vmatmul.mubr.f32.gmra.mrb[0].mxu0 %v1431
  %v1506 = vpop.f32.mrb[0].mxu0
  %v1507 = vadd.f32 %v402, %v1506
  %v1508 = vpop.f32.mrb[0].mxu0
  %v1509 = vadd.f32 %v406, %v1508
  %1510 = vdwg.mxu0
  %1511 = vmatprep.subr.mxu0 0.0
  %1512 = vmatpush1.msra.mxu0 %v351
  %1513 = vmatprep.subr.mxu0 0.0
  %1514 = vmatpush1.msra.mxu0 %v354
  %1515 = vmatprep.subr.mxu0 0.0
  %1516 = vmatpush1.msra.mxu0 %v357
  %1517 = vmatprep.subr.mxu0 0.0
  %1518 = vmatpush1.msra.mxu0 %v360
  %1519 = vmatprep.subr.mxu0 0.0
  %1520 = vmatpush1.msra.mxu0 %v363
  %1521 = vmatprep.subr.mxu0 0.0
  %1522 = vmatpush1.msra.mxu0 %v366
  %1523 = vmatprep.subr.mxu0 0.0
  %1524 = vmatpush1.msra.mxu0 %v369
  %1525 = vmatprep.subr.mxu0 0.0
  %1526 = vmatpush1.msra.mxu0 %v372
  %1527 = vmatprep.subr.mxu0 0.0
  %1528 = vmatpush1.msra.mxu0 %v375
  %1529 = vmatprep.subr.mxu0 0.0
  %1530 = vmatpush1.msra.mxu0 %v378
  %1531 = vmatprep.subr.mxu0 0.0
  %1532 = vmatpush1.msra.mxu0 %v381
  %1533 = vmatprep.subr.mxu0 0.0
  %1534 = vmatpush1.msra.mxu0 %v384
  %1535 = vmatprep.subr.mxu0 0.0
  %1536 = vmatpush1.msra.mxu0 %v387
  %1537 = vmatprep.subr.mxu0 0.0
  %1538 = vmatpush1.msra.mxu0 %v390
  %1539 = vmatprep.subr.mxu0 0.0
  %1540 = vmatpush1.msra.mxu0 %v393
  %1541 = vmatprep.subr.mxu0 0.0
  %1542 = vmatpush1.msra.mxu0 %v396
  %1543 = vmatprep.subr.mxu0 0.0
  %1544 = vmatpush1.msra.mxu0 0.0
  %1545 = vmatprep.subr.mxu0 0.0
  %1546 = vmatpush1.msra.mxu0 0.0
  %1547 = vmatprep.subr.mxu0 0.0
  %1548 = vmatpush1.msra.mxu0 0.0
  %1549 = vmatprep.subr.mxu0 0.0
  %1550 = vmatpush1.msra.mxu0 0.0
  %1551 = vmatprep.subr.mxu0 0.0
  %1552 = vmatpush1.msra.mxu0 0.0
  %1553 = vmatprep.subr.mxu0 0.0
  %1554 = vmatpush1.msra.mxu0 0.0
  %1555 = vmatprep.subr.mxu0 0.0
  %1556 = vmatpush1.msra.mxu0 0.0
  %1557 = vmatprep.subr.mxu0 0.0
  %1558 = vmatpush1.msra.mxu0 0.0
  %1559 = vmatprep.subr.mxu0 0.0
  %1560 = vmatpush1.msra.mxu0 0.0
  %1561 = vmatprep.subr.mxu0 0.0
  %1562 = vmatpush1.msra.mxu0 0.0
  %1563 = vmatprep.subr.mxu0 0.0
  %1564 = vmatpush1.msra.mxu0 0.0
  %1565 = vmatprep.subr.mxu0 0.0
  %1566 = vmatpush1.msra.mxu0 0.0
  %1567 = vmatprep.subr.mxu0 0.0
  %1568 = vmatpush1.msra.mxu0 0.0
  %1569 = vmatprep.subr.mxu0 0.0
  %1570 = vmatpush1.msra.mxu0 0.0
  %1571 = vmatprep.subr.mxu0 0.0
  %1572 = vmatpush1.msra.mxu0 0.0
  %1573 = vmatprep.subr.mxu0 0.0
  %1574 = vmatpush1.msra.mxu0 0.0
  %1575 = vmatprep.mubr.f32.mxu0 0.0
  %1576 = vmatmul.mubr.f32.gmra.mrb[0].mxu0 %v1431
  %v1577 = vpop.f32.mrb[0].mxu0
  %v1578 = vadd.f32 %v410, %v1577
  %v1579 = vpop.f32.mrb[0].mxu0
  %1580 = vdwg.mxu0
  %v1581 = vadd.f32 %v1437, %v1507
  %v1582 = vxor.u32 %v1581, 2147483648
  %v1583 = vmul.f32 %v1582, 1.442695
  %v1584 = vpow.pop %v1583
  %v1585 = vadd.f32 %v1584, 1.0
  %v1586 = vrcp.pop %v1585
  %v1587 = vmul.f32 1.0, %v1586
  %v1588 = vadd.f32 %v1438, %v1509
  %v1589 = vxor.u32 %v1588, 2147483648
  %v1590 = vmul.f32 %v1589, 1.442695
  %v1591 = vpow.pop %v1590
  %v1592 = vadd.f32 %v1591, 1.0
  %v1593 = vrcp.pop %v1592
  %v1594 = vmul.f32 1.0, %v1593
  %v1595 = vmul.f32 %v1587, %v1578
  %v1596 = vadd.f32 %v1439, %v1595
  %v1597 = vtanh.pop %v1596
  %v1598 = vsub.f32 1.0, %v1594
  %v1599 = vmul.f32 %v1598, %v1597
  %v1600 = vmul.f32 %v1594, %v1431
  %v1601 = vadd.f32 %v1599, %v1600
  %s1602 = scalar_lea.vmem [#allocation3], 48
  %1603 = vst [vmem:[%s1602] sm:$0xff] %v1601
  %s1604 = smul.u32 7, 3
  %s1605 = smul.addr %s1604, 8
  %s1606 = scalar_lea.vmem [#allocation2], %s1605
  %v1607 = vld [vmem:[%s1606] sm:$0xff]
  %v1608 = vld [vmem:[%s1606 + $0x8] sm:$0xff]
  %v1609 = vld [vmem:[%s1606 + $0x10] sm:$0xff]
  %1610 = vmatprep.subr.mxu0 %v350
  %1611 = vmatpush1.msra.mxu0 %v349
  %1612 = vmatprep.subr.mxu0 %v353
  %1613 = vmatpush1.msra.mxu0 %v352
  %1614 = vmatprep.subr.mxu0 %v356
  %1615 = vmatpush1.msra.mxu0 %v355
  %1616 = vmatprep.subr.mxu0 %v359
  %1617 = vmatpush1.msra.mxu0 %v358
  %1618 = vmatprep.subr.mxu0 %v362
  %1619 = vmatpush1.msra.mxu0 %v361
  %1620 = vmatprep.subr.mxu0 %v365
  %1621 = vmatpush1.msra.mxu0 %v364
  %1622 = vmatprep.subr.mxu0 %v368
  %1623 = vmatpush1.msra.mxu0 %v367
  %1624 = vmatprep.subr.mxu0 %v371
  %1625 = vmatpush1.msra.mxu0 %v370
  %1626 = vmatprep.subr.mxu0 %v374
  %1627 = vmatpush1.msra.mxu0 %v373
  %1628 = vmatprep.subr.mxu0 %v377
  %1629 = vmatpush1.msra.mxu0 %v376
  %1630 = vmatprep.subr.mxu0 %v380
  %1631 = vmatpush1.msra.mxu0 %v379
  %1632 = vmatprep.subr.mxu0 %v383
  %1633 = vmatpush1.msra.mxu0 %v382
  %1634 = vmatprep.subr.mxu0 %v386
  %1635 = vmatpush1.msra.mxu0 %v385
  %1636 = vmatprep.subr.mxu0 %v389
  %1637 = vmatpush1.msra.mxu0 %v388
  %1638 = vmatprep.subr.mxu0 %v392
  %1639 = vmatpush1.msra.mxu0 %v391
  %1640 = vmatprep.subr.mxu0 %v395
  %1641 = vmatpush1.msra.mxu0 %v394
  %1642 = vmatprep.subr.mxu0 0.0
  %1643 = vmatpush1.msra.mxu0 0.0
  %1644 = vmatprep.subr.mxu0 0.0
  %1645 = vmatpush1.msra.mxu0 0.0
  %1646 = vmatprep.subr.mxu0 0.0
  %1647 = vmatpush1.msra.mxu0 0.0
  %1648 = vmatprep.subr.mxu0 0.0
  %1649 = vmatpush1.msra.mxu0 0.0
  %1650 = vmatprep.subr.mxu0 0.0
  %1651 = vmatpush1.msra.mxu0 0.0
  %1652 = vmatprep.subr.mxu0 0.0
  %1653 = vmatpush1.msra.mxu0 0.0
  %1654 = vmatprep.subr.mxu0 0.0
  %1655 = vmatpush1.msra.mxu0 0.0
  %1656 = vmatprep.subr.mxu0 0.0
  %1657 = vmatpush1.msra.mxu0 0.0
  %1658 = vmatprep.subr.mxu0 0.0
  %1659 = vmatpush1.msra.mxu0 0.0
  %1660 = vmatprep.subr.mxu0 0.0
  %1661 = vmatpush1.msra.mxu0 0.0
  %1662 = vmatprep.subr.mxu0 0.0
  %1663 = vmatpush1.msra.mxu0 0.0
  %1664 = vmatprep.subr.mxu0 0.0
  %1665 = vmatpush1.msra.mxu0 0.0
  %1666 = vmatprep.subr.mxu0 0.0
  %1667 = vmatpush1.msra.mxu0 0.0
  %1668 = vmatprep.subr.mxu0 0.0
  %1669 = vmatpush1.msra.mxu0 0.0
  %1670 = vmatprep.subr.mxu0 0.0
  %1671 = vmatpush1.msra.mxu0 0.0
  %1672 = vmatprep.subr.mxu0 0.0
  %1673 = vmatpush1.msra.mxu0 0.0
  %1674 = vmatprep.mubr.f32.mxu0 0.0
  %1675 = vmatmul.mubr.f32.gmra.mrb[0].mxu0 %v1601
  %v1676 = vpop.f32.mrb[0].mxu0
  %v1677 = vadd.f32 %v402, %v1676
  %v1678 = vpop.f32.mrb[0].mxu0
  %v1679 = vadd.f32 %v406, %v1678
  %1680 = vdwg.mxu0
  %1681 = vmatprep.subr.mxu0 0.0
  %1682 = vmatpush1.msra.mxu0 %v351
  %1683 = vmatprep.subr.mxu0 0.0
  %1684 = vmatpush1.msra.mxu0 %v354
  %1685 = vmatprep.subr.mxu0 0.0
  %1686 = vmatpush1.msra.mxu0 %v357
  %1687 = vmatprep.subr.mxu0 0.0
  %1688 = vmatpush1.msra.mxu0 %v360
  %1689 = vmatprep.subr.mxu0 0.0
  %1690 = vmatpush1.msra.mxu0 %v363
  %1691 = vmatprep.subr.mxu0 0.0
  %1692 = vmatpush1.msra.mxu0 %v366
  %1693 = vmatprep.subr.mxu0 0.0
  %1694 = vmatpush1.msra.mxu0 %v369
  %1695 = vmatprep.subr.mxu0 0.0
  %1696 = vmatpush1.msra.mxu0 %v372
  %1697 = vmatprep.subr.mxu0 0.0
  %1698 = vmatpush1.msra.mxu0 %v375
  %1699 = vmatprep.subr.mxu0 0.0
  %1700 = vmatpush1.msra.mxu0 %v378
  %1701 = vmatprep.subr.mxu0 0.0
  %1702 = vmatpush1.msra.mxu0 %v381
  %1703 = vmatprep.subr.mxu0 0.0
  %1704 = vmatpush1.msra.mxu0 %v384
  %1705 = vmatprep.subr.mxu0 0.0
  %1706 = vmatpush1.msra.mxu0 %v387
  %1707 = vmatprep.subr.mxu0 0.0
  %1708 = vmatpush1.msra.mxu0 %v390
  %1709 = vmatprep.subr.mxu0 0.0
  %1710 = vmatpush1.msra.mxu0 %v393
  %1711 = vmatprep.subr.mxu0 0.0
  %1712 = vmatpush1.msra.mxu0 %v396
  %1713 = vmatprep.subr.mxu0 0.0
  %1714 = vmatpush1.msra.mxu0 0.0
  %1715 = vmatprep.subr.mxu0 0.0
  %1716 = vmatpush1.msra.mxu0 0.0
  %1717 = vmatprep.subr.mxu0 0.0
  %1718 = vmatpush1.msra.mxu0 0.0
  %1719 = vmatprep.subr.mxu0 0.0
  %1720 = vmatpush1.msra.mxu0 0.0
  %1721 = vmatprep.subr.mxu0 0.0
  %1722 = vmatpush1.msra.mxu0 0.0
  %1723 = vmatprep.subr.mxu0 0.0
  %1724 = vmatpush1.msra.mxu0 0.0
  %1725 = vmatprep.subr.mxu0 0.0
  %1726 = vmatpush1.msra.mxu0 0.0
  %1727 = vmatprep.subr.mxu0 0.0
  %1728 = vmatpush1.msra.mxu0 0.0
  %1729 = vmatprep.subr.mxu0 0.0
  %1730 = vmatpush1.msra.mxu0 0.0
  %1731 = vmatprep.subr.mxu0 0.0
  %1732 = vmatpush1.msra.mxu0 0.0
  %1733 = vmatprep.subr.mxu0 0.0
  %1734 = vmatpush1.msra.mxu0 0.0
  %1735 = vmatprep.subr.mxu0 0.0
  %1736 = vmatpush1.msra.mxu0 0.0
  %1737 = vmatprep.subr.mxu0 0.0
  %1738 = vmatpush1.msra.mxu0 0.0
  %1739 = vmatprep.subr.mxu0 0.0
  %1740 = vmatpush1.msra.mxu0 0.0
  %1741 = vmatprep.subr.mxu0 0.0
  %1742 = vmatpush1.msra.mxu0 0.0
  %1743 = vmatprep.subr.mxu0 0.0
  %1744 = vmatpush1.msra.mxu0 0.0
  %1745 = vmatprep.mubr.f32.mxu0 0.0
  %1746 = vmatmul.mubr.f32.gmra.mrb[0].mxu0 %v1601
  %v1747 = vpop.f32.mrb[0].mxu0
  %v1748 = vadd.f32 %v410, %v1747
  %v1749 = vpop.f32.mrb[0].mxu0
  %1750 = vdwg.mxu0
  %v1751 = vadd.f32 %v1607, %v1677
  %v1752 = vxor.u32 %v1751, 2147483648
  %v1753 = vmul.f32 %v1752, 1.442695
  %v1754 = vpow.pop %v1753
  %v1755 = vadd.f32 %v1754, 1.0
  %v1756 = vrcp.pop %v1755
  %v1757 = vmul.f32 1.0, %v1756
  %v1758 = vadd.f32 %v1608, %v1679
  %v1759 = vxor.u32 %v1758, 2147483648
  %v1760 = vmul.f32 %v1759, 1.442695
  %v1761 = vpow.pop %v1760
  %v1762 = vadd.f32 %v1761, 1.0
  %v1763 = vrcp.pop %v1762
  %v1764 = vmul.f32 1.0, %v1763
  %v1765 = vmul.f32 %v1757, %v1748
  %v1766 = vadd.f32 %v1609, %v1765
  %v1767 = vtanh.pop %v1766
  %v1768 = vsub.f32 1.0, %v1764
  %v1769 = vmul.f32 %v1768, %v1767
  %v1770 = vmul.f32 %v1764, %v1601
  %v1771 = vadd.f32 %v1769, %v1770
  %s1772 = scalar_lea.vmem [#allocation3], 56
  %1773 = vst [vmem:[%s1772] sm:$0xff] %v1771
  %1774 = vst [vmem:[#allocation4] sm:$0xff] %v1771
  %v1775 = vld [vmem:[#allocation3] sm:$0xff]
  %v1776 = vld [vmem:[#allocation3 + $0x8] sm:$0xff]
  %v1777 = vld [vmem:[#allocation3 + $0x10] sm:$0xff]
  %v1778 = vld [vmem:[#allocation3 + $0x18] sm:$0xff]
  %v1779 = vld [vmem:[#allocation3 + $0x20] sm:$0xff]
  %v1780 = vld [vmem:[#allocation3 + $0x28] sm:$0xff]
  %v1781 = vld [vmem:[#allocation3 + $0x30] sm:$0xff]
  %v1782 = vld [vmem:[#allocation3 + $0x38] sm:$0xff]
  %s1783 = scalar_lea.vmem %s1, 384
  %v1784 = vld [vmem:[%s1783] sm:$0xff]
  %v1785 = vld [vmem:[%s1783 + $0x8] sm:$0xff]
  %v1786 = vld [vmem:[%s1783 + $0x10] sm:$0xff]
  %v1787 = vld [vmem:[%s1783 + $0x18] sm:$0xff]
  %v1788 = vld [vmem:[%s1783 + $0x20] sm:$0xff]
  %v1789 = vld [vmem:[%s1783 + $0x28] sm:$0xff]
  %v1790 = vld [vmem:[%s1783 + $0x30] sm:$0xff]
  %v1791 = vld [vmem:[%s1783 + $0x38] sm:$0xff]
  %v1792 = vld [vmem:[%s1783 + $0x40] sm:$0xff]
  %v1793 = vld [vmem:[%s1783 + $0x48] sm:$0xff]
  %v1794 = vld [vmem:[%s1783 + $0x50] sm:$0xff]
  %v1795 = vld [vmem:[%s1783 + $0x58] sm:$0xff]
  %v1796 = vld [vmem:[%s1783 + $0x60] sm:$0xff]
  %v1797 = vld [vmem:[%s1783 + $0x68] sm:$0xff]
  %v1798 = vld [vmem:[%s1783 + $0x70] sm:$0xff]
  %v1799 = vld [vmem:[%s1783 + $0x78] sm:$0xff]
  %v1800 = vld [vmem:[%s1783 + $0x80] sm:$0xff]
  %v1801 = vld [vmem:[%s1783 + $0x88] sm:$0xff]
  %v1802 = vld [vmem:[%s1783 + $0x90] sm:$0xff]
  %v1803 = vld [vmem:[%s1783 + $0x98] sm:$0xff]
  %v1804 = vld [vmem:[%s1783 + $0xa0] sm:$0xff]
  %v1805 = vld [vmem:[%s1783 + $0xa8] sm:$0xff]
  %v1806 = vld [vmem:[%s1783 + $0xb0] sm:$0xff]
  %v1807 = vld [vmem:[%s1783 + $0xb8] sm:$0xff]
  %v1808 = vld [vmem:[%s1783 + $0xc0] sm:$0xff]
  %v1809 = vld [vmem:[%s1783 + $0xc8] sm:$0xff]
  %v1810 = vld [vmem:[%s1783 + $0xd0] sm:$0xff]
  %v1811 = vld [vmem:[%s1783 + $0xd8] sm:$0xff]
  %v1812 = vld [vmem:[%s1783 + $0xe0] sm:$0xff]
  %v1813 = vld [vmem:[%s1783 + $0xe8] sm:$0xff]
  %v1814 = vld [vmem:[%s1783 + $0xf0] sm:$0xff]
  %v1815 = vld [vmem:[%s1783 + $0xf8] sm:$0xff]
  %v1816 = vld [vmem:[%s1783 + $0x100] sm:$0xff]
  %v1817 = vld [vmem:[%s1783 + $0x108] sm:$0xff]
  %v1818 = vld [vmem:[%s1783 + $0x110] sm:$0xff]
  %v1819 = vld [vmem:[%s1783 + $0x118] sm:$0xff]
  %v1820 = vld [vmem:[%s1783 + $0x120] sm:$0xff]
  %v1821 = vld [vmem:[%s1783 + $0x128] sm:$0xff]
  %v1822 = vld [vmem:[%s1783 + $0x130] sm:$0xff]
  %v1823 = vld [vmem:[%s1783 + $0x138] sm:$0xff]
  %v1824 = vld [vmem:[%s1783 + $0x140] sm:$0xff]
  %v1825 = vld [vmem:[%s1783 + $0x148] sm:$0xff]
  %v1826 = vld [vmem:[%s1783 + $0x150] sm:$0xff]
  %v1827 = vld [vmem:[%s1783 + $0x158] sm:$0xff]
  %v1828 = vld [vmem:[%s1783 + $0x160] sm:$0xff]
  %v1829 = vld [vmem:[%s1783 + $0x168] sm:$0xff]
  %v1830 = vld [vmem:[%s1783 + $0x170] sm:$0xff]
  %v1831 = vld [vmem:[%s1783 + $0x178] sm:$0xff]
  %s1832 = scalar_lea.vmem %s3, 3
  %v1833 = vld [vmem:[%s1832] sm:$0x7]
  %v1835 = vlaneseq
  %v1836 = vshrl.u32 %v1835, 7
  %v1837 = vsub.s32 0, %v1836
  %v1838 = vrot.slane %v1833, %v1837
  %v1839 = vlaneseq
  %v1840 = vshrl.u32 %v1839, 7
  %v1841 = vsub.s32 1, %v1840
  %v1842 = vrot.slane %v1833, %v1841
  %v1843 = vlaneseq
  %v1844 = vshrl.u32 %v1843, 7
  %v1845 = vsub.s32 2, %v1844
  %v1846 = vrot.slane %v1833, %v1845
  %1850 = vmatprep.subr.mxu0 %v1785
  %1851 = vmatpush1.msra.mxu0 %v1784
  %1852 = vmatprep.subr.mxu0 %v1788
  %1853 = vmatpush1.msra.mxu0 %v1787
  %1854 = vmatprep.subr.mxu0 %v1791
  %1855 = vmatpush1.msra.mxu0 %v1790
  %1856 = vmatprep.subr.mxu0 %v1794
  %1857 = vmatpush1.msra.mxu0 %v1793
  %1858 = vmatprep.subr.mxu0 %v1797
  %1859 = vmatpush1.msra.mxu0 %v1796
  %1860 = vmatprep.subr.mxu0 %v1800
  %1861 = vmatpush1.msra.mxu0 %v1799
  %1862 = vmatprep.subr.mxu0 %v1803
  %1863 = vmatpush1.msra.mxu0 %v1802
  %1864 = vmatprep.subr.mxu0 %v1806
  %1865 = vmatpush1.msra.mxu0 %v1805
  %1866 = vmatprep.subr.mxu0 %v1809
  %1867 = vmatpush1.msra.mxu0 %v1808
  %1868 = vmatprep.subr.mxu0 %v1812
  %1869 = vmatpush1.msra.mxu0 %v1811
  %1870 = vmatprep.subr.mxu0 %v1815
  %1871 = vmatpush1.msra.mxu0 %v1814
  %1872 = vmatprep.subr.mxu0 %v1818
  %1873 = vmatpush1.msra.mxu0 %v1817
  %1874 = vmatprep.subr.mxu0 %v1821
  %1875 = vmatpush1.msra.mxu0 %v1820
  %1876 = vmatprep.subr.mxu0 %v1824
  %1877 = vmatpush1.msra.mxu0 %v1823
  %1878 = vmatprep.subr.mxu0 %v1827
  %1879 = vmatpush1.msra.mxu0 %v1826
  %1880 = vmatprep.subr.mxu0 %v1830
  %1881 = vmatpush1.msra.mxu0 %v1829
  %1882 = vmatprep.subr.mxu0 0.0
  %1883 = vmatpush1.msra.mxu0 0.0
  %1884 = vmatprep.subr.mxu0 0.0
  %1885 = vmatpush1.msra.mxu0 0.0
  %1886 = vmatprep.subr.mxu0 0.0
  %1887 = vmatpush1.msra.mxu0 0.0
  %1888 = vmatprep.subr.mxu0 0.0
  %1889 = vmatpush1.msra.mxu0 0.0
  %1890 = vmatprep.subr.mxu0 0.0
  %1891 = vmatpush1.msra.mxu0 0.0
  %1892 = vmatprep.subr.mxu0 0.0
  %1893 = vmatpush1.msra.mxu0 0.0
  %1894 = vmatprep.subr.mxu0 0.0
  %1895 = vmatpush1.msra.mxu0 0.0
  %1896 = vmatprep.subr.mxu0 0.0
  %1897 = vmatpush1.msra.mxu0 0.0
  %1898 = vmatprep.subr.mxu0 0.0
  %1899 = vmatpush1.msra.mxu0 0.0
  %1900 = vmatprep.subr.mxu0 0.0
  %1901 = vmatpush1.msra.mxu0 0.0
  %1902 = vmatprep.subr.mxu0 0.0
  %1903 = vmatpush1.msra.mxu0 0.0
  %1904 = vmatprep.subr.mxu0 0.0
  %1905 = vmatpush1.msra.mxu0 0.0
  %1906 = vmatprep.subr.mxu0 0.0
  %1907 = vmatpush1.msra.mxu0 0.0
  %1908 = vmatprep.subr.mxu0 0.0
  %1909 = vmatpush1.msra.mxu0 0.0
  %1910 = vmatprep.subr.mxu0 0.0
  %1911 = vmatpush1.msra.mxu0 0.0
  %1912 = vmatprep.subr.mxu0 0.0
  %1913 = vmatpush1.msra.mxu0 0.0
  %1914 = vmatprep.mubr.f32.mxu0 0.0
  %1915 = vmatmul.mubr.f32.gmra.mrb[0].mxu0 %v1775
  %v1916 = vpop.f32.mrb[0].mxu0
  %v1917 = vadd.f32 %v1838, %v1916
  %v1918 = vpop.f32.mrb[0].mxu0
  %v1919 = vadd.f32 %v1842, %v1918
  %1920 = vmatprep.mubr.f32.mxu0 0.0
  %1921 = vmatmul.mubr.f32.gmra.mrb[0].mxu0 %v1776
  %v1922 = vpop.f32.mrb[0].mxu0
  %v1923 = vadd.f32 %v1838, %v1922
  %v1924 = vpop.f32.mrb[0].mxu0
  %v1925 = vadd.f32 %v1842, %v1924
  %1926 = vmatprep.mubr.f32.mxu0 0.0
  %1927 = vmatmul.mubr.f32.gmra.mrb[0].mxu0 %v1777
  %v1928 = vpop.f32.mrb[0].mxu0
  %v1929 = vadd.f32 %v1838, %v1928
  %v1930 = vpop.f32.mrb[0].mxu0
  %v1931 = vadd.f32 %v1842, %v1930
  %1932 = vmatprep.mubr.f32.mxu0 0.0
  %1933 = vmatmul.mubr.f32.gmra.mrb[0].mxu0 %v1778
  %v1934 = vpop.f32.mrb[0].mxu0
  %v1935 = vadd.f32 %v1838, %v1934
  %v1936 = vpop.f32.mrb[0].mxu0
  %v1937 = vadd.f32 %v1842, %v1936
  %1938 = vmatprep.mubr.f32.mxu0 0.0
  %1939 = vmatmul.mubr.f32.gmra.mrb[0].mxu0 %v1779
  %v1940 = vpop.f32.mrb[0].mxu0
  %v1941 = vadd.f32 %v1838, %v1940
  %v1942 = vpop.f32.mrb[0].mxu0
  %v1943 = vadd.f32 %v1842, %v1942
  %1944 = vmatprep.mubr.f32.mxu0 0.0
  %1945 = vmatmul.mubr.f32.gmra.mrb[0].mxu0 %v1780
  %v1946 = vpop.f32.mrb[0].mxu0
  %v1947 = vadd.f32 %v1838, %v1946
  %v1948 = vpop.f32.mrb[0].mxu0
  %v1949 = vadd.f32 %v1842, %v1948
  %1950 = vmatprep.mubr.f32.mxu0 0.0
  %1951 = vmatmul.mubr.f32.gmra.mrb[0].mxu0 %v1781
  %v1952 = vpop.f32.mrb[0].mxu0
  %v1953 = vadd.f32 %v1838, %v1952
  %v1954 = vpop.f32.mrb[0].mxu0
  %v1955 = vadd.f32 %v1842, %v1954
  %1956 = vmatprep.mubr.f32.mxu0 0.0
  %1957 = vmatmul.mubr.f32.gmra.mrb[0].mxu0 %v1782
  %v1958 = vpop.f32.mrb[0].mxu0
  %v1959 = vadd.f32 %v1838, %v1958
  %v1960 = vpop.f32.mrb[0].mxu0
  %v1961 = vadd.f32 %v1842, %v1960
  %1962 = vdwg.mxu0
  %1963 = vmatprep.subr.mxu0 0.0
  %1964 = vmatpush1.msra.mxu0 %v1786
  %1965 = vmatprep.subr.mxu0 0.0
  %1966 = vmatpush1.msra.mxu0 %v1789
  %1967 = vmatprep.subr.mxu0 0.0
  %1968 = vmatpush1.msra.mxu0 %v1792
  %1969 = vmatprep.subr.mxu0 0.0
  %1970 = vmatpush1.msra.mxu0 %v1795
  %1971 = vmatprep.subr.mxu0 0.0
  %1972 = vmatpush1.msra.mxu0 %v1798
  %1973 = vmatprep.subr.mxu0 0.0
  %1974 = vmatpush1.msra.mxu0 %v1801
  %1975 = vmatprep.subr.mxu0 0.0
  %1976 = vmatpush1.msra.mxu0 %v1804
  %1977 = vmatprep.subr.mxu0 0.0
  %1978 = vmatpush1.msra.mxu0 %v1807
  %1979 = vmatprep.subr.mxu0 0.0
  %1980 = vmatpush1.msra.mxu0 %v1810
  %1981 = vmatprep.subr.mxu0 0.0
  %1982 = vmatpush1.msra.mxu0 %v1813
  %1983 = vmatprep.subr.mxu0 0.0
  %1984 = vmatpush1.msra.mxu0 %v1816
  %1985 = vmatprep.subr.mxu0 0.0
  %1986 = vmatpush1.msra.mxu0 %v1819
  %1987 = vmatprep.subr.mxu0 0.0
  %1988 = vmatpush1.msra.mxu0 %v1822
  %1989 = vmatprep.subr.mxu0 0.0
  %1990 = vmatpush1.msra.mxu0 %v1825
  %1991 = vmatprep.subr.mxu0 0.0
  %1992 = vmatpush1.msra.mxu0 %v1828
  %1993 = vmatprep.subr.mxu0 0.0
  %1994 = vmatpush1.msra.mxu0 %v1831
  %1995 = vmatprep.subr.mxu0 0.0
  %1996 = vmatpush1.msra.mxu0 0.0
  %1997 = vmatprep.subr.mxu0 0.0
  %1998 = vmatpush1.msra.mxu0 0.0
  %1999 = vmatprep.subr.mxu0 0.0
  %2000 = vmatpush1.msra.mxu0 0.0
  %2001 = vmatprep.subr.mxu0 0.0
  %2002 = vmatpush1.msra.mxu0 0.0
  %2003 = vmatprep.subr.mxu0 0.0
  %2004 = vmatpush1.msra.mxu0 0.0
  %2005 = vmatprep.subr.mxu0 0.0
  %2006 = vmatpush1.msra.mxu0 0.0
  %2007 = vmatprep.subr.mxu0 0.0
  %2008 = vmatpush1.msra.mxu0 0.0
  %2009 = vmatprep.subr.mxu0 0.0
  %2010 = vmatpush1.msra.mxu0 0.0
  %2011 = vmatprep.subr.mxu0 0.0
  %2012 = vmatpush1.msra.mxu0 0.0
  %2013 = vmatprep.subr.mxu0 0.0
  %2014 = vmatpush1.msra.mxu0 0.0
  %2015 = vmatprep.subr.mxu0 0.0
  %2016 = vmatpush1.msra.mxu0 0.0
  %2017 = vmatprep.subr.mxu0 0.0
  %2018 = vmatpush1.msra.mxu0 0.0
  %2019 = vmatprep.subr.mxu0 0.0
  %2020 = vmatpush1.msra.mxu0 0.0
  %2021 = vmatprep.subr.mxu0 0.0
  %2022 = vmatpush1.msra.mxu0 0.0
  %2023 = vmatprep.subr.mxu0 0.0
  %2024 = vmatpush1.msra.mxu0 0.0
  %2025 = vmatprep.subr.mxu0 0.0
  %2026 = vmatpush1.msra.mxu0 0.0
  %2027 = vmatprep.mubr.f32.mxu0 0.0
  %2028 = vmatmul.mubr.f32.gmra.mrb[0].mxu0 %v1775
  %v2029 = vpop.f32.mrb[0].mxu0
  %v2030 = vadd.f32 %v1846, %v2029
  %v2031 = vpop.f32.mrb[0].mxu0
  %2032 = vmatprep.mubr.f32.mxu0 0.0
  %2033 = vmatmul.mubr.f32.gmra.mrb[0].mxu0 %v1776
  %v2034 = vpop.f32.mrb[0].mxu0
  %v2035 = vadd.f32 %v1846, %v2034
  %v2036 = vpop.f32.mrb[0].mxu0
  %2037 = vmatprep.mubr.f32.mxu0 0.0
  %2038 = vmatmul.mubr.f32.gmra.mrb[0].mxu0 %v1777
  %v2039 = vpop.f32.mrb[0].mxu0
  %v2040 = vadd.f32 %v1846, %v2039
  %v2041 = vpop.f32.mrb[0].mxu0
  %2042 = vmatprep.mubr.f32.mxu0 0.0
  %2043 = vmatmul.mubr.f32.gmra.mrb[0].mxu0 %v1778
  %v2044 = vpop.f32.mrb[0].mxu0
  %v2045 = vadd.f32 %v1846, %v2044
  %v2046 = vpop.f32.mrb[0].mxu0
  %2047 = vmatprep.mubr.f32.mxu0 0.0
  %2048 = vmatmul.mubr.f32.gmra.mrb[0].mxu0 %v1779
  %v2049 = vpop.f32.mrb[0].mxu0
  %v2050 = vadd.f32 %v1846, %v2049
  %v2051 = vpop.f32.mrb[0].mxu0
  %2052 = vmatprep.mubr.f32.mxu0 0.0
  %2053 = vmatmul.mubr.f32.gmra.mrb[0].mxu0 %v1780
  %v2054 = vpop.f32.mrb[0].mxu0
  %v2055 = vadd.f32 %v1846, %v2054
  %v2056 = vpop.f32.mrb[0].mxu0
  %2057 = vmatprep.mubr.f32.mxu0 0.0
  %2058 = vmatmul.mubr.f32.gmra.mrb[0].mxu0 %v1781
  %v2059 = vpop.f32.mrb[0].mxu0
  %v2060 = vadd.f32 %v1846, %v2059
  %v2061 = vpop.f32.mrb[0].mxu0
  %2062 = vmatprep.mubr.f32.mxu0 0.0
  %2063 = vmatmul.mubr.f32.gmra.mrb[0].mxu0 %v1782
  %v2064 = vpop.f32.mrb[0].mxu0
  %v2065 = vadd.f32 %v1846, %v2064
  %v2066 = vpop.f32.mrb[0].mxu0
  %2067 = vdwg.mxu0
  %2068 = vst [vmem:[#allocation2] sm:$0xff] %v1917
  %2069 = vst [vmem:[#allocation2 + $0x8] sm:$0xff] %v1919
  %2070 = vst [vmem:[#allocation2 + $0x10] sm:$0xff] %v2030
  %2071 = vst [vmem:[#allocation2 + $0x18] sm:$0xff] %v1923
  %2072 = vst [vmem:[#allocation2 + $0x20] sm:$0xff] %v1925
  %2073 = vst [vmem:[#allocation2 + $0x28] sm:$0xff] %v2035
  %2074 = vst [vmem:[#allocation2 + $0x30] sm:$0xff] %v1929
  %2075 = vst [vmem:[#allocation2 + $0x38] sm:$0xff] %v1931
  %2076 = vst [vmem:[#allocation2 + $0x40] sm:$0xff] %v2040
  %2077 = vst [vmem:[#allocation2 + $0x48] sm:$0xff] %v1935
  %2078 = vst [vmem:[#allocation2 + $0x50] sm:$0xff] %v1937
  %2079 = vst [vmem:[#allocation2 + $0x58] sm:$0xff] %v2045
  %2080 = vst [vmem:[#allocation2 + $0x60] sm:$0xff] %v1941
  %2081 = vst [vmem:[#allocation2 + $0x68] sm:$0xff] %v1943
  %2082 = vst [vmem:[#allocation2 + $0x70] sm:$0xff] %v2050
  %2083 = vst [vmem:[#allocation2 + $0x78] sm:$0xff] %v1947
  %2084 = vst [vmem:[#allocation2 + $0x80] sm:$0xff] %v1949
  %2085 = vst [vmem:[#allocation2 + $0x88] sm:$0xff] %v2055
  %2086 = vst [vmem:[#allocation2 + $0x90] sm:$0xff] %v1953
  %2087 = vst [vmem:[#allocation2 + $0x98] sm:$0xff] %v1955
  %2088 = vst [vmem:[#allocation2 + $0xa0] sm:$0xff] %v2060
  %2089 = vst [vmem:[#allocation2 + $0xa8] sm:$0xff] %v1959
  %2090 = vst [vmem:[#allocation2 + $0xb0] sm:$0xff] %v1961
  %2091 = vst [vmem:[#allocation2 + $0xb8] sm:$0xff] %v2065
  %s2092 = scalar_lea.vmem %s2, 384
  %v2093 = vld [vmem:[%s2092] sm:$0xff]
  %v2094 = vld [vmem:[%s2092 + $0x8] sm:$0xff]
  %v2095 = vld [vmem:[%s2092 + $0x10] sm:$0xff]
  %v2096 = vld [vmem:[%s2092 + $0x18] sm:$0xff]
  %v2097 = vld [vmem:[%s2092 + $0x20] sm:$0xff]
  %v2098 = vld [vmem:[%s2092 + $0x28] sm:$0xff]
  %v2099 = vld [vmem:[%s2092 + $0x30] sm:$0xff]
  %v2100 = vld [vmem:[%s2092 + $0x38] sm:$0xff]
  %v2101 = vld [vmem:[%s2092 + $0x40] sm:$0xff]
  %v2102 = vld [vmem:[%s2092 + $0x48] sm:$0xff]
  %v2103 = vld [vmem:[%s2092 + $0x50] sm:$0xff]
  %v2104 = vld [vmem:[%s2092 + $0x58] sm:$0xff]
  %v2105 = vld [vmem:[%s2092 + $0x60] sm:$0xff]
  %v2106 = vld [vmem:[%s2092 + $0x68] sm:$0xff]
  %v2107 = vld [vmem:[%s2092 + $0x70] sm:$0xff]
  %v2108 = vld [vmem:[%s2092 + $0x78] sm:$0xff]
  %v2109 = vld [vmem:[%s2092 + $0x80] sm:$0xff]
  %v2110 = vld [vmem:[%s2092 + $0x88] sm:$0xff]
  %v2111 = vld [vmem:[%s2092 + $0x90] sm:$0xff]
  %v2112 = vld [vmem:[%s2092 + $0x98] sm:$0xff]
  %v2113 = vld [vmem:[%s2092 + $0xa0] sm:$0xff]
  %v2114 = vld [vmem:[%s2092 + $0xa8] sm:$0xff]
  %v2115 = vld [vmem:[%s2092 + $0xb0] sm:$0xff]
  %v2116 = vld [vmem:[%s2092 + $0xb8] sm:$0xff]
  %v2117 = vld [vmem:[%s2092 + $0xc0] sm:$0xff]
  %v2118 = vld [vmem:[%s2092 + $0xc8] sm:$0xff]
  %v2119 = vld [vmem:[%s2092 + $0xd0] sm:$0xff]
  %v2120 = vld [vmem:[%s2092 + $0xd8] sm:$0xff]
  %v2121 = vld [vmem:[%s2092 + $0xe0] sm:$0xff]
  %v2122 = vld [vmem:[%s2092 + $0xe8] sm:$0xff]
  %v2123 = vld [vmem:[%s2092 + $0xf0] sm:$0xff]
  %v2124 = vld [vmem:[%s2092 + $0xf8] sm:$0xff]
  %v2125 = vld [vmem:[%s2092 + $0x100] sm:$0xff]
  %v2126 = vld [vmem:[%s2092 + $0x108] sm:$0xff]
  %v2127 = vld [vmem:[%s2092 + $0x110] sm:$0xff]
  %v2128 = vld [vmem:[%s2092 + $0x118] sm:$0xff]
  %v2129 = vld [vmem:[%s2092 + $0x120] sm:$0xff]
  %v2130 = vld [vmem:[%s2092 + $0x128] sm:$0xff]
  %v2131 = vld [vmem:[%s2092 + $0x130] sm:$0xff]
  %v2132 = vld [vmem:[%s2092 + $0x138] sm:$0xff]
  %v2133 = vld [vmem:[%s2092 + $0x140] sm:$0xff]
  %v2134 = vld [vmem:[%s2092 + $0x148] sm:$0xff]
  %v2135 = vld [vmem:[%s2092 + $0x150] sm:$0xff]
  %v2136 = vld [vmem:[%s2092 + $0x158] sm:$0xff]
  %v2137 = vld [vmem:[%s2092 + $0x160] sm:$0xff]
  %v2138 = vld [vmem:[%s2092 + $0x168] sm:$0xff]
  %v2139 = vld [vmem:[%s2092 + $0x170] sm:$0xff]
  %v2140 = vld [vmem:[%s2092 + $0x178] sm:$0xff]
  %s2141 = scalar_lea.vmem %s4, 3
  %v2142 = vld [vmem:[%s2141] sm:$0x7]
  %v2144 = vlaneseq
  %v2145 = vshrl.u32 %v2144, 7
  %v2146 = vsub.s32 0, %v2145
  %v2147 = vrot.slane %v2142, %v2146
  %v2148 = vlaneseq
  %v2149 = vshrl.u32 %v2148, 7
  %v2150 = vsub.s32 1, %v2149
  %v2151 = vrot.slane %v2142, %v2150
  %v2152 = vlaneseq
  %v2153 = vshrl.u32 %v2152, 7
  %v2154 = vsub.s32 2, %v2153
  %v2155 = vrot.slane %v2142, %v2154
  %s2159 = scalar_lea.vmem [#allocation4], 8
  %v2160 = vld [vmem:[%s2159] sm:$0xff]
  %v2161 = vld [vmem:[%s417] sm:$0xff]
  %v2162 = vld [vmem:[%s417 + $0x8] sm:$0xff]
  %v2163 = vld [vmem:[%s417 + $0x10] sm:$0xff]
  %2164 = vmatprep.subr.mxu0 %v2094
  %2165 = vmatpush1.msra.mxu0 %v2093
  %2166 = vmatprep.subr.mxu0 %v2097
  %2167 = vmatpush1.msra.mxu0 %v2096
  %2168 = vmatprep.subr.mxu0 %v2100
  %2169 = vmatpush1.msra.mxu0 %v2099
  %2170 = vmatprep.subr.mxu0 %v2103
  %2171 = vmatpush1.msra.mxu0 %v2102
  %2172 = vmatprep.subr.mxu0 %v2106
  %2173 = vmatpush1.msra.mxu0 %v2105
  %2174 = vmatprep.subr.mxu0 %v2109
  %2175 = vmatpush1.msra.mxu0 %v2108
  %2176 = vmatprep.subr.mxu0 %v2112
  %2177 = vmatpush1.msra.mxu0 %v2111
  %2178 = vmatprep.subr.mxu0 %v2115
  %2179 = vmatpush1.msra.mxu0 %v2114
  %2180 = vmatprep.subr.mxu0 %v2118
  %2181 = vmatpush1.msra.mxu0 %v2117
  %2182 = vmatprep.subr.mxu0 %v2121
  %2183 = vmatpush1.msra.mxu0 %v2120
  %2184 = vmatprep.subr.mxu0 %v2124
  %2185 = vmatpush1.msra.mxu0 %v2123
  %2186 = vmatprep.subr.mxu0 %v2127
  %2187 = vmatpush1.msra.mxu0 %v2126
  %2188 = vmatprep.subr.mxu0 %v2130
  %2189 = vmatpush1.msra.mxu0 %v2129
  %2190 = vmatprep.subr.mxu0 %v2133
  %2191 = vmatpush1.msra.mxu0 %v2132
  %2192 = vmatprep.subr.mxu0 %v2136
  %2193 = vmatpush1.msra.mxu0 %v2135
  %2194 = vmatprep.subr.mxu0 %v2139
  %2195 = vmatpush1.msra.mxu0 %v2138
  %2196 = vmatprep.subr.mxu0 0.0
  %2197 = vmatpush1.msra.mxu0 0.0
  %2198 = vmatprep.subr.mxu0 0.0
  %2199 = vmatpush1.msra.mxu0 0.0
  %2200 = vmatprep.subr.mxu0 0.0
  %2201 = vmatpush1.msra.mxu0 0.0
  %2202 = vmatprep.subr.mxu0 0.0
  %2203 = vmatpush1.msra.mxu0 0.0
  %2204 = vmatprep.subr.mxu0 0.0
  %2205 = vmatpush1.msra.mxu0 0.0
  %2206 = vmatprep.subr.mxu0 0.0
  %2207 = vmatpush1.msra.mxu0 0.0
  %2208 = vmatprep.subr.mxu0 0.0
  %2209 = vmatpush1.msra.mxu0 0.0
  %2210 = vmatprep.subr.mxu0 0.0
  %2211 = vmatpush1.msra.mxu0 0.0
  %2212 = vmatprep.subr.mxu0 0.0
  %2213 = vmatpush1.msra.mxu0 0.0
  %2214 = vmatprep.subr.mxu0 0.0
  %2215 = vmatpush1.msra.mxu0 0.0
  %2216 = vmatprep.subr.mxu0 0.0
  %2217 = vmatpush1.msra.mxu0 0.0
  %2218 = vmatprep.subr.mxu0 0.0
  %2219 = vmatpush1.msra.mxu0 0.0
  %2220 = vmatprep.subr.mxu0 0.0
  %2221 = vmatpush1.msra.mxu0 0.0
  %2222 = vmatprep.subr.mxu0 0.0
  %2223 = vmatpush1.msra.mxu0 0.0
  %2224 = vmatprep.subr.mxu0 0.0
  %2225 = vmatpush1.msra.mxu0 0.0
  %2226 = vmatprep.subr.mxu0 0.0
  %2227 = vmatpush1.msra.mxu0 0.0
  %2228 = vmatprep.mubr.f32.mxu0 0.0
  %2229 = vmatmul.mubr.f32.gmra.mrb[0].mxu0 %v2160
  %v2230 = vpop.f32.mrb[0].mxu0
  %v2231 = vadd.f32 %v2147, %v2230
  %v2232 = vpop.f32.mrb[0].mxu0
  %v2233 = vadd.f32 %v2151, %v2232
  %2234 = vdwg.mxu0
  %2235 = vmatprep.subr.mxu0 0.0
  %2236 = vmatpush1.msra.mxu0 %v2095
  %2237 = vmatprep.subr.mxu0 0.0
  %2238 = vmatpush1.msra.mxu0 %v2098
  %2239 = vmatprep.subr.mxu0 0.0
  %2240 = vmatpush1.msra.mxu0 %v2101
  %2241 = vmatprep.subr.mxu0 0.0
  %2242 = vmatpush1.msra.mxu0 %v2104
  %2243 = vmatprep.subr.mxu0 0.0
  %2244 = vmatpush1.msra.mxu0 %v2107
  %2245 = vmatprep.subr.mxu0 0.0
  %2246 = vmatpush1.msra.mxu0 %v2110
  %2247 = vmatprep.subr.mxu0 0.0
  %2248 = vmatpush1.msra.mxu0 %v2113
  %2249 = vmatprep.subr.mxu0 0.0
  %2250 = vmatpush1.msra.mxu0 %v2116
  %2251 = vmatprep.subr.mxu0 0.0
  %2252 = vmatpush1.msra.mxu0 %v2119
  %2253 = vmatprep.subr.mxu0 0.0
  %2254 = vmatpush1.msra.mxu0 %v2122
  %2255 = vmatprep.subr.mxu0 0.0
  %2256 = vmatpush1.msra.mxu0 %v2125
  %2257 = vmatprep.subr.mxu0 0.0
  %2258 = vmatpush1.msra.mxu0 %v2128
  %2259 = vmatprep.subr.mxu0 0.0
  %2260 = vmatpush1.msra.mxu0 %v2131
  %2261 = vmatprep.subr.mxu0 0.0
  %2262 = vmatpush1.msra.mxu0 %v2134
  %2263 = vmatprep.subr.mxu0 0.0
  %2264 = vmatpush1.msra.mxu0 %v2137
  %2265 = vmatprep.subr.mxu0 0.0
  %2266 = vmatpush1.msra.mxu0 %v2140
  %2267 = vmatprep.subr.mxu0 0.0
  %2268 = vmatpush1.msra.mxu0 0.0
  %2269 = vmatprep.subr.mxu0 0.0
  %2270 = vmatpush1.msra.mxu0 0.0
  %2271 = vmatprep.subr.mxu0 0.0
  %2272 = vmatpush1.msra.mxu0 0.0
  %2273 = vmatprep.subr.mxu0 0.0
  %2274 = vmatpush1.msra.mxu0 0.0
  %2275 = vmatprep.subr.mxu0 0.0
  %2276 = vmatpush1.msra.mxu0 0.0
  %2277 = vmatprep.subr.mxu0 0.0
  %2278 = vmatpush1.msra.mxu0 0.0
  %2279 = vmatprep.subr.mxu0 0.0
  %2280 = vmatpush1.msra.mxu0 0.0
  %2281 = vmatprep.subr.mxu0 0.0
  %2282 = vmatpush1.msra.mxu0 0.0
  %2283 = vmatprep.subr.mxu0 0.0
  %2284 = vmatpush1.msra.mxu0 0.0
  %2285 = vmatprep.subr.mxu0 0.0
  %2286 = vmatpush1.msra.mxu0 0.0
  %2287 = vmatprep.subr.mxu0 0.0
  %2288 = vmatpush1.msra.mxu0 0.0
  %2289 = vmatprep.subr.mxu0 0.0
  %2290 = vmatpush1.msra.mxu0 0.0
  %2291 = vmatprep.subr.mxu0 0.0
  %2292 = vmatpush1.msra.mxu0 0.0
  %2293 = vmatprep.subr.mxu0 0.0
  %2294 = vmatpush1.msra.mxu0 0.0
  %2295 = vmatprep.subr.mxu0 0.0
  %2296 = vmatpush1.msra.mxu0 0.0
  %2297 = vmatprep.subr.mxu0 0.0
  %2298 = vmatpush1.msra.mxu0 0.0
  %2299 = vmatprep.mubr.f32.mxu0 0.0
  %2300 = vmatmul.mubr.f32.gmra.mrb[0].mxu0 %v2160
  %v2301 = vpop.f32.mrb[0].mxu0
  %v2302 = vadd.f32 %v2155, %v2301
  %v2303 = vpop.f32.mrb[0].mxu0
  %2304 = vdwg.mxu0
  %v2305 = vadd.f32 %v2161, %v2231
  %v2306 = vxor.u32 %v2305, 2147483648
  %v2307 = vmul.f32 %v2306, 1.442695
  %v2308 = vpow.pop %v2307
  %v2309 = vadd.f32 %v2308, 1.0
  %v2310 = vrcp.pop %v2309
  %v2311 = vmul.f32 1.0, %v2310
  %v2312 = vadd.f32 %v2162, %v2233
  %v2313 = vxor.u32 %v2312, 2147483648
  %v2314 = vmul.f32 %v2313, 1.442695
  %v2315 = vpow.pop %v2314
  %v2316 = vadd.f32 %v2315, 1.0
  %v2317 = vrcp.pop %v2316
  %v2318 = vmul.f32 1.0, %v2317
  %v2319 = vmul.f32 %v2311, %v2302
  %v2320 = vadd.f32 %v2163, %v2319
  %v2321 = vtanh.pop %v2320
  %v2322 = vsub.f32 1.0, %v2318
  %v2323 = vmul.f32 %v2322, %v2321
  %v2324 = vmul.f32 %v2318, %v2160
  %v2325 = vadd.f32 %v2323, %v2324
  %2326 = vst [vmem:[#allocation3] sm:$0xff] %v2325
  %v2327 = vld [vmem:[%s586] sm:$0xff]
  %v2328 = vld [vmem:[%s586 + $0x8] sm:$0xff]
  %v2329 = vld [vmem:[%s586 + $0x10] sm:$0xff]
  %2330 = vmatprep.subr.mxu0 %v2094
  %2331 = vmatpush1.msra.mxu0 %v2093
  %2332 = vmatprep.subr.mxu0 %v2097
  %2333 = vmatpush1.msra.mxu0 %v2096
  %2334 = vmatprep.subr.mxu0 %v2100
  %2335 = vmatpush1.msra.mxu0 %v2099
  %2336 = vmatprep.subr.mxu0 %v2103
  %2337 = vmatpush1.msra.mxu0 %v2102
  %2338 = vmatprep.subr.mxu0 %v2106
  %2339 = vmatpush1.msra.mxu0 %v2105
  %2340 = vmatprep.subr.mxu0 %v2109
  %2341 = vmatpush1.msra.mxu0 %v2108
  %2342 = vmatprep.subr.mxu0 %v2112
  %2343 = vmatpush1.msra.mxu0 %v2111
  %2344 = vmatprep.subr.mxu0 %v2115
  %2345 = vmatpush1.msra.mxu0 %v2114
  %2346 = vmatprep.subr.mxu0 %v2118
  %2347 = vmatpush1.msra.mxu0 %v2117
  %2348 = vmatprep.subr.mxu0 %v2121
  %2349 = vmatpush1.msra.mxu0 %v2120
  %2350 = vmatprep.subr.mxu0 %v2124
  %2351 = vmatpush1.msra.mxu0 %v2123
  %2352 = vmatprep.subr.mxu0 %v2127
  %2353 = vmatpush1.msra.mxu0 %v2126
  %2354 = vmatprep.subr.mxu0 %v2130
  %2355 = vmatpush1.msra.mxu0 %v2129
  %2356 = vmatprep.subr.mxu0 %v2133
  %2357 = vmatpush1.msra.mxu0 %v2132
  %2358 = vmatprep.subr.mxu0 %v2136
  %2359 = vmatpush1.msra.mxu0 %v2135
  %2360 = vmatprep.subr.mxu0 %v2139
  %2361 = vmatpush1.msra.mxu0 %v2138
  %2362 = vmatprep.subr.mxu0 0.0
  %2363 = vmatpush1.msra.mxu0 0.0
  %2364 = vmatprep.subr.mxu0 0.0
  %2365 = vmatpush1.msra.mxu0 0.0
  %2366 = vmatprep.subr.mxu0 0.0
  %2367 = vmatpush1.msra.mxu0 0.0
  %2368 = vmatprep.subr.mxu0 0.0
  %2369 = vmatpush1.msra.mxu0 0.0
  %2370 = vmatprep.subr.mxu0 0.0
  %2371 = vmatpush1.msra.mxu0 0.0
  %2372 = vmatprep.subr.mxu0 0.0
  %2373 = vmatpush1.msra.mxu0 0.0
  %2374 = vmatprep.subr.mxu0 0.0
  %2375 = vmatpush1.msra.mxu0 0.0
  %2376 = vmatprep.subr.mxu0 0.0
  %2377 = vmatpush1.msra.mxu0 0.0
  %2378 = vmatprep.subr.mxu0 0.0
  %2379 = vmatpush1.msra.mxu0 0.0
  %2380 = vmatprep.subr.mxu0 0.0
  %2381 = vmatpush1.msra.mxu0 0.0
  %2382 = vmatprep.subr.mxu0 0.0
  %2383 = vmatpush1.msra.mxu0 0.0
  %2384 = vmatprep.subr.mxu0 0.0
  %2385 = vmatpush1.msra.mxu0 0.0
  %2386 = vmatprep.subr.mxu0 0.0
  %2387 = vmatpush1.msra.mxu0 0.0
  %2388 = vmatprep.subr.mxu0 0.0
  %2389 = vmatpush1.msra.mxu0 0.0
  %2390 = vmatprep.subr.mxu0 0.0
  %2391 = vmatpush1.msra.mxu0 0.0
  %2392 = vmatprep.subr.mxu0 0.0
  %2393 = vmatpush1.msra.mxu0 0.0
  %2394 = vmatprep.mubr.f32.mxu0 0.0
  %2395 = vmatmul.mubr.f32.gmra.mrb[0].mxu0 %v2325
  %v2396 = vpop.f32.mrb[0].mxu0
  %v2397 = vadd.f32 %v2147, %v2396
  %v2398 = vpop.f32.mrb[0].mxu0
  %v2399 = vadd.f32 %v2151, %v2398
  %2400 = vdwg.mxu0
  %2401 = vmatprep.subr.mxu0 0.0
  %2402 = vmatpush1.msra.mxu0 %v2095
  %2403 = vmatprep.subr.mxu0 0.0
  %2404 = vmatpush1.msra.mxu0 %v2098
  %2405 = vmatprep.subr.mxu0 0.0
  %2406 = vmatpush1.msra.mxu0 %v2101
  %2407 = vmatprep.subr.mxu0 0.0
  %2408 = vmatpush1.msra.mxu0 %v2104
  %2409 = vmatprep.subr.mxu0 0.0
  %2410 = vmatpush1.msra.mxu0 %v2107
  %2411 = vmatprep.subr.mxu0 0.0
  %2412 = vmatpush1.msra.mxu0 %v2110
  %2413 = vmatprep.subr.mxu0 0.0
  %2414 = vmatpush1.msra.mxu0 %v2113
  %2415 = vmatprep.subr.mxu0 0.0
  %2416 = vmatpush1.msra.mxu0 %v2116
  %2417 = vmatprep.subr.mxu0 0.0
  %2418 = vmatpush1.msra.mxu0 %v2119
  %2419 = vmatprep.subr.mxu0 0.0
  %2420 = vmatpush1.msra.mxu0 %v2122
  %2421 = vmatprep.subr.mxu0 0.0
  %2422 = vmatpush1.msra.mxu0 %v2125
  %2423 = vmatprep.subr.mxu0 0.0
  %2424 = vmatpush1.msra.mxu0 %v2128
  %2425 = vmatprep.subr.mxu0 0.0
  %2426 = vmatpush1.msra.mxu0 %v2131
  %2427 = vmatprep.subr.mxu0 0.0
  %2428 = vmatpush1.msra.mxu0 %v2134
  %2429 = vmatprep.subr.mxu0 0.0
  %2430 = vmatpush1.msra.mxu0 %v2137
  %2431 = vmatprep.subr.mxu0 0.0
  %2432 = vmatpush1.msra.mxu0 %v2140
  %2433 = vmatprep.subr.mxu0 0.0
  %2434 = vmatpush1.msra.mxu0 0.0
  %2435 = vmatprep.subr.mxu0 0.0
  %2436 = vmatpush1.msra.mxu0 0.0
  %2437 = vmatprep.subr.mxu0 0.0
  %2438 = vmatpush1.msra.mxu0 0.0
  %2439 = vmatprep.subr.mxu0 0.0
  %2440 = vmatpush1.msra.mxu0 0.0
  %2441 = vmatprep.subr.mxu0 0.0
  %2442 = vmatpush1.msra.mxu0 0.0
  %2443 = vmatprep.subr.mxu0 0.0
  %2444 = vmatpush1.msra.mxu0 0.0
  %2445 = vmatprep.subr.mxu0 0.0
  %2446 = vmatpush1.msra.mxu0 0.0
  %2447 = vmatprep.subr.mxu0 0.0
  %2448 = vmatpush1.msra.mxu0 0.0
  %2449 = vmatprep.subr.mxu0 0.0
  %2450 = vmatpush1.msra.mxu0 0.0
  %2451 = vmatprep.subr.mxu0 0.0
  %2452 = vmatpush1.msra.mxu0 0.0
  %2453 = vmatprep.subr.mxu0 0.0
  %2454 = vmatpush1.msra.mxu0 0.0
  %2455 = vmatprep.subr.mxu0 0.0
  %2456 = vmatpush1.msra.mxu0 0.0
  %2457 = vmatprep.subr.mxu0 0.0
  %2458 = vmatpush1.msra.mxu0 0.0
  %2459 = vmatprep.subr.mxu0 0.0
  %2460 = vmatpush1.msra.mxu0 0.0
  %2461 = vmatprep.subr.mxu0 0.0
  %2462 = vmatpush1.msra.mxu0 0.0
  %2463 = vmatprep.subr.mxu0 0.0
  %2464 = vmatpush1.msra.mxu0 0.0
  %2465 = vmatprep.mubr.f32.mxu0 0.0
  %2466 = vmatmul.mubr.f32.gmra.mrb[0].mxu0 %v2325
  %v2467 = vpop.f32.mrb[0].mxu0
  %v2468 = vadd.f32 %v2155, %v2467
  %v2469 = vpop.f32.mrb[0].mxu0
  %2470 = vdwg.mxu0
  %v2471 = vadd.f32 %v2327, %v2397
  %v2472 = vxor.u32 %v2471, 2147483648
  %v2473 = vmul.f32 %v2472, 1.442695
  %v2474 = vpow.pop %v2473
  %v2475 = vadd.f32 %v2474, 1.0
  %v2476 = vrcp.pop %v2475
  %v2477 = vmul.f32 1.0, %v2476
  %v2478 = vadd.f32 %v2328, %v2399
  %v2479 = vxor.u32 %v2478, 2147483648
  %v2480 = vmul.f32 %v2479, 1.442695
  %v2481 = vpow.pop %v2480
  %v2482 = vadd.f32 %v2481, 1.0
  %v2483 = vrcp.pop %v2482
  %v2484 = vmul.f32 1.0, %v2483
  %v2485 = vmul.f32 %v2477, %v2468
  %v2486 = vadd.f32 %v2329, %v2485
  %v2487 = vtanh.pop %v2486
  %v2488 = vsub.f32 1.0, %v2484
  %v2489 = vmul.f32 %v2488, %v2487
  %v2490 = vmul.f32 %v2484, %v2325
  %v2491 = vadd.f32 %v2489, %v2490
  %2492 = vst [vmem:[%s752] sm:$0xff] %v2491
  %v2493 = vld [vmem:[%s756] sm:$0xff]
  %v2494 = vld [vmem:[%s756 + $0x8] sm:$0xff]
  %v2495 = vld [vmem:[%s756 + $0x10] sm:$0xff]
  %2496 = vmatprep.subr.mxu0 %v2094
  %2497 = vmatpush1.msra.mxu0 %v2093
  %2498 = vmatprep.subr.mxu0 %v2097
  %2499 = vmatpush1.msra.mxu0 %v2096
  %2500 = vmatprep.subr.mxu0 %v2100
  %2501 = vmatpush1.msra.mxu0 %v2099
  %2502 = vmatprep.subr.mxu0 %v2103
  %2503 = vmatpush1.msra.mxu0 %v2102
  %2504 = vmatprep.subr.mxu0 %v2106
  %2505 = vmatpush1.msra.mxu0 %v2105
  %2506 = vmatprep.subr.mxu0 %v2109
  %2507 = vmatpush1.msra.mxu0 %v2108
  %2508 = vmatprep.subr.mxu0 %v2112
  %2509 = vmatpush1.msra.mxu0 %v2111
  %2510 = vmatprep.subr.mxu0 %v2115
  %2511 = vmatpush1.msra.mxu0 %v2114
  %2512 = vmatprep.subr.mxu0 %v2118
  %2513 = vmatpush1.msra.mxu0 %v2117
  %2514 = vmatprep.subr.mxu0 %v2121
  %2515 = vmatpush1.msra.mxu0 %v2120
  %2516 = vmatprep.subr.mxu0 %v2124
  %2517 = vmatpush1.msra.mxu0 %v2123
  %2518 = vmatprep.subr.mxu0 %v2127
  %2519 = vmatpush1.msra.mxu0 %v2126
  %2520 = vmatprep.subr.mxu0 %v2130
  %2521 = vmatpush1.msra.mxu0 %v2129
  %2522 = vmatprep.subr.mxu0 %v2133
  %2523 = vmatpush1.msra.mxu0 %v2132
  %2524 = vmatprep.subr.mxu0 %v2136
  %2525 = vmatpush1.msra.mxu0 %v2135
  %2526 = vmatprep.subr.mxu0 %v2139
  %2527 = vmatpush1.msra.mxu0 %v2138
  %2528 = vmatprep.subr.mxu0 0.0
  %2529 = vmatpush1.msra.mxu0 0.0
  %2530 = vmatprep.subr.mxu0 0.0
  %2531 = vmatpush1.msra.mxu0 0.0
  %2532 = vmatprep.subr.mxu0 0.0
  %2533 = vmatpush1.msra.mxu0 0.0
  %2534 = vmatprep.subr.mxu0 0.0
  %2535 = vmatpush1.msra.mxu0 0.0
  %2536 = vmatprep.subr.mxu0 0.0
  %2537 = vmatpush1.msra.mxu0 0.0
  %2538 = vmatprep.subr.mxu0 0.0
  %2539 = vmatpush1.msra.mxu0 0.0
  %2540 = vmatprep.subr.mxu0 0.0
  %2541 = vmatpush1.msra.mxu0 0.0
  %2542 = vmatprep.subr.mxu0 0.0
  %2543 = vmatpush1.msra.mxu0 0.0
  %2544 = vmatprep.subr.mxu0 0.0
  %2545 = vmatpush1.msra.mxu0 0.0
  %2546 = vmatprep.subr.mxu0 0.0
  %2547 = vmatpush1.msra.mxu0 0.0
  %2548 = vmatprep.subr.mxu0 0.0
  %2549 = vmatpush1.msra.mxu0 0.0
  %2550 = vmatprep.subr.mxu0 0.0
  %2551 = vmatpush1.msra.mxu0 0.0
  %2552 = vmatprep.subr.mxu0 0.0
  %2553 = vmatpush1.msra.mxu0 0.0
  %2554 = vmatprep.subr.mxu0 0.0
  %2555 = vmatpush1.msra.mxu0 0.0
  %2556 = vmatprep.subr.mxu0 0.0
  %2557 = vmatpush1.msra.mxu0 0.0
  %2558 = vmatprep.subr.mxu0 0.0
  %2559 = vmatpush1.msra.mxu0 0.0
  %2560 = vmatprep.mubr.f32.mxu0 0.0
  %2561 = vmatmul.mubr.f32.gmra.mrb[0].mxu0 %v2491
  %v2562 = vpop.f32.mrb[0].mxu0
  %v2563 = vadd.f32 %v2147, %v2562
  %v2564 = vpop.f32.mrb[0].mxu0
  %v2565 = vadd.f32 %v2151, %v2564
  %2566 = vdwg.mxu0
  %2567 = vmatprep.subr.mxu0 0.0
  %2568 = vmatpush1.msra.mxu0 %v2095
  %2569 = vmatprep.subr.mxu0 0.0
  %2570 = vmatpush1.msra.mxu0 %v2098
  %2571 = vmatprep.subr.mxu0 0.0
  %2572 = vmatpush1.msra.mxu0 %v2101
  %2573 = vmatprep.subr.mxu0 0.0
  %2574 = vmatpush1.msra.mxu0 %v2104
  %2575 = vmatprep.subr.mxu0 0.0
  %2576 = vmatpush1.msra.mxu0 %v2107
  %2577 = vmatprep.subr.mxu0 0.0
  %2578 = vmatpush1.msra.mxu0 %v2110
  %2579 = vmatprep.subr.mxu0 0.0
  %2580 = vmatpush1.msra.mxu0 %v2113
  %2581 = vmatprep.subr.mxu0 0.0
  %2582 = vmatpush1.msra.mxu0 %v2116
  %2583 = vmatprep.subr.mxu0 0.0
  %2584 = vmatpush1.msra.mxu0 %v2119
  %2585 = vmatprep.subr.mxu0 0.0
  %2586 = vmatpush1.msra.mxu0 %v2122
  %2587 = vmatprep.subr.mxu0 0.0
  %2588 = vmatpush1.msra.mxu0 %v2125
  %2589 = vmatprep.subr.mxu0 0.0
  %2590 = vmatpush1.msra.mxu0 %v2128
  %2591 = vmatprep.subr.mxu0 0.0
  %2592 = vmatpush1.msra.mxu0 %v2131
  %2593 = vmatprep.subr.mxu0 0.0
  %2594 = vmatpush1.msra.mxu0 %v2134
  %2595 = vmatprep.subr.mxu0 0.0
  %2596 = vmatpush1.msra.mxu0 %v2137
  %2597 = vmatprep.subr.mxu0 0.0
  %2598 = vmatpush1.msra.mxu0 %v2140
  %2599 = vmatprep.subr.mxu0 0.0
  %2600 = vmatpush1.msra.mxu0 0.0
  %2601 = vmatprep.subr.mxu0 0.0
  %2602 = vmatpush1.msra.mxu0 0.0
  %2603 = vmatprep.subr.mxu0 0.0
  %2604 = vmatpush1.msra.mxu0 0.0
  %2605 = vmatprep.subr.mxu0 0.0
  %2606 = vmatpush1.msra.mxu0 0.0
  %2607 = vmatprep.subr.mxu0 0.0
  %2608 = vmatpush1.msra.mxu0 0.0
  %2609 = vmatprep.subr.mxu0 0.0
  %2610 = vmatpush1.msra.mxu0 0.0
  %2611 = vmatprep.subr.mxu0 0.0
  %2612 = vmatpush1.msra.mxu0 0.0
  %2613 = vmatprep.subr.mxu0 0.0
  %2614 = vmatpush1.msra.mxu0 0.0
  %2615 = vmatprep.subr.mxu0 0.0
  %2616 = vmatpush1.msra.mxu0 0.0
  %2617 = vmatprep.subr.mxu0 0.0
  %2618 = vmatpush1.msra.mxu0 0.0
  %2619 = vmatprep.subr.mxu0 0.0
  %2620 = vmatpush1.msra.mxu0 0.0
  %2621 = vmatprep.subr.mxu0 0.0
  %2622 = vmatpush1.msra.mxu0 0.0
  %2623 = vmatprep.subr.mxu0 0.0
  %2624 = vmatpush1.msra.mxu0 0.0
  %2625 = vmatprep.subr.mxu0 0.0
  %2626 = vmatpush1.msra.mxu0 0.0
  %2627 = vmatprep.subr.mxu0 0.0
  %2628 = vmatpush1.msra.mxu0 0.0
  %2629 = vmatprep.subr.mxu0 0.0
  %2630 = vmatpush1.msra.mxu0 0.0
  %2631 = vmatprep.mubr.f32.mxu0 0.0
  %2632 = vmatmul.mubr.f32.gmra.mrb[0].mxu0 %v2491
  %v2633 = vpop.f32.mrb[0].mxu0
  %v2634 = vadd.f32 %v2155, %v2633
  %v2635 = vpop.f32.mrb[0].mxu0
  %2636 = vdwg.mxu0
  %v2637 = vadd.f32 %v2493, %v2563
  %v2638 = vxor.u32 %v2637, 2147483648
  %v2639 = vmul.f32 %v2638, 1.442695
  %v2640 = vpow.pop %v2639
  %v2641 = vadd.f32 %v2640, 1.0
  %v2642 = vrcp.pop %v2641
  %v2643 = vmul.f32 1.0, %v2642
  %v2644 = vadd.f32 %v2494, %v2565
  %v2645 = vxor.u32 %v2644, 2147483648
  %v2646 = vmul.f32 %v2645, 1.442695
  %v2647 = vpow.pop %v2646
  %v2648 = vadd.f32 %v2647, 1.0
  %v2649 = vrcp.pop %v2648
  %v2650 = vmul.f32 1.0, %v2649
  %v2651 = vmul.f32 %v2643, %v2634
  %v2652 = vadd.f32 %v2495, %v2651
  %v2653 = vtanh.pop %v2652
  %v2654 = vsub.f32 1.0, %v2650
  %v2655 = vmul.f32 %v2654, %v2653
  %v2656 = vmul.f32 %v2650, %v2491
  %v2657 = vadd.f32 %v2655, %v2656
  %2658 = vst [vmem:[%s922] sm:$0xff] %v2657
  %v2659 = vld [vmem:[%s926] sm:$0xff]
  %v2660 = vld [vmem:[%s926 + $0x8] sm:$0xff]
  %v2661 = vld [vmem:[%s926 + $0x10] sm:$0xff]
  %2662 = vmatprep.subr.mxu0 %v2094
  %2663 = vmatpush1.msra.mxu0 %v2093
  %2664 = vmatprep.subr.mxu0 %v2097
  %2665 = vmatpush1.msra.mxu0 %v2096
  %2666 = vmatprep.subr.mxu0 %v2100
  %2667 = vmatpush1.msra.mxu0 %v2099
  %2668 = vmatprep.subr.mxu0 %v2103
  %2669 = vmatpush1.msra.mxu0 %v2102
  %2670 = vmatprep.subr.mxu0 %v2106
  %2671 = vmatpush1.msra.mxu0 %v2105
  %2672 = vmatprep.subr.mxu0 %v2109
  %2673 = vmatpush1.msra.mxu0 %v2108
  %2674 = vmatprep.subr.mxu0 %v2112
  %2675 = vmatpush1.msra.mxu0 %v2111
  %2676 = vmatprep.subr.mxu0 %v2115
  %2677 = vmatpush1.msra.mxu0 %v2114
  %2678 = vmatprep.subr.mxu0 %v2118
  %2679 = vmatpush1.msra.mxu0 %v2117
  %2680 = vmatprep.subr.mxu0 %v2121
  %2681 = vmatpush1.msra.mxu0 %v2120
  %2682 = vmatprep.subr.mxu0 %v2124
  %2683 = vmatpush1.msra.mxu0 %v2123
  %2684 = vmatprep.subr.mxu0 %v2127
  %2685 = vmatpush1.msra.mxu0 %v2126
  %2686 = vmatprep.subr.mxu0 %v2130
  %2687 = vmatpush1.msra.mxu0 %v2129
  %2688 = vmatprep.subr.mxu0 %v2133
  %2689 = vmatpush1.msra.mxu0 %v2132
  %2690 = vmatprep.subr.mxu0 %v2136
  %2691 = vmatpush1.msra.mxu0 %v2135
  %2692 = vmatprep.subr.mxu0 %v2139
  %2693 = vmatpush1.msra.mxu0 %v2138
  %2694 = vmatprep.subr.mxu0 0.0
  %2695 = vmatpush1.msra.mxu0 0.0
  %2696 = vmatprep.subr.mxu0 0.0
  %2697 = vmatpush1.msra.mxu0 0.0
  %2698 = vmatprep.subr.mxu0 0.0
  %2699 = vmatpush1.msra.mxu0 0.0
  %2700 = vmatprep.subr.mxu0 0.0
  %2701 = vmatpush1.msra.mxu0 0.0
  %2702 = vmatprep.subr.mxu0 0.0
  %2703 = vmatpush1.msra.mxu0 0.0
  %2704 = vmatprep.subr.mxu0 0.0
  %2705 = vmatpush1.msra.mxu0 0.0
  %2706 = vmatprep.subr.mxu0 0.0
  %2707 = vmatpush1.msra.mxu0 0.0
  %2708 = vmatprep.subr.mxu0 0.0
  %2709 = vmatpush1.msra.mxu0 0.0
  %2710 = vmatprep.subr.mxu0 0.0
  %2711 = vmatpush1.msra.mxu0 0.0
  %2712 = vmatprep.subr.mxu0 0.0
  %2713 = vmatpush1.msra.mxu0 0.0
  %2714 = vmatprep.subr.mxu0 0.0
  %2715 = vmatpush1.msra.mxu0 0.0
  %2716 = vmatprep.subr.mxu0 0.0
  %2717 = vmatpush1.msra.mxu0 0.0
  %2718 = vmatprep.subr.mxu0 0.0
  %2719 = vmatpush1.msra.mxu0 0.0
  %2720 = vmatprep.subr.mxu0 0.0
  %2721 = vmatpush1.msra.mxu0 0.0
  %2722 = vmatprep.subr.mxu0 0.0
  %2723 = vmatpush1.msra.mxu0 0.0
  %2724 = vmatprep.subr.mxu0 0.0
  %2725 = vmatpush1.msra.mxu0 0.0
  %2726 = vmatprep.mubr.f32.mxu0 0.0
  %2727 = vmatmul.mubr.f32.gmra.mrb[0].mxu0 %v2657
  %v2728 = vpop.f32.mrb[0].mxu0
  %v2729 = vadd.f32 %v2147, %v2728
  %v2730 = vpop.f32.mrb[0].mxu0
  %v2731 = vadd.f32 %v2151, %v2730
  %2732 = vdwg.mxu0
  %2733 = vmatprep.subr.mxu0 0.0
  %2734 = vmatpush1.msra.mxu0 %v2095
  %2735 = vmatprep.subr.mxu0 0.0
  %2736 = vmatpush1.msra.mxu0 %v2098
  %2737 = vmatprep.subr.mxu0 0.0
  %2738 = vmatpush1.msra.mxu0 %v2101
  %2739 = vmatprep.subr.mxu0 0.0
  %2740 = vmatpush1.msra.mxu0 %v2104
  %2741 = vmatprep.subr.mxu0 0.0
  %2742 = vmatpush1.msra.mxu0 %v2107
  %2743 = vmatprep.subr.mxu0 0.0
  %2744 = vmatpush1.msra.mxu0 %v2110
  %2745 = vmatprep.subr.mxu0 0.0
  %2746 = vmatpush1.msra.mxu0 %v2113
  %2747 = vmatprep.subr.mxu0 0.0
  %2748 = vmatpush1.msra.mxu0 %v2116
  %2749 = vmatprep.subr.mxu0 0.0
  %2750 = vmatpush1.msra.mxu0 %v2119
  %2751 = vmatprep.subr.mxu0 0.0
  %2752 = vmatpush1.msra.mxu0 %v2122
  %2753 = vmatprep.subr.mxu0 0.0
  %2754 = vmatpush1.msra.mxu0 %v2125
  %2755 = vmatprep.subr.mxu0 0.0
  %2756 = vmatpush1.msra.mxu0 %v2128
  %2757 = vmatprep.subr.mxu0 0.0
  %2758 = vmatpush1.msra.mxu0 %v2131
  %2759 = vmatprep.subr.mxu0 0.0
  %2760 = vmatpush1.msra.mxu0 %v2134
  %2761 = vmatprep.subr.mxu0 0.0
  %2762 = vmatpush1.msra.mxu0 %v2137
  %2763 = vmatprep.subr.mxu0 0.0
  %2764 = vmatpush1.msra.mxu0 %v2140
  %2765 = vmatprep.subr.mxu0 0.0
  %2766 = vmatpush1.msra.mxu0 0.0
  %2767 = vmatprep.subr.mxu0 0.0
  %2768 = vmatpush1.msra.mxu0 0.0
  %2769 = vmatprep.subr.mxu0 0.0
  %2770 = vmatpush1.msra.mxu0 0.0
  %2771 = vmatprep.subr.mxu0 0.0
  %2772 = vmatpush1.msra.mxu0 0.0
  %2773 = vmatprep.subr.mxu0 0.0
  %2774 = vmatpush1.msra.mxu0 0.0
  %2775 = vmatprep.subr.mxu0 0.0
  %2776 = vmatpush1.msra.mxu0 0.0
  %2777 = vmatprep.subr.mxu0 0.0
  %2778 = vmatpush1.msra.mxu0 0.0
  %2779 = vmatprep.subr.mxu0 0.0
  %2780 = vmatpush1.msra.mxu0 0.0
  %2781 = vmatprep.subr.mxu0 0.0
  %2782 = vmatpush1.msra.mxu0 0.0
  %2783 = vmatprep.subr.mxu0 0.0
  %2784 = vmatpush1.msra.mxu0 0.0
  %2785 = vmatprep.subr.mxu0 0.0
  %2786 = vmatpush1.msra.mxu0 0.0
  %2787 = vmatprep.subr.mxu0 0.0
  %2788 = vmatpush1.msra.mxu0 0.0
  %2789 = vmatprep.subr.mxu0 0.0
  %2790 = vmatpush1.msra.mxu0 0.0
  %2791 = vmatprep.subr.mxu0 0.0
  %2792 = vmatpush1.msra.mxu0 0.0
  %2793 = vmatprep.subr.mxu0 0.0
  %2794 = vmatpush1.msra.mxu0 0.0
  %2795 = vmatprep.subr.mxu0 0.0
  %2796 = vmatpush1.msra.mxu0 0.0
  %2797 = vmatprep.mubr.f32.mxu0 0.0
  %2798 = vmatmul.mubr.f32.gmra.mrb[0].mxu0 %v2657
  %v2799 = vpop.f32.mrb[0].mxu0
  %v2800 = vadd.f32 %v2155, %v2799
  %v2801 = vpop.f32.mrb[0].mxu0
  %2802 = vdwg.mxu0
  %v2803 = vadd.f32 %v2659, %v2729
  %v2804 = vxor.u32 %v2803, 2147483648
  %v2805 = vmul.f32 %v2804, 1.442695
  %v2806 = vpow.pop %v2805
  %v2807 = vadd.f32 %v2806, 1.0
  %v2808 = vrcp.pop %v2807
  %v2809 = vmul.f32 1.0, %v2808
  %v2810 = vadd.f32 %v2660, %v2731
  %v2811 = vxor.u32 %v2810, 2147483648
  %v2812 = vmul.f32 %v2811, 1.442695
  %v2813 = vpow.pop %v2812
  %v2814 = vadd.f32 %v2813, 1.0
  %v2815 = vrcp.pop %v2814
  %v2816 = vmul.f32 1.0, %v2815
  %v2817 = vmul.f32 %v2809, %v2800
  %v2818 = vadd.f32 %v2661, %v2817
  %v2819 = vtanh.pop %v2818
  %v2820 = vsub.f32 1.0, %v2816
  %v2821 = vmul.f32 %v2820, %v2819
  %v2822 = vmul.f32 %v2816, %v2657
  %v2823 = vadd.f32 %v2821, %v2822
  %2824 = vst [vmem:[%s1092] sm:$0xff] %v2823
  %v2825 = vld [vmem:[%s1096] sm:$0xff]
  %v2826 = vld [vmem:[%s1096 + $0x8] sm:$0xff]
  %v2827 = vld [vmem:[%s1096 + $0x10] sm:$0xff]
  %2828 = vmatprep.subr.mxu0 %v2094
  %2829 = vmatpush1.msra.mxu0 %v2093
  %2830 = vmatprep.subr.mxu0 %v2097
  %2831 = vmatpush1.msra.mxu0 %v2096
  %2832 = vmatprep.subr.mxu0 %v2100
  %2833 = vmatpush1.msra.mxu0 %v2099
  %2834 = vmatprep.subr.mxu0 %v2103
  %2835 = vmatpush1.msra.mxu0 %v2102
  %2836 = vmatprep.subr.mxu0 %v2106
  %2837 = vmatpush1.msra.mxu0 %v2105
  %2838 = vmatprep.subr.mxu0 %v2109
  %2839 = vmatpush1.msra.mxu0 %v2108
  %2840 = vmatprep.subr.mxu0 %v2112
  %2841 = vmatpush1.msra.mxu0 %v2111
  %2842 = vmatprep.subr.mxu0 %v2115
  %2843 = vmatpush1.msra.mxu0 %v2114
  %2844 = vmatprep.subr.mxu0 %v2118
  %2845 = vmatpush1.msra.mxu0 %v2117
  %2846 = vmatprep.subr.mxu0 %v2121
  %2847 = vmatpush1.msra.mxu0 %v2120
  %2848 = vmatprep.subr.mxu0 %v2124
  %2849 = vmatpush1.msra.mxu0 %v2123
  %2850 = vmatprep.subr.mxu0 %v2127
  %2851 = vmatpush1.msra.mxu0 %v2126
  %2852 = vmatprep.subr.mxu0 %v2130
  %2853 = vmatpush1.msra.mxu0 %v2129
  %2854 = vmatprep.subr.mxu0 %v2133
  %2855 = vmatpush1.msra.mxu0 %v2132
  %2856 = vmatprep.subr.mxu0 %v2136
  %2857 = vmatpush1.msra.mxu0 %v2135
  %2858 = vmatprep.subr.mxu0 %v2139
  %2859 = vmatpush1.msra.mxu0 %v2138
  %2860 = vmatprep.subr.mxu0 0.0
  %2861 = vmatpush1.msra.mxu0 0.0
  %2862 = vmatprep.subr.mxu0 0.0
  %2863 = vmatpush1.msra.mxu0 0.0
  %2864 = vmatprep.subr.mxu0 0.0
  %2865 = vmatpush1.msra.mxu0 0.0
  %2866 = vmatprep.subr.mxu0 0.0
  %2867 = vmatpush1.msra.mxu0 0.0
  %2868 = vmatprep.subr.mxu0 0.0
  %2869 = vmatpush1.msra.mxu0 0.0
  %2870 = vmatprep.subr.mxu0 0.0
  %2871 = vmatpush1.msra.mxu0 0.0
  %2872 = vmatprep.subr.mxu0 0.0
  %2873 = vmatpush1.msra.mxu0 0.0
  %2874 = vmatprep.subr.mxu0 0.0
  %2875 = vmatpush1.msra.mxu0 0.0
  %2876 = vmatprep.subr.mxu0 0.0
  %2877 = vmatpush1.msra.mxu0 0.0
  %2878 = vmatprep.subr.mxu0 0.0
  %2879 = vmatpush1.msra.mxu0 0.0
  %2880 = vmatprep.subr.mxu0 0.0
  %2881 = vmatpush1.msra.mxu0 0.0
  %2882 = vmatprep.subr.mxu0 0.0
  %2883 = vmatpush1.msra.mxu0 0.0
  %2884 = vmatprep.subr.mxu0 0.0
  %2885 = vmatpush1.msra.mxu0 0.0
  %2886 = vmatprep.subr.mxu0 0.0
  %2887 = vmatpush1.msra.mxu0 0.0
  %2888 = vmatprep.subr.mxu0 0.0
  %2889 = vmatpush1.msra.mxu0 0.0
  %2890 = vmatprep.subr.mxu0 0.0
  %2891 = vmatpush1.msra.mxu0 0.0
  %2892 = vmatprep.mubr.f32.mxu0 0.0
  %2893 = vmatmul.mubr.f32.gmra.mrb[0].mxu0 %v2823
  %v2894 = vpop.f32.mrb[0].mxu0
  %v2895 = vadd.f32 %v2147, %v2894
  %v2896 = vpop.f32.mrb[0].mxu0
  %v2897 = vadd.f32 %v2151, %v2896
  %2898 = vdwg.mxu0
  %2899 = vmatprep.subr.mxu0 0.0
  %2900 = vmatpush1.msra.mxu0 %v2095
  %2901 = vmatprep.subr.mxu0 0.0
  %2902 = vmatpush1.msra.mxu0 %v2098
  %2903 = vmatprep.subr.mxu0 0.0
  %2904 = vmatpush1.msra.mxu0 %v2101
  %2905 = vmatprep.subr.mxu0 0.0
  %2906 = vmatpush1.msra.mxu0 %v2104
  %2907 = vmatprep.subr.mxu0 0.0
  %2908 = vmatpush1.msra.mxu0 %v2107
  %2909 = vmatprep.subr.mxu0 0.0
  %2910 = vmatpush1.msra.mxu0 %v2110
  %2911 = vmatprep.subr.mxu0 0.0
  %2912 = vmatpush1.msra.mxu0 %v2113
  %2913 = vmatprep.subr.mxu0 0.0
  %2914 = vmatpush1.msra.mxu0 %v2116
  %2915 = vmatprep.subr.mxu0 0.0
  %2916 = vmatpush1.msra.mxu0 %v2119
  %2917 = vmatprep.subr.mxu0 0.0
  %2918 = vmatpush1.msra.mxu0 %v2122
  %2919 = vmatprep.subr.mxu0 0.0
  %2920 = vmatpush1.msra.mxu0 %v2125
  %2921 = vmatprep.subr.mxu0 0.0
  %2922 = vmatpush1.msra.mxu0 %v2128
  %2923 = vmatprep.subr.mxu0 0.0
  %2924 = vmatpush1.msra.mxu0 %v2131
  %2925 = vmatprep.subr.mxu0 0.0
  %2926 = vmatpush1.msra.mxu0 %v2134
  %2927 = vmatprep.subr.mxu0 0.0
  %2928 = vmatpush1.msra.mxu0 %v2137
  %2929 = vmatprep.subr.mxu0 0.0
  %2930 = vmatpush1.msra.mxu0 %v2140
  %2931 = vmatprep.subr.mxu0 0.0
  %2932 = vmatpush1.msra.mxu0 0.0
  %2933 = vmatprep.subr.mxu0 0.0
  %2934 = vmatpush1.msra.mxu0 0.0
  %2935 = vmatprep.subr.mxu0 0.0
  %2936 = vmatpush1.msra.mxu0 0.0
  %2937 = vmatprep.subr.mxu0 0.0
  %2938 = vmatpush1.msra.mxu0 0.0
  %2939 = vmatprep.subr.mxu0 0.0
  %2940 = vmatpush1.msra.mxu0 0.0
  %2941 = vmatprep.subr.mxu0 0.0
  %2942 = vmatpush1.msra.mxu0 0.0
  %2943 = vmatprep.subr.mxu0 0.0
  %2944 = vmatpush1.msra.mxu0 0.0
  %2945 = vmatprep.subr.mxu0 0.0
  %2946 = vmatpush1.msra.mxu0 0.0
  %2947 = vmatprep.subr.mxu0 0.0
  %2948 = vmatpush1.msra.mxu0 0.0
  %2949 = vmatprep.subr.mxu0 0.0
  %2950 = vmatpush1.msra.mxu0 0.0
  %2951 = vmatprep.subr.mxu0 0.0
  %2952 = vmatpush1.msra.mxu0 0.0
  %2953 = vmatprep.subr.mxu0 0.0
  %2954 = vmatpush1.msra.mxu0 0.0
  %2955 = vmatprep.subr.mxu0 0.0
  %2956 = vmatpush1.msra.mxu0 0.0
  %2957 = vmatprep.subr.mxu0 0.0
  %2958 = vmatpush1.msra.mxu0 0.0
  %2959 = vmatprep.subr.mxu0 0.0
  %2960 = vmatpush1.msra.mxu0 0.0
  %2961 = vmatprep.subr.mxu0 0.0
  %2962 = vmatpush1.msra.mxu0 0.0
  %2963 = vmatprep.mubr.f32.mxu0 0.0
  %2964 = vmatmul.mubr.f32.gmra.mrb[0].mxu0 %v2823
  %v2965 = vpop.f32.mrb[0].mxu0
  %v2966 = vadd.f32 %v2155, %v2965
  %v2967 = vpop.f32.mrb[0].mxu0
  %2968 = vdwg.mxu0
  %v2969 = vadd.f32 %v2825, %v2895
  %v2970 = vxor.u32 %v2969, 2147483648
  %v2971 = vmul.f32 %v2970, 1.442695
  %v2972 = vpow.pop %v2971
  %v2973 = vadd.f32 %v2972, 1.0
  %v2974 = vrcp.pop %v2973
  %v2975 = vmul.f32 1.0, %v2974
  %v2976 = vadd.f32 %v2826, %v2897
  %v2977 = vxor.u32 %v2976, 2147483648
  %v2978 = vmul.f32 %v2977, 1.442695
  %v2979 = vpow.pop %v2978
  %v2980 = vadd.f32 %v2979, 1.0
  %v2981 = vrcp.pop %v2980
  %v2982 = vmul.f32 1.0, %v2981
  %v2983 = vmul.f32 %v2975, %v2966
  %v2984 = vadd.f32 %v2827, %v2983
  %v2985 = vtanh.pop %v2984
  %v2986 = vsub.f32 1.0, %v2982
  %v2987 = vmul.f32 %v2986, %v2985
  %v2988 = vmul.f32 %v2982, %v2823
  %v2989 = vadd.f32 %v2987, %v2988
  %2990 = vst [vmem:[%s1262] sm:$0xff] %v2989
  %v2991 = vld [vmem:[%s1266] sm:$0xff]
  %v2992 = vld [vmem:[%s1266 + $0x8] sm:$0xff]
  %v2993 = vld [vmem:[%s1266 + $0x10] sm:$0xff]
  %2994 = vmatprep.subr.mxu0 %v2094
  %2995 = vmatpush1.msra.mxu0 %v2093
  %2996 = vmatprep.subr.mxu0 %v2097
  %2997 = vmatpush1.msra.mxu0 %v2096
  %2998 = vmatprep.subr.mxu0 %v2100
  %2999 = vmatpush1.msra.mxu0 %v2099
  %3000 = vmatprep.subr.mxu0 %v2103
  %3001 = vmatpush1.msra.mxu0 %v2102
  %3002 = vmatprep.subr.mxu0 %v2106
  %3003 = vmatpush1.msra.mxu0 %v2105
  %3004 = vmatprep.subr.mxu0 %v2109
  %3005 = vmatpush1.msra.mxu0 %v2108
  %3006 = vmatprep.subr.mxu0 %v2112
  %3007 = vmatpush1.msra.mxu0 %v2111
  %3008 = vmatprep.subr.mxu0 %v2115
  %3009 = vmatpush1.msra.mxu0 %v2114
  %3010 = vmatprep.subr.mxu0 %v2118
  %3011 = vmatpush1.msra.mxu0 %v2117
  %3012 = vmatprep.subr.mxu0 %v2121
  %3013 = vmatpush1.msra.mxu0 %v2120
  %3014 = vmatprep.subr.mxu0 %v2124
  %3015 = vmatpush1.msra.mxu0 %v2123
  %3016 = vmatprep.subr.mxu0 %v2127
  %3017 = vmatpush1.msra.mxu0 %v2126
  %3018 = vmatprep.subr.mxu0 %v2130
  %3019 = vmatpush1.msra.mxu0 %v2129
  %3020 = vmatprep.subr.mxu0 %v2133
  %3021 = vmatpush1.msra.mxu0 %v2132
  %3022 = vmatprep.subr.mxu0 %v2136
  %3023 = vmatpush1.msra.mxu0 %v2135
  %3024 = vmatprep.subr.mxu0 %v2139
  %3025 = vmatpush1.msra.mxu0 %v2138
  %3026 = vmatprep.subr.mxu0 0.0
  %3027 = vmatpush1.msra.mxu0 0.0
  %3028 = vmatprep.subr.mxu0 0.0
  %3029 = vmatpush1.msra.mxu0 0.0
  %3030 = vmatprep.subr.mxu0 0.0
  %3031 = vmatpush1.msra.mxu0 0.0
  %3032 = vmatprep.subr.mxu0 0.0
  %3033 = vmatpush1.msra.mxu0 0.0
  %3034 = vmatprep.subr.mxu0 0.0
  %3035 = vmatpush1.msra.mxu0 0.0
  %3036 = vmatprep.subr.mxu0 0.0
  %3037 = vmatpush1.msra.mxu0 0.0
  %3038 = vmatprep.subr.mxu0 0.0
  %3039 = vmatpush1.msra.mxu0 0.0
  %3040 = vmatprep.subr.mxu0 0.0
  %3041 = vmatpush1.msra.mxu0 0.0
  %3042 = vmatprep.subr.mxu0 0.0
  %3043 = vmatpush1.msra.mxu0 0.0
  %3044 = vmatprep.subr.mxu0 0.0
  %3045 = vmatpush1.msra.mxu0 0.0
  %3046 = vmatprep.subr.mxu0 0.0
  %3047 = vmatpush1.msra.mxu0 0.0
  %3048 = vmatprep.subr.mxu0 0.0
  %3049 = vmatpush1.msra.mxu0 0.0
  %3050 = vmatprep.subr.mxu0 0.0
  %3051 = vmatpush1.msra.mxu0 0.0
  %3052 = vmatprep.subr.mxu0 0.0
  %3053 = vmatpush1.msra.mxu0 0.0
  %3054 = vmatprep.subr.mxu0 0.0
  %3055 = vmatpush1.msra.mxu0 0.0
  %3056 = vmatprep.subr.mxu0 0.0
  %3057 = vmatpush1.msra.mxu0 0.0
  %3058 = vmatprep.mubr.f32.mxu0 0.0
  %3059 = vmatmul.mubr.f32.gmra.mrb[0].mxu0 %v2989
  %v3060 = vpop.f32.mrb[0].mxu0
  %v3061 = vadd.f32 %v2147, %v3060
  %v3062 = vpop.f32.mrb[0].mxu0
  %v3063 = vadd.f32 %v2151, %v3062
  %3064 = vdwg.mxu0
  %3065 = vmatprep.subr.mxu0 0.0
  %3066 = vmatpush1.msra.mxu0 %v2095
  %3067 = vmatprep.subr.mxu0 0.0
  %3068 = vmatpush1.msra.mxu0 %v2098
  %3069 = vmatprep.subr.mxu0 0.0
  %3070 = vmatpush1.msra.mxu0 %v2101
  %3071 = vmatprep.subr.mxu0 0.0
  %3072 = vmatpush1.msra.mxu0 %v2104
  %3073 = vmatprep.subr.mxu0 0.0
  %3074 = vmatpush1.msra.mxu0 %v2107
  %3075 = vmatprep.subr.mxu0 0.0
  %3076 = vmatpush1.msra.mxu0 %v2110
  %3077 = vmatprep.subr.mxu0 0.0
  %3078 = vmatpush1.msra.mxu0 %v2113
  %3079 = vmatprep.subr.mxu0 0.0
  %3080 = vmatpush1.msra.mxu0 %v2116
  %3081 = vmatprep.subr.mxu0 0.0
  %3082 = vmatpush1.msra.mxu0 %v2119
  %3083 = vmatprep.subr.mxu0 0.0
  %3084 = vmatpush1.msra.mxu0 %v2122
  %3085 = vmatprep.subr.mxu0 0.0
  %3086 = vmatpush1.msra.mxu0 %v2125
  %3087 = vmatprep.subr.mxu0 0.0
  %3088 = vmatpush1.msra.mxu0 %v2128
  %3089 = vmatprep.subr.mxu0 0.0
  %3090 = vmatpush1.msra.mxu0 %v2131
  %3091 = vmatprep.subr.mxu0 0.0
  %3092 = vmatpush1.msra.mxu0 %v2134
  %3093 = vmatprep.subr.mxu0 0.0
  %3094 = vmatpush1.msra.mxu0 %v2137
  %3095 = vmatprep.subr.mxu0 0.0
  %3096 = vmatpush1.msra.mxu0 %v2140
  %3097 = vmatprep.subr.mxu0 0.0
  %3098 = vmatpush1.msra.mxu0 0.0
  %3099 = vmatprep.subr.mxu0 0.0
  %3100 = vmatpush1.msra.mxu0 0.0
  %3101 = vmatprep.subr.mxu0 0.0
  %3102 = vmatpush1.msra.mxu0 0.0
  %3103 = vmatprep.subr.mxu0 0.0
  %3104 = vmatpush1.msra.mxu0 0.0
  %3105 = vmatprep.subr.mxu0 0.0
  %3106 = vmatpush1.msra.mxu0 0.0
  %3107 = vmatprep.subr.mxu0 0.0
  %3108 = vmatpush1.msra.mxu0 0.0
  %3109 = vmatprep.subr.mxu0 0.0
  %3110 = vmatpush1.msra.mxu0 0.0
  %3111 = vmatprep.subr.mxu0 0.0
  %3112 = vmatpush1.msra.mxu0 0.0
  %3113 = vmatprep.subr.mxu0 0.0
  %3114 = vmatpush1.msra.mxu0 0.0
  %3115 = vmatprep.subr.mxu0 0.0
  %3116 = vmatpush1.msra.mxu0 0.0
  %3117 = vmatprep.subr.mxu0 0.0
  %3118 = vmatpush1.msra.mxu0 0.0
  %3119 = vmatprep.subr.mxu0 0.0
  %3120 = vmatpush1.msra.mxu0 0.0
  %3121 = vmatprep.subr.mxu0 0.0
  %3122 = vmatpush1.msra.mxu0 0.0
  %3123 = vmatprep.subr.mxu0 0.0
  %3124 = vmatpush1.msra.mxu0 0.0
  %3125 = vmatprep.subr.mxu0 0.0
  %3126 = vmatpush1.msra.mxu0 0.0
  %3127 = vmatprep.subr.mxu0 0.0
  %3128 = vmatpush1.msra.mxu0 0.0
  %3129 = vmatprep.mubr.f32.mxu0 0.0
  %3130 = vmatmul.mubr.f32.gmra.mrb[0].mxu0 %v2989
  %v3131 = vpop.f32.mrb[0].mxu0
  %v3132 = vadd.f32 %v2155, %v3131
  %v3133 = vpop.f32.mrb[0].mxu0
  %3134 = vdwg.mxu0
  %v3135 = vadd.f32 %v2991, %v3061
  %v3136 = vxor.u32 %v3135, 2147483648
  %v3137 = vmul.f32 %v3136, 1.442695
  %v3138 = vpow.pop %v3137
  %v3139 = vadd.f32 %v3138, 1.0
  %v3140 = vrcp.pop %v3139
  %v3141 = vmul.f32 1.0, %v3140
  %v3142 = vadd.f32 %v2992, %v3063
  %v3143 = vxor.u32 %v3142, 2147483648
  %v3144 = vmul.f32 %v3143, 1.442695
  %v3145 = vpow.pop %v3144
  %v3146 = vadd.f32 %v3145, 1.0
  %v3147 = vrcp.pop %v3146
  %v3148 = vmul.f32 1.0, %v3147
  %v3149 = vmul.f32 %v3141, %v3132
  %v3150 = vadd.f32 %v2993, %v3149
  %v3151 = vtanh.pop %v3150
  %v3152 = vsub.f32 1.0, %v3148
  %v3153 = vmul.f32 %v3152, %v3151
  %v3154 = vmul.f32 %v3148, %v2989
  %v3155 = vadd.f32 %v3153, %v3154
  %3156 = vst [vmem:[%s1432] sm:$0xff] %v3155
  %v3157 = vld [vmem:[%s1436] sm:$0xff]
  %v3158 = vld [vmem:[%s1436 + $0x8] sm:$0xff]
  %v3159 = vld [vmem:[%s1436 + $0x10] sm:$0xff]
  %3160 = vmatprep.subr.mxu0 %v2094
  %3161 = vmatpush1.msra.mxu0 %v2093
  %3162 = vmatprep.subr.mxu0 %v2097
  %3163 = vmatpush1.msra.mxu0 %v2096
  %3164 = vmatprep.subr.mxu0 %v2100
  %3165 = vmatpush1.msra.mxu0 %v2099
  %3166 = vmatprep.subr.mxu0 %v2103
  %3167 = vmatpush1.msra.mxu0 %v2102
  %3168 = vmatprep.subr.mxu0 %v2106
  %3169 = vmatpush1.msra.mxu0 %v2105
  %3170 = vmatprep.subr.mxu0 %v2109
  %3171 = vmatpush1.msra.mxu0 %v2108
  %3172 = vmatprep.subr.mxu0 %v2112
  %3173 = vmatpush1.msra.mxu0 %v2111
  %3174 = vmatprep.subr.mxu0 %v2115
  %3175 = vmatpush1.msra.mxu0 %v2114
  %3176 = vmatprep.subr.mxu0 %v2118
  %3177 = vmatpush1.msra.mxu0 %v2117
  %3178 = vmatprep.subr.mxu0 %v2121
  %3179 = vmatpush1.msra.mxu0 %v2120
  %3180 = vmatprep.subr.mxu0 %v2124
  %3181 = vmatpush1.msra.mxu0 %v2123
  %3182 = vmatprep.subr.mxu0 %v2127
  %3183 = vmatpush1.msra.mxu0 %v2126
  %3184 = vmatprep.subr.mxu0 %v2130
  %3185 = vmatpush1.msra.mxu0 %v2129
  %3186 = vmatprep.subr.mxu0 %v2133
  %3187 = vmatpush1.msra.mxu0 %v2132
  %3188 = vmatprep.subr.mxu0 %v2136
  %3189 = vmatpush1.msra.mxu0 %v2135
  %3190 = vmatprep.subr.mxu0 %v2139
  %3191 = vmatpush1.msra.mxu0 %v2138
  %3192 = vmatprep.subr.mxu0 0.0
  %3193 = vmatpush1.msra.mxu0 0.0
  %3194 = vmatprep.subr.mxu0 0.0
  %3195 = vmatpush1.msra.mxu0 0.0
  %3196 = vmatprep.subr.mxu0 0.0
  %3197 = vmatpush1.msra.mxu0 0.0
  %3198 = vmatprep.subr.mxu0 0.0
  %3199 = vmatpush1.msra.mxu0 0.0
  %3200 = vmatprep.subr.mxu0 0.0
  %3201 = vmatpush1.msra.mxu0 0.0
  %3202 = vmatprep.subr.mxu0 0.0
  %3203 = vmatpush1.msra.mxu0 0.0
  %3204 = vmatprep.subr.mxu0 0.0
  %3205 = vmatpush1.msra.mxu0 0.0
  %3206 = vmatprep.subr.mxu0 0.0
  %3207 = vmatpush1.msra.mxu0 0.0
  %3208 = vmatprep.subr.mxu0 0.0
  %3209 = vmatpush1.msra.mxu0 0.0
  %3210 = vmatprep.subr.mxu0 0.0
  %3211 = vmatpush1.msra.mxu0 0.0
  %3212 = vmatprep.subr.mxu0 0.0
  %3213 = vmatpush1.msra.mxu0 0.0
  %3214 = vmatprep.subr.mxu0 0.0
  %3215 = vmatpush1.msra.mxu0 0.0
  %3216 = vmatprep.subr.mxu0 0.0
  %3217 = vmatpush1.msra.mxu0 0.0
  %3218 = vmatprep.subr.mxu0 0.0
  %3219 = vmatpush1.msra.mxu0 0.0
  %3220 = vmatprep.subr.mxu0 0.0
  %3221 = vmatpush1.msra.mxu0 0.0
  %3222 = vmatprep.subr.mxu0 0.0
  %3223 = vmatpush1.msra.mxu0 0.0
  %3224 = vmatprep.mubr.f32.mxu0 0.0
  %3225 = vmatmul.mubr.f32.gmra.mrb[0].mxu0 %v3155
  %v3226 = vpop.f32.mrb[0].mxu0
  %v3227 = vadd.f32 %v2147, %v3226
  %v3228 = vpop.f32.mrb[0].mxu0
  %v3229 = vadd.f32 %v2151, %v3228
  %3230 = vdwg.mxu0
  %3231 = vmatprep.subr.mxu0 0.0
  %3232 = vmatpush1.msra.mxu0 %v2095
  %3233 = vmatprep.subr.mxu0 0.0
  %3234 = vmatpush1.msra.mxu0 %v2098
  %3235 = vmatprep.subr.mxu0 0.0
  %3236 = vmatpush1.msra.mxu0 %v2101
  %3237 = vmatprep.subr.mxu0 0.0
  %3238 = vmatpush1.msra.mxu0 %v2104
  %3239 = vmatprep.subr.mxu0 0.0
  %3240 = vmatpush1.msra.mxu0 %v2107
  %3241 = vmatprep.subr.mxu0 0.0
  %3242 = vmatpush1.msra.mxu0 %v2110
  %3243 = vmatprep.subr.mxu0 0.0
  %3244 = vmatpush1.msra.mxu0 %v2113
  %3245 = vmatprep.subr.mxu0 0.0
  %3246 = vmatpush1.msra.mxu0 %v2116
  %3247 = vmatprep.subr.mxu0 0.0
  %3248 = vmatpush1.msra.mxu0 %v2119
  %3249 = vmatprep.subr.mxu0 0.0
  %3250 = vmatpush1.msra.mxu0 %v2122
  %3251 = vmatprep.subr.mxu0 0.0
  %3252 = vmatpush1.msra.mxu0 %v2125
  %3253 = vmatprep.subr.mxu0 0.0
  %3254 = vmatpush1.msra.mxu0 %v2128
  %3255 = vmatprep.subr.mxu0 0.0
  %3256 = vmatpush1.msra.mxu0 %v2131
  %3257 = vmatprep.subr.mxu0 0.0
  %3258 = vmatpush1.msra.mxu0 %v2134
  %3259 = vmatprep.subr.mxu0 0.0
  %3260 = vmatpush1.msra.mxu0 %v2137
  %3261 = vmatprep.subr.mxu0 0.0
  %3262 = vmatpush1.msra.mxu0 %v2140
  %3263 = vmatprep.subr.mxu0 0.0
  %3264 = vmatpush1.msra.mxu0 0.0
  %3265 = vmatprep.subr.mxu0 0.0
  %3266 = vmatpush1.msra.mxu0 0.0
  %3267 = vmatprep.subr.mxu0 0.0
  %3268 = vmatpush1.msra.mxu0 0.0
  %3269 = vmatprep.subr.mxu0 0.0
  %3270 = vmatpush1.msra.mxu0 0.0
  %3271 = vmatprep.subr.mxu0 0.0
  %3272 = vmatpush1.msra.mxu0 0.0
  %3273 = vmatprep.subr.mxu0 0.0
  %3274 = vmatpush1.msra.mxu0 0.0
  %3275 = vmatprep.subr.mxu0 0.0
  %3276 = vmatpush1.msra.mxu0 0.0
  %3277 = vmatprep.subr.mxu0 0.0
  %3278 = vmatpush1.msra.mxu0 0.0
  %3279 = vmatprep.subr.mxu0 0.0
  %3280 = vmatpush1.msra.mxu0 0.0
  %3281 = vmatprep.subr.mxu0 0.0
  %3282 = vmatpush1.msra.mxu0 0.0
  %3283 = vmatprep.subr.mxu0 0.0
  %3284 = vmatpush1.msra.mxu0 0.0
  %3285 = vmatprep.subr.mxu0 0.0
  %3286 = vmatpush1.msra.mxu0 0.0
  %3287 = vmatprep.subr.mxu0 0.0
  %3288 = vmatpush1.msra.mxu0 0.0
  %3289 = vmatprep.subr.mxu0 0.0
  %3290 = vmatpush1.msra.mxu0 0.0
  %3291 = vmatprep.subr.mxu0 0.0
  %3292 = vmatpush1.msra.mxu0 0.0
  %3293 = vmatprep.subr.mxu0 0.0
  %3294 = vmatpush1.msra.mxu0 0.0
  %3295 = vmatprep.mubr.f32.mxu0 0.0
  %3296 = vmatmul.mubr.f32.gmra.mrb[0].mxu0 %v3155
  %v3297 = vpop.f32.mrb[0].mxu0
  %v3298 = vadd.f32 %v2155, %v3297
  %v3299 = vpop.f32.mrb[0].mxu0
  %3300 = vdwg.mxu0
  %v3301 = vadd.f32 %v3157, %v3227
  %v3302 = vxor.u32 %v3301, 2147483648
  %v3303 = vmul.f32 %v3302, 1.442695
  %v3304 = vpow.pop %v3303
  %v3305 = vadd.f32 %v3304, 1.0
  %v3306 = vrcp.pop %v3305
  %v3307 = vmul.f32 1.0, %v3306
  %v3308 = vadd.f32 %v3158, %v3229
  %v3309 = vxor.u32 %v3308, 2147483648
  %v3310 = vmul.f32 %v3309, 1.442695
  %v3311 = vpow.pop %v3310
  %v3312 = vadd.f32 %v3311, 1.0
  %v3313 = vrcp.pop %v3312
  %v3314 = vmul.f32 1.0, %v3313
  %v3315 = vmul.f32 %v3307, %v3298
  %v3316 = vadd.f32 %v3159, %v3315
  %v3317 = vtanh.pop %v3316
  %v3318 = vsub.f32 1.0, %v3314
  %v3319 = vmul.f32 %v3318, %v3317
  %v3320 = vmul.f32 %v3314, %v3155
  %v3321 = vadd.f32 %v3319, %v3320
  %3322 = vst [vmem:[%s1602] sm:$0xff] %v3321
  %v3323 = vld [vmem:[%s1606] sm:$0xff]
  %v3324 = vld [vmem:[%s1606 + $0x8] sm:$0xff]
  %v3325 = vld [vmem:[%s1606 + $0x10] sm:$0xff]
  %3326 = vmatprep.subr.mxu0 %v2094
  %3327 = vmatpush1.msra.mxu0 %v2093
  %3328 = vmatprep.subr.mxu0 %v2097
  %3329 = vmatpush1.msra.mxu0 %v2096
  %3330 = vmatprep.subr.mxu0 %v2100
  %3331 = vmatpush1.msra.mxu0 %v2099
  %3332 = vmatprep.subr.mxu0 %v2103
  %3333 = vmatpush1.msra.mxu0 %v2102
  %3334 = vmatprep.subr.mxu0 %v2106
  %3335 = vmatpush1.msra.mxu0 %v2105
  %3336 = vmatprep.subr.mxu0 %v2109
  %3337 = vmatpush1.msra.mxu0 %v2108
  %3338 = vmatprep.subr.mxu0 %v2112
  %3339 = vmatpush1.msra.mxu0 %v2111
  %3340 = vmatprep.subr.mxu0 %v2115
  %3341 = vmatpush1.msra.mxu0 %v2114
  %3342 = vmatprep.subr.mxu0 %v2118
  %3343 = vmatpush1.msra.mxu0 %v2117
  %3344 = vmatprep.subr.mxu0 %v2121
  %3345 = vmatpush1.msra.mxu0 %v2120
  %3346 = vmatprep.subr.mxu0 %v2124
  %3347 = vmatpush1.msra.mxu0 %v2123
  %3348 = vmatprep.subr.mxu0 %v2127
  %3349 = vmatpush1.msra.mxu0 %v2126
  %3350 = vmatprep.subr.mxu0 %v2130
  %3351 = vmatpush1.msra.mxu0 %v2129
  %3352 = vmatprep.subr.mxu0 %v2133
  %3353 = vmatpush1.msra.mxu0 %v2132
  %3354 = vmatprep.subr.mxu0 %v2136
  %3355 = vmatpush1.msra.mxu0 %v2135
  %3356 = vmatprep.subr.mxu0 %v2139
  %3357 = vmatpush1.msra.mxu0 %v2138
  %3358 = vmatprep.subr.mxu0 0.0
  %3359 = vmatpush1.msra.mxu0 0.0
  %3360 = vmatprep.subr.mxu0 0.0
  %3361 = vmatpush1.msra.mxu0 0.0
  %3362 = vmatprep.subr.mxu0 0.0
  %3363 = vmatpush1.msra.mxu0 0.0
  %3364 = vmatprep.subr.mxu0 0.0
  %3365 = vmatpush1.msra.mxu0 0.0
  %3366 = vmatprep.subr.mxu0 0.0
  %3367 = vmatpush1.msra.mxu0 0.0
  %3368 = vmatprep.subr.mxu0 0.0
  %3369 = vmatpush1.msra.mxu0 0.0
  %3370 = vmatprep.subr.mxu0 0.0
  %3371 = vmatpush1.msra.mxu0 0.0
  %3372 = vmatprep.subr.mxu0 0.0
  %3373 = vmatpush1.msra.mxu0 0.0
  %3374 = vmatprep.subr.mxu0 0.0
  %3375 = vmatpush1.msra.mxu0 0.0
  %3376 = vmatprep.subr.mxu0 0.0
  %3377 = vmatpush1.msra.mxu0 0.0
  %3378 = vmatprep.subr.mxu0 0.0
  %3379 = vmatpush1.msra.mxu0 0.0
  %3380 = vmatprep.subr.mxu0 0.0
  %3381 = vmatpush1.msra.mxu0 0.0
  %3382 = vmatprep.subr.mxu0 0.0
  %3383 = vmatpush1.msra.mxu0 0.0
  %3384 = vmatprep.subr.mxu0 0.0
  %3385 = vmatpush1.msra.mxu0 0.0
  %3386 = vmatprep.subr.mxu0 0.0
  %3387 = vmatpush1.msra.mxu0 0.0
  %3388 = vmatprep.subr.mxu0 0.0
  %3389 = vmatpush1.msra.mxu0 0.0
  %3390 = vmatprep.mubr.f32.mxu0 0.0
  %3391 = vmatmul.mubr.f32.gmra.mrb[0].mxu0 %v3321
  %v3392 = vpop.f32.mrb[0].mxu0
  %v3393 = vadd.f32 %v2147, %v3392
  %v3394 = vpop.f32.mrb[0].mxu0
  %v3395 = vadd.f32 %v2151, %v3394
  %3396 = vdwg.mxu0
  %3397 = vmatprep.subr.mxu0 0.0
  %3398 = vmatpush1.msra.mxu0 %v2095
  %3399 = vmatprep.subr.mxu0 0.0
  %3400 = vmatpush1.msra.mxu0 %v2098
  %3401 = vmatprep.subr.mxu0 0.0
  %3402 = vmatpush1.msra.mxu0 %v2101
  %3403 = vmatprep.subr.mxu0 0.0
  %3404 = vmatpush1.msra.mxu0 %v2104
  %3405 = vmatprep.subr.mxu0 0.0
  %3406 = vmatpush1.msra.mxu0 %v2107
  %3407 = vmatprep.subr.mxu0 0.0
  %3408 = vmatpush1.msra.mxu0 %v2110
  %3409 = vmatprep.subr.mxu0 0.0
  %3410 = vmatpush1.msra.mxu0 %v2113
  %3411 = vmatprep.subr.mxu0 0.0
  %3412 = vmatpush1.msra.mxu0 %v2116
  %3413 = vmatprep.subr.mxu0 0.0
  %3414 = vmatpush1.msra.mxu0 %v2119
  %3415 = vmatprep.subr.mxu0 0.0
  %3416 = vmatpush1.msra.mxu0 %v2122
  %3417 = vmatprep.subr.mxu0 0.0
  %3418 = vmatpush1.msra.mxu0 %v2125
  %3419 = vmatprep.subr.mxu0 0.0
  %3420 = vmatpush1.msra.mxu0 %v2128
  %3421 = vmatprep.subr.mxu0 0.0
  %3422 = vmatpush1.msra.mxu0 %v2131
  %3423 = vmatprep.subr.mxu0 0.0
  %3424 = vmatpush1.msra.mxu0 %v2134
  %3425 = vmatprep.subr.mxu0 0.0
  %3426 = vmatpush1.msra.mxu0 %v2137
  %3427 = vmatprep.subr.mxu0 0.0
  %3428 = vmatpush1.msra.mxu0 %v2140
  %3429 = vmatprep.subr.mxu0 0.0
  %3430 = vmatpush1.msra.mxu0 0.0
  %3431 = vmatprep.subr.mxu0 0.0
  %3432 = vmatpush1.msra.mxu0 0.0
  %3433 = vmatprep.subr.mxu0 0.0
  %3434 = vmatpush1.msra.mxu0 0.0
  %3435 = vmatprep.subr.mxu0 0.0
  %3436 = vmatpush1.msra.mxu0 0.0
  %3437 = vmatprep.subr.mxu0 0.0
  %3438 = vmatpush1.msra.mxu0 0.0
  %3439 = vmatprep.subr.mxu0 0.0
  %3440 = vmatpush1.msra.mxu0 0.0
  %3441 = vmatprep.subr.mxu0 0.0
  %3442 = vmatpush1.msra.mxu0 0.0
  %3443 = vmatprep.subr.mxu0 0.0
  %3444 = vmatpush1.msra.mxu0 0.0
  %3445 = vmatprep.subr.mxu0 0.0
  %3446 = vmatpush1.msra.mxu0 0.0
  %3447 = vmatprep.subr.mxu0 0.0
  %3448 = vmatpush1.msra.mxu0 0.0
  %3449 = vmatprep.subr.mxu0 0.0
  %3450 = vmatpush1.msra.mxu0 0.0
  %3451 = vmatprep.subr.mxu0 0.0
  %3452 = vmatpush1.msra.mxu0 0.0
  %3453 = vmatprep.subr.mxu0 0.0
  %3454 = vmatpush1.msra.mxu0 0.0
  %3455 = vmatprep.subr.mxu0 0.0
  %3456 = vmatpush1.msra.mxu0 0.0
  %3457 = vmatprep.subr.mxu0 0.0
  %3458 = vmatpush1.msra.mxu0 0.0
  %3459 = vmatprep.subr.mxu0 0.0
  %3460 = vmatpush1.msra.mxu0 0.0
  %3461 = vmatprep.mubr.f32.mxu0 0.0
  %3462 = vmatmul.mubr.f32.gmra.mrb[0].mxu0 %v3321
  %v3463 = vpop.f32.mrb[0].mxu0
  %v3464 = vadd.f32 %v2155, %v3463
  %v3465 = vpop.f32.mrb[0].mxu0
  %3466 = vdwg.mxu0
  %v3467 = vadd.f32 %v3323, %v3393
  %v3468 = vxor.u32 %v3467, 2147483648
  %v3469 = vmul.f32 %v3468, 1.442695
  %v3470 = vpow.pop %v3469
  %v3471 = vadd.f32 %v3470, 1.0
  %v3472 = vrcp.pop %v3471
  %v3473 = vmul.f32 1.0, %v3472
  %v3474 = vadd.f32 %v3324, %v3395
  %v3475 = vxor.u32 %v3474, 2147483648
  %v3476 = vmul.f32 %v3475, 1.442695
  %v3477 = vpow.pop %v3476
  %v3478 = vadd.f32 %v3477, 1.0
  %v3479 = vrcp.pop %v3478
  %v3480 = vmul.f32 1.0, %v3479
  %v3481 = vmul.f32 %v3473, %v3464
  %v3482 = vadd.f32 %v3325, %v3481
  %v3483 = vtanh.pop %v3482
  %v3484 = vsub.f32 1.0, %v3480
  %v3485 = vmul.f32 %v3484, %v3483
  %v3486 = vmul.f32 %v3480, %v3321
  %v3487 = vadd.f32 %v3485, %v3486
  %3488 = vst [vmem:[%s1772] sm:$0xff] %v3487
  %3489 = vst [vmem:[%s2159] sm:$0xff] %v3487
  %v3490 = vld [vmem:[#allocation3] sm:$0xff]
  %v3491 = vld [vmem:[#allocation3 + $0x8] sm:$0xff]
  %v3492 = vld [vmem:[#allocation3 + $0x10] sm:$0xff]
  %v3493 = vld [vmem:[#allocation3 + $0x18] sm:$0xff]
  %v3494 = vld [vmem:[#allocation3 + $0x20] sm:$0xff]
  %v3495 = vld [vmem:[#allocation3 + $0x28] sm:$0xff]
  %v3496 = vld [vmem:[#allocation3 + $0x30] sm:$0xff]
  %v3497 = vld [vmem:[#allocation3 + $0x38] sm:$0xff]
  %v3498 = vld [vmem:[%s5] sm:$0x1]
  %v3500 = vlaneseq
  %v3501 = vshrl.u32 %v3500, 7
  %v3502 = vsub.s32 0, %v3501
  %v3503 = vrot.slane %v3498, %v3502
  %v3505 = vmul.f32 %v3490, %v3503
  %v3506 = vmul.f32 %v3491, %v3503
  %v3507 = vmul.f32 %v3492, %v3503
  %v3508 = vmul.f32 %v3493, %v3503
  %v3509 = vmul.f32 %v3494, %v3503
  %v3510 = vmul.f32 %v3495, %v3503
  %v3511 = vmul.f32 %v3496, %v3503
  %v3512 = vmul.f32 %v3497, %v3503
  %3513 = vadd.xlane.f32.xlu0 %v3505
  %v3514 = vpop.xlane.xlu0 %3513
  %3515 = vadd.xlane.f32.xlu0 %v3506
  %v3516 = vpop.xlane.xlu0 %3515
  %3517 = vadd.xlane.f32.xlu0 %v3507
  %v3518 = vpop.xlane.xlu0 %3517
  %3519 = vadd.xlane.f32.xlu0 %v3508
  %v3520 = vpop.xlane.xlu0 %3519
  %3521 = vadd.xlane.f32.xlu0 %v3509
  %v3522 = vpop.xlane.xlu0 %3521
  %3523 = vadd.xlane.f32.xlu0 %v3510
  %v3524 = vpop.xlane.xlu0 %3523
  %3525 = vadd.xlane.f32.xlu0 %v3511
  %v3526 = vpop.xlane.xlu0 %3525
  %3527 = vadd.xlane.f32.xlu0 %v3512
  %v3528 = vpop.xlane.xlu0 %3527
  %v3529 = vld [vmem:[#allocation5] sm:$0x1]
  %v3531 = vlaneseq
  %v3532 = vshrl.u32 %v3531, 7
  %v3533 = vsub.s32 0, %v3532
  %v3534 = vrot.slane %v3529, %v3533
  %v3536 = vadd.f32 %v3514, %v3534
  %v3537 = vadd.f32 %v3516, %v3534
  %v3538 = vadd.f32 %v3518, %v3534
  %v3539 = vadd.f32 %v3520, %v3534
  %v3540 = vadd.f32 %v3522, %v3534
  %v3541 = vadd.f32 %v3524, %v3534
  %v3542 = vadd.f32 %v3526, %v3534
  %v3543 = vadd.f32 %v3528, %v3534
  %v3544 = vxor.u32 %v3536, 2147483648
  %v3545 = vxor.u32 %v3537, 2147483648
  %v3546 = vxor.u32 %v3538, 2147483648
  %v3547 = vxor.u32 %v3539, 2147483648
  %v3548 = vxor.u32 %v3540, 2147483648
  %v3549 = vxor.u32 %v3541, 2147483648
  %v3550 = vxor.u32 %v3542, 2147483648
  %v3551 = vxor.u32 %v3543, 2147483648
  %v3552 = vmul.f32 %v3544, 1.442695
  %v3553 = vpow.pop %v3552
  %v3554 = vmul.f32 %v3545, 1.442695
  %v3555 = vpow.pop %v3554
  %v3556 = vmul.f32 %v3546, 1.442695
  %v3557 = vpow.pop %v3556
  %v3558 = vmul.f32 %v3547, 1.442695
  %v3559 = vpow.pop %v3558
  %v3560 = vmul.f32 %v3548, 1.442695
  %v3561 = vpow.pop %v3560
  %v3562 = vmul.f32 %v3549, 1.442695
  %v3563 = vpow.pop %v3562
  %v3564 = vmul.f32 %v3550, 1.442695
  %v3565 = vpow.pop %v3564
  %v3566 = vmul.f32 %v3551, 1.442695
  %v3567 = vpow.pop %v3566
  %v3568 = vadd.f32 %v3553, 1.0
  %v3569 = vadd.f32 %v3555, 1.0
  %v3570 = vadd.f32 %v3557, 1.0
  %v3571 = vadd.f32 %v3559, 1.0
  %v3572 = vadd.f32 %v3561, 1.0
  %v3573 = vadd.f32 %v3563, 1.0
  %v3574 = vadd.f32 %v3565, 1.0
  %v3575 = vadd.f32 %v3567, 1.0
  %v3576 = vrcp.pop %v3568
  %v3577 = vmul.f32 1.0, %v3576
  %v3578 = vrcp.pop %v3569
  %v3579 = vmul.f32 1.0, %v3578
  %v3580 = vrcp.pop %v3570
  %v3581 = vmul.f32 1.0, %v3580
  %v3582 = vrcp.pop %v3571
  %v3583 = vmul.f32 1.0, %v3582
  %v3584 = vrcp.pop %v3572
  %v3585 = vmul.f32 1.0, %v3584
  %v3586 = vrcp.pop %v3573
  %v3587 = vmul.f32 1.0, %v3586
  %v3588 = vrcp.pop %v3574
  %v3589 = vmul.f32 1.0, %v3588
  %v3590 = vrcp.pop %v3575
  %v3591 = vmul.f32 1.0, %v3590
  %vm3592 = vcmask 7168
  %3593 = vst.msk [vmem:[%s7] sm:$0xff] %vm3592, %v3577
  %3594 = vst.msk [vmem:[%s7 + $0x8] sm:$0xff] %vm3592, %v3579
  %3595 = vst.msk [vmem:[%s7 + $0x10] sm:$0xff] %vm3592, %v3581
  %3596 = vst.msk [vmem:[%s7 + $0x18] sm:$0xff] %vm3592, %v3583
  %3597 = vst.msk [vmem:[%s7 + $0x20] sm:$0xff] %vm3592, %v3585
  %3598 = vst.msk [vmem:[%s7 + $0x28] sm:$0xff] %vm3592, %v3587
  %3599 = vst.msk [vmem:[%s7 + $0x30] sm:$0xff] %vm3592, %v3589
  %3600 = vst.msk [vmem:[%s7 + $0x38] sm:$0xff] %vm3592, %v3591
  // Predicated region
  $region34: #{discriminator_forward.1} parent=0 // pred_check
    _
  $region35: #{discriminator_forward.1} parent=0 // pred_check_branch
    %3602 = sbr.rel (0) target = $region37
  $region36: #{discriminator_forward.1} parent=0 // pred_region
    _
  $region37: #{discriminator_forward.1} parent=0 // pred_fallthru
    _
  // Predicated region
  $region38: #{discriminator_forward.1} parent=0 // pred_check
    _
  $region39: #{discriminator_forward.1} parent=0 // pred_check_branch
    %3604 = sbr.rel (0) target = $region41
  $region40: #{discriminator_forward.1} parent=0 // pred_region
    _
  $region41: #{discriminator_forward.1} parent=0 // pred_fallthru
    _

</llo_original>
